<compile_context>
chip_gen: v7x
topology: tpu7x:2x2x1
jax: 0.10.0
libtpu: 0.0.40
codegen_flags: <defaults>
</compile_context>

<pallas_src>
import functools

import jax
import jax.numpy as jnp
from jax.experimental import pallas as pl
from jax.experimental.pallas import tpu as pltpu


def _conv_bn_kernel(x_ref, w_ref, gamma_ref, beta_ref, o_ref, acc_ref, *,
                    KH, KW, Cin, Wo, Wp, eps):
    """MXU conv (per-tap flat-shifted matmul) + training-mode BatchNorm.

    x_ref    : (N, Cin, Sp)          f32  zero-padded input, (Hp,Wp) flattened on lanes
    w_ref    : (Cout, KH*KW*Cin)     f32  columns ordered tap-major, channel-minor
    gamma_ref: (Cout, 1)             f32
    beta_ref : (Cout, 1)             f32
    o_ref    : (N, Cout, Sq)         f32  Sq = Ho*Wp; cols with (s % Wp) >= Wo are scratch
    acc_ref  : (N, Cout, Sq)         f32  VMEM scratch accumulator
    """
    N, Cout, Sq = o_ref.shape
    Ho = Sq // Wp

    acc_ref[...] = jnp.zeros_like(acc_ref)

    # Convolution as KH*KW accumulating MXU matmuls per image.  The shifted window for
    # tap (kh, kw) is the contiguous lane slice starting at kh*Wp + kw of the flattened
    # padded plane (the Wp padding columns absorb the row wrap; those output columns are
    # masked out of the BN statistics and dropped by the wrapper).
    for n in range(N):                       # static unroll (N is tiny)
        for t in range(KH * KW):             # static unroll over taps
            kh, kw = divmod(t, KW)
            off = kh * Wp + kw
            x_tap = x_ref[n, :, off:off + Sq]            # (Cin, Sq)   static lane slice
            w_tap = w_ref[:, t * Cin:(t + 1) * Cin]      # (Cout, Cin)
            acc_ref[n, :, :] += jnp.dot(w_tap, x_tap,
                                        preferred_element_type=jnp.float32)

    acc = acc_ref[...]                                   # (N, Cout, Sq)

    # Static validity mask over the lane axis: column s is a real conv output iff
    # (s % Wp) < Wo.  Exactly N*Ho*Wo valid positions -> torch training-mode batch stats.
    lane = jax.lax.broadcasted_iota(jnp.int32, (1, 1, Sq), 2)
    valid = (lane % Wp) < Wo
    cnt = float(N * Ho * Wo)

    masked = jnp.where(valid, acc, 0.0)
    mean = jnp.sum(jnp.sum(masked, axis=2, keepdims=True),
                   axis=0, keepdims=True) / cnt          # (1, Cout, 1)
    diff = acc - mean
    dsq = jnp.where(valid, diff * diff, 0.0)
    var = jnp.sum(jnp.sum(dsq, axis=2, keepdims=True),
                  axis=0, keepdims=True) / cnt           # biased variance, like torch BN
    inv = jax.lax.rsqrt(var + eps)

    y = diff * inv * gamma_ref[...] + beta_ref[...]      # (Cout,1) broadcasts over lanes
    o_ref[...] = y.astype(o_ref.dtype)


def conv_bn_2d(x_nchw, w_oihw, gamma, beta, *, padding=(1, 1), eps=1e-5):
    """Forward of ConvBn2d. x_nchw: (N, Cin, H, W); w_oihw: (Cout, Cin, KH, KW)."""
    N, Cin, H, W = x_nchw.shape
    Cout, Cin_w, KH, KW = w_oihw.shape
    assert Cin == Cin_w
    ph, pw = padding
    Hp, Wp = H + 2 * ph, W + 2 * pw
    Ho, Wo = Hp - KH + 1, Wp - KW + 1        # stride (1,1)

    Sq = Ho * Wp                              # kernel output length (padded-width coords)
    max_off = (KH - 1) * Wp + (KW - 1)
    Sp = max(Hp * Wp, max_off + Sq)
    Sp = ((Sp + 127) // 128) * 128            # lane-align the flattened padded input

    # Layout plumbing only (no FLOPs, no transposes of the activation): zero-pad the
    # spatial dims, flatten (Hp, Wp) onto the last axis, pad to a lane-aligned length.
    xpad = jnp.pad(x_nchw.astype(jnp.float32), ((0, 0), (0, 0), (ph, ph), (pw, pw)))
    xflat = xpad.reshape(N, Cin, Hp * Wp)
    xflat = jnp.pad(xflat, ((0, 0), (0, 0), (0, Sp - Hp * Wp)))

    # Weight OIHW -> (Cout, KH*KW*Cin), column index = (kh*KW + kw)*Cin + c.
    wmat = jnp.transpose(w_oihw, (0, 2, 3, 1)).reshape(Cout, KH * KW * Cin)
    wmat = wmat.astype(jnp.float32)
    gamma2 = gamma.reshape(Cout, 1).astype(jnp.float32)
    beta2 = beta.reshape(Cout, 1).astype(jnp.float32)

    kernel = functools.partial(_conv_bn_kernel, KH=KH, KW=KW, Cin=Cin,
                               Wo=Wo, Wp=Wp, eps=eps)

    flops = 2 * N * Ho * Wo * KH * KW * Cin * Cout
    bytes_accessed = 4 * (xflat.size + wmat.size + N * Cout * Sq + 2 * Cout)

    out_flat = pl.pallas_call(
        kernel,
        out_shape=jax.ShapeDtypeStruct((N, Cout, Sq), jnp.float32),
        in_specs=[
            pl.BlockSpec(memory_space=pltpu.MemorySpace.VMEM),
            pl.BlockSpec(memory_space=pltpu.MemorySpace.VMEM),
            pl.BlockSpec(memory_space=pltpu.MemorySpace.VMEM),
            pl.BlockSpec(memory_space=pltpu.MemorySpace.VMEM),
        ],
        out_specs=pl.BlockSpec(memory_space=pltpu.MemorySpace.VMEM),
        scratch_shapes=[pltpu.VMEM((N, Cout, Sq), jnp.float32)],
        compiler_params=pltpu.CompilerParams(vmem_limit_bytes=32 * 1024 * 1024),
        cost_estimate=pl.CostEstimate(flops=flops, transcendentals=0,
                                      bytes_accessed=bytes_accessed),
    )(xflat, wmat, gamma2, beta2)

    # Drop the Wp-padding columns and restore NCHW (pure reshape/slice glue, no transpose).
    out = out_flat.reshape(N, Cout, Ho, Wp)[:, :, :, :Wo]
    return out


def _reference(x_nchw, w_oihw, gamma, beta, *, padding=(1, 1), eps=1e-5):
    """Pure-JAX reference: lax conv + training-mode BN."""
    conv = jax.lax.conv_general_dilated(
        x_nchw, w_oihw, window_strides=(1, 1),
        padding=((padding[0], padding[0]), (padding[1], padding[1])),
        dimension_numbers=("NCHW", "OIHW", "NCHW"))
    mean = conv.mean(axis=(0, 2, 3), keepdims=True)
    var = conv.var(axis=(0, 2, 3), keepdims=True)   # biased, like torch BN forward
    xhat = (conv - mean) * jax.lax.rsqrt(var + eps)
    return xhat * gamma.reshape(1, -1, 1, 1) + beta.reshape(1, -1, 1, 1)


if __name__ == "__main__":
    # ConvBn2d(in_channels=4, out_channels=8), input (N=2, C=4, H=16, W=16)
    N, Cin, H, W = 2, 4, 16, 16
    Cout, KH, KW = 8, 3, 3

    key = jax.random.PRNGKey(0)
    kx, kw = jax.random.split(key)
    x = jax.random.normal(kx, (N, Cin, H, W), dtype=jnp.float32)
    w = 0.1 * jax.random.normal(kw, (Cout, Cin, KH, KW), dtype=jnp.float32)
    gamma = jnp.ones((Cout,), dtype=jnp.float32)    # bn.weight at init
    beta = jnp.zeros((Cout,), dtype=jnp.float32)    # bn.bias at init

    out = conv_bn_2d(x, w, gamma, beta)
    out = jax.block_until_ready(out)

    ref = _reference(x, w, gamma, beta)
    assert out.shape == (N, Cout, H, W), out.shape
    err = float(jnp.max(jnp.abs(out - ref)))
    assert jnp.allclose(out, ref, rtol=1e-4, atol=1e-4), err

    print("KERNEL_OK")
</pallas_src>

<mosaic_0001>
module attributes {stable_mosaic.version = 11 : i64} {
  func.func @_conv_bn_kernel(%arg0: memref<2x4x384xf32, #tpu.memory_space<vmem>>, %arg1: memref<8x36xf32, #tpu.memory_space<vmem>>, %arg2: memref<8x1xf32, #tpu.memory_space<vmem>>, %arg3: memref<8x1xf32, #tpu.memory_space<vmem>>, %arg4: memref<2x8x288xf32, #tpu.memory_space<vmem>>, %arg5: memref<2x8x288xf32, #tpu.memory_space<vmem>>) attributes {dimension_semantics = [], scalar_prefetch = 0 : i64, scratch_operands = 1 : i64, tpu.core_type = #tpu.core_type<tc>} {
    %cst = arith.constant 0.000000e+00 : f32
    %0 = vector.broadcast %cst : f32 to vector<2x8x288xf32>
    %c0 = arith.constant 0 : index
    %c0_0 = arith.constant 0 : index
    %c0_1 = arith.constant 0 : index
    %1 = vector.load %arg5[%c0, %c0_0, %c0_1] : memref<2x8x288xf32, #tpu.memory_space<vmem>>, vector<2x8x288xf32>
    tpu.vector_store %arg5[%c0, %c0_0, %c0_1], %0 {strides = array<i32>} : memref<2x8x288xf32, #tpu.memory_space<vmem>>, vector<2x8x288xf32>,
    %c0_2 = arith.constant 0 : index
    %c0_3 = arith.constant 0 : index
    %c0_4 = arith.constant 0 : index
    %2 = vector.load %arg0[%c0_2, %c0_3, %c0_4] : memref<2x4x384xf32, #tpu.memory_space<vmem>>, vector<1x4x288xf32>
    %3 = vector.shape_cast %2 : vector<1x4x288xf32> to vector<4x288xf32>
    %c0_5 = arith.constant 0 : index
    %c0_6 = arith.constant 0 : index
    %4 = vector.load %arg1[%c0_5, %c0_6] : memref<8x36xf32, #tpu.memory_space<vmem>>, vector<8x4xf32>
    %c0_7 = arith.constant 0 : index
    %c0_8 = arith.constant 0 : index
    %c0_9 = arith.constant 0 : index
    %5 = vector.load %arg5[%c0_7, %c0_8, %c0_9] : memref<2x8x288xf32, #tpu.memory_space<vmem>>, vector<1x8x288xf32>
    %6 = vector.shape_cast %5 : vector<1x8x288xf32> to vector<8x288xf32>
    %cst_10 = arith.constant dense<0.000000e+00> : vector<8x288xf32>
    %7 = tpu.matmul %4, %3, %cst_10 {dimension_numbers = #tpu.dot_dimension_numbers<[1], [0], [0], [1], [0, 0, 1, 1], [], []>} : vector<8x4xf32>, vector<4x288xf32>, vector<8x288xf32> -> vector<8x288xf32>
    %8 = arith.addf %6, %7 : vector<8x288xf32>
    %c0_11 = arith.constant 0 : index
    %c0_12 = arith.constant 0 : index
    %c0_13 = arith.constant 0 : index
    %9 = vector.load %arg5[%c0_11, %c0_12, %c0_13] : memref<2x8x288xf32, #tpu.memory_space<vmem>>, vector<1x8x288xf32>
    %10 = vector.shape_cast %9 : vector<1x8x288xf32> to vector<8x288xf32>
    %11 = vector.shape_cast %8 : vector<8x288xf32> to vector<1x8x288xf32>
    tpu.vector_store %arg5[%c0_11, %c0_12, %c0_13], %11 {strides = array<i32>} : memref<2x8x288xf32, #tpu.memory_space<vmem>>, vector<1x8x288xf32>,
    %c0_14 = arith.constant 0 : index
    %c0_15 = arith.constant 0 : index
    %c1 = arith.constant 1 : index
    %12 = vector.load %arg0[%c0_14, %c0_15, %c1] : memref<2x4x384xf32, #tpu.memory_space<vmem>>, vector<1x4x288xf32>
    %13 = vector.shape_cast %12 : vector<1x4x288xf32> to vector<4x288xf32>
    %c0_16 = arith.constant 0 : index
    %c4 = arith.constant 4 : index
    %14 = vector.load %arg1[%c0_16, %c4] : memref<8x36xf32, #tpu.memory_space<vmem>>, vector<8x4xf32>
    %c0_17 = arith.constant 0 : index
    %c0_18 = arith.constant 0 : index
    %c0_19 = arith.constant 0 : index
    %15 = vector.load %arg5[%c0_17, %c0_18, %c0_19] : memref<2x8x288xf32, #tpu.memory_space<vmem>>, vector<1x8x288xf32>
    %16 = vector.shape_cast %15 : vector<1x8x288xf32> to vector<8x288xf32>
    %cst_20 = arith.constant dense<0.000000e+00> : vector<8x288xf32>
    %17 = tpu.matmul %14, %13, %cst_20 {dimension_numbers = #tpu.dot_dimension_numbers<[1], [0], [0], [1], [0, 0, 1, 1], [], []>} : vector<8x4xf32>, vector<4x288xf32>, vector<8x288xf32> -> vector<8x288xf32>
    %18 = arith.addf %16, %17 : vector<8x288xf32>
    %c0_21 = arith.constant 0 : index
    %c0_22 = arith.constant 0 : index
    %c0_23 = arith.constant 0 : index
    %19 = vector.load %arg5[%c0_21, %c0_22, %c0_23] : memref<2x8x288xf32, #tpu.memory_space<vmem>>, vector<1x8x288xf32>
    %20 = vector.shape_cast %19 : vector<1x8x288xf32> to vector<8x288xf32>
    %21 = vector.shape_cast %18 : vector<8x288xf32> to vector<1x8x288xf32>
    tpu.vector_store %arg5[%c0_21, %c0_22, %c0_23], %21 {strides = array<i32>} : memref<2x8x288xf32, #tpu.memory_space<vmem>>, vector<1x8x288xf32>,
    %c0_24 = arith.constant 0 : index
    %c0_25 = arith.constant 0 : index
    %c2 = arith.constant 2 : index
    %22 = vector.load %arg0[%c0_24, %c0_25, %c2] : memref<2x4x384xf32, #tpu.memory_space<vmem>>, vector<1x4x288xf32>
    %23 = vector.shape_cast %22 : vector<1x4x288xf32> to vector<4x288xf32>
    %c0_26 = arith.constant 0 : index
    %c8 = arith.constant 8 : index
    %24 = vector.load %arg1[%c0_26, %c8] : memref<8x36xf32, #tpu.memory_space<vmem>>, vector<8x4xf32>
    %c0_27 = arith.constant 0 : index
    %c0_28 = arith.constant 0 : index
    %c0_29 = arith.constant 0 : index
    %25 = vector.load %arg5[%c0_27, %c0_28, %c0_29] : memref<2x8x288xf32, #tpu.memory_space<vmem>>, vector<1x8x288xf32>
    %26 = vector.shape_cast %25 : vector<1x8x288xf32> to vector<8x288xf32>
    %cst_30 = arith.constant dense<0.000000e+00> : vector<8x288xf32>
    %27 = tpu.matmul %24, %23, %cst_30 {dimension_numbers = #tpu.dot_dimension_numbers<[1], [0], [0], [1], [0, 0, 1, 1], [], []>} : vector<8x4xf32>, vector<4x288xf32>, vector<8x288xf32> -> vector<8x288xf32>
    %28 = arith.addf %26, %27 : vector<8x288xf32>
    %c0_31 = arith.constant 0 : index
    %c0_32 = arith.constant 0 : index
    %c0_33 = arith.constant 0 : index
    %29 = vector.load %arg5[%c0_31, %c0_32, %c0_33] : memref<2x8x288xf32, #tpu.memory_space<vmem>>, vector<1x8x288xf32>
    %30 = vector.shape_cast %29 : vector<1x8x288xf32> to vector<8x288xf32>
    %31 = vector.shape_cast %28 : vector<8x288xf32> to vector<1x8x288xf32>
    tpu.vector_store %arg5[%c0_31, %c0_32, %c0_33], %31 {strides = array<i32>} : memref<2x8x288xf32, #tpu.memory_space<vmem>>, vector<1x8x288xf32>,
    %c0_34 = arith.constant 0 : index
    %c0_35 = arith.constant 0 : index
    %c18 = arith.constant 18 : index
    %32 = vector.load %arg0[%c0_34, %c0_35, %c18] : memref<2x4x384xf32, #tpu.memory_space<vmem>>, vector<1x4x288xf32>
    %33 = vector.shape_cast %32 : vector<1x4x288xf32> to vector<4x288xf32>
    %c0_36 = arith.constant 0 : index
    %c12 = arith.constant 12 : index
    %34 = vector.load %arg1[%c0_36, %c12] : memref<8x36xf32, #tpu.memory_space<vmem>>, vector<8x4xf32>
    %c0_37 = arith.constant 0 : index
    %c0_38 = arith.constant 0 : index
    %c0_39 = arith.constant 0 : index
    %35 = vector.load %arg5[%c0_37, %c0_38, %c0_39] : memref<2x8x288xf32, #tpu.memory_space<vmem>>, vector<1x8x288xf32>
    %36 = vector.shape_cast %35 : vector<1x8x288xf32> to vector<8x288xf32>
    %cst_40 = arith.constant dense<0.000000e+00> : vector<8x288xf32>
    %37 = tpu.matmul %34, %33, %cst_40 {dimension_numbers = #tpu.dot_dimension_numbers<[1], [0], [0], [1], [0, 0, 1, 1], [], []>} : vector<8x4xf32>, vector<4x288xf32>, vector<8x288xf32> -> vector<8x288xf32>
    %38 = arith.addf %36, %37 : vector<8x288xf32>
    %c0_41 = arith.constant 0 : index
    %c0_42 = arith.constant 0 : index
    %c0_43 = arith.constant 0 : index
    %39 = vector.load %arg5[%c0_41, %c0_42, %c0_43] : memref<2x8x288xf32, #tpu.memory_space<vmem>>, vector<1x8x288xf32>
    %40 = vector.shape_cast %39 : vector<1x8x288xf32> to vector<8x288xf32>
    %41 = vector.shape_cast %38 : vector<8x288xf32> to vector<1x8x288xf32>
    tpu.vector_store %arg5[%c0_41, %c0_42, %c0_43], %41 {strides = array<i32>} : memref<2x8x288xf32, #tpu.memory_space<vmem>>, vector<1x8x288xf32>,
    %c0_44 = arith.constant 0 : index
    %c0_45 = arith.constant 0 : index
    %c19 = arith.constant 19 : index
    %42 = vector.load %arg0[%c0_44, %c0_45, %c19] : memref<2x4x384xf32, #tpu.memory_space<vmem>>, vector<1x4x288xf32>
    %43 = vector.shape_cast %42 : vector<1x4x288xf32> to vector<4x288xf32>
    %c0_46 = arith.constant 0 : index
    %c16 = arith.constant 16 : index
    %44 = vector.load %arg1[%c0_46, %c16] : memref<8x36xf32, #tpu.memory_space<vmem>>, vector<8x4xf32>
    %c0_47 = arith.constant 0 : index
    %c0_48 = arith.constant 0 : index
    %c0_49 = arith.constant 0 : index
    %45 = vector.load %arg5[%c0_47, %c0_48, %c0_49] : memref<2x8x288xf32, #tpu.memory_space<vmem>>, vector<1x8x288xf32>
    %46 = vector.shape_cast %45 : vector<1x8x288xf32> to vector<8x288xf32>
    %cst_50 = arith.constant dense<0.000000e+00> : vector<8x288xf32>
    %47 = tpu.matmul %44, %43, %cst_50 {dimension_numbers = #tpu.dot_dimension_numbers<[1], [0], [0], [1], [0, 0, 1, 1], [], []>} : vector<8x4xf32>, vector<4x288xf32>, vector<8x288xf32> -> vector<8x288xf32>
    %48 = arith.addf %46, %47 : vector<8x288xf32>
    %c0_51 = arith.constant 0 : index
    %c0_52 = arith.constant 0 : index
    %c0_53 = arith.constant 0 : index
    %49 = vector.load %arg5[%c0_51, %c0_52, %c0_53] : memref<2x8x288xf32, #tpu.memory_space<vmem>>, vector<1x8x288xf32>
    %50 = vector.shape_cast %49 : vector<1x8x288xf32> to vector<8x288xf32>
    %51 = vector.shape_cast %48 : vector<8x288xf32> to vector<1x8x288xf32>
    tpu.vector_store %arg5[%c0_51, %c0_52, %c0_53], %51 {strides = array<i32>} : memref<2x8x288xf32, #tpu.memory_space<vmem>>, vector<1x8x288xf32>,
    %c0_54 = arith.constant 0 : index
    %c0_55 = arith.constant 0 : index
    %c20 = arith.constant 20 : index
    %52 = vector.load %arg0[%c0_54, %c0_55, %c20] : memref<2x4x384xf32, #tpu.memory_space<vmem>>, vector<1x4x288xf32>
    %53 = vector.shape_cast %52 : vector<1x4x288xf32> to vector<4x288xf32>
    %c0_56 = arith.constant 0 : index
    %c20_57 = arith.constant 20 : index
    %54 = vector.load %arg1[%c0_56, %c20_57] : memref<8x36xf32, #tpu.memory_space<vmem>>, vector<8x4xf32>
    %c0_58 = arith.constant 0 : index
    %c0_59 = arith.constant 0 : index
    %c0_60 = arith.constant 0 : index
    %55 = vector.load %arg5[%c0_58, %c0_59, %c0_60] : memref<2x8x288xf32, #tpu.memory_space<vmem>>, vector<1x8x288xf32>
    %56 = vector.shape_cast %55 : vector<1x8x288xf32> to vector<8x288xf32>
    %cst_61 = arith.constant dense<0.000000e+00> : vector<8x288xf32>
    %57 = tpu.matmul %54, %53, %cst_61 {dimension_numbers = #tpu.dot_dimension_numbers<[1], [0], [0], [1], [0, 0, 1, 1], [], []>} : vector<8x4xf32>, vector<4x288xf32>, vector<8x288xf32> -> vector<8x288xf32>
    %58 = arith.addf %56, %57 : vector<8x288xf32>
    %c0_62 = arith.constant 0 : index
    %c0_63 = arith.constant 0 : index
    %c0_64 = arith.constant 0 : index
    %59 = vector.load %arg5[%c0_62, %c0_63, %c0_64] : memref<2x8x288xf32, #tpu.memory_space<vmem>>, vector<1x8x288xf32>
    %60 = vector.shape_cast %59 : vector<1x8x288xf32> to vector<8x288xf32>
    %61 = vector.shape_cast %58 : vector<8x288xf32> to vector<1x8x288xf32>
    tpu.vector_store %arg5[%c0_62, %c0_63, %c0_64], %61 {strides = array<i32>} : memref<2x8x288xf32, #tpu.memory_space<vmem>>, vector<1x8x288xf32>,
    %c0_65 = arith.constant 0 : index
    %c0_66 = arith.constant 0 : index
    %c36 = arith.constant 36 : index
    %62 = vector.load %arg0[%c0_65, %c0_66, %c36] : memref<2x4x384xf32, #tpu.memory_space<vmem>>, vector<1x4x288xf32>
    %63 = vector.shape_cast %62 : vector<1x4x288xf32> to vector<4x288xf32>
    %c0_67 = arith.constant 0 : index
    %c24 = arith.constant 24 : index
    %64 = vector.load %arg1[%c0_67, %c24] : memref<8x36xf32, #tpu.memory_space<vmem>>, vector<8x4xf32>
    %c0_68 = arith.constant 0 : index
    %c0_69 = arith.constant 0 : index
    %c0_70 = arith.constant 0 : index
    %65 = vector.load %arg5[%c0_68, %c0_69, %c0_70] : memref<2x8x288xf32, #tpu.memory_space<vmem>>, vector<1x8x288xf32>
    %66 = vector.shape_cast %65 : vector<1x8x288xf32> to vector<8x288xf32>
    %cst_71 = arith.constant dense<0.000000e+00> : vector<8x288xf32>
    %67 = tpu.matmul %64, %63, %cst_71 {dimension_numbers = #tpu.dot_dimension_numbers<[1], [0], [0], [1], [0, 0, 1, 1], [], []>} : vector<8x4xf32>, vector<4x288xf32>, vector<8x288xf32> -> vector<8x288xf32>
    %68 = arith.addf %66, %67 : vector<8x288xf32>
    %c0_72 = arith.constant 0 : index
    %c0_73 = arith.constant 0 : index
    %c0_74 = arith.constant 0 : index
    %69 = vector.load %arg5[%c0_72, %c0_73, %c0_74] : memref<2x8x288xf32, #tpu.memory_space<vmem>>, vector<1x8x288xf32>
    %70 = vector.shape_cast %69 : vector<1x8x288xf32> to vector<8x288xf32>
    %71 = vector.shape_cast %68 : vector<8x288xf32> to vector<1x8x288xf32>
    tpu.vector_store %arg5[%c0_72, %c0_73, %c0_74], %71 {strides = array<i32>} : memref<2x8x288xf32, #tpu.memory_space<vmem>>, vector<1x8x288xf32>,
    %c0_75 = arith.constant 0 : index
    %c0_76 = arith.constant 0 : index
    %c37 = arith.constant 37 : index
    %72 = vector.load %arg0[%c0_75, %c0_76, %c37] : memref<2x4x384xf32, #tpu.memory_space<vmem>>, vector<1x4x288xf32>
    %73 = vector.shape_cast %72 : vector<1x4x288xf32> to vector<4x288xf32>
    %c0_77 = arith.constant 0 : index
    %c28 = arith.constant 28 : index
    %74 = vector.load %arg1[%c0_77, %c28] : memref<8x36xf32, #tpu.memory_space<vmem>>, vector<8x4xf32>
    %c0_78 = arith.constant 0 : index
    %c0_79 = arith.constant 0 : index
    %c0_80 = arith.constant 0 : index
    %75 = vector.load %arg5[%c0_78, %c0_79, %c0_80] : memref<2x8x288xf32, #tpu.memory_space<vmem>>, vector<1x8x288xf32>
    %76 = vector.shape_cast %75 : vector<1x8x288xf32> to vector<8x288xf32>
    %cst_81 = arith.constant dense<0.000000e+00> : vector<8x288xf32>
    %77 = tpu.matmul %74, %73, %cst_81 {dimension_numbers = #tpu.dot_dimension_numbers<[1], [0], [0], [1], [0, 0, 1, 1], [], []>} : vector<8x4xf32>, vector<4x288xf32>, vector<8x288xf32> -> vector<8x288xf32>
    %78 = arith.addf %76, %77 : vector<8x288xf32>
    %c0_82 = arith.constant 0 : index
    %c0_83 = arith.constant 0 : index
    %c0_84 = arith.constant 0 : index
    %79 = vector.load %arg5[%c0_82, %c0_83, %c0_84] : memref<2x8x288xf32, #tpu.memory_space<vmem>>, vector<1x8x288xf32>
    %80 = vector.shape_cast %79 : vector<1x8x288xf32> to vector<8x288xf32>
    %81 = vector.shape_cast %78 : vector<8x288xf32> to vector<1x8x288xf32>
    tpu.vector_store %arg5[%c0_82, %c0_83, %c0_84], %81 {strides = array<i32>} : memref<2x8x288xf32, #tpu.memory_space<vmem>>, vector<1x8x288xf32>,
    %c0_85 = arith.constant 0 : index
    %c0_86 = arith.constant 0 : index
    %c38 = arith.constant 38 : index
    %82 = vector.load %arg0[%c0_85, %c0_86, %c38] : memref<2x4x384xf32, #tpu.memory_space<vmem>>, vector<1x4x288xf32>
    %83 = vector.shape_cast %82 : vector<1x4x288xf32> to vector<4x288xf32>
    %c0_87 = arith.constant 0 : index
    %c32 = arith.constant 32 : index
    %84 = vector.load %arg1[%c0_87, %c32] : memref<8x36xf32, #tpu.memory_space<vmem>>, vector<8x4xf32>
    %c0_88 = arith.constant 0 : index
    %c0_89 = arith.constant 0 : index
    %c0_90 = arith.constant 0 : index
    %85 = vector.load %arg5[%c0_88, %c0_89, %c0_90] : memref<2x8x288xf32, #tpu.memory_space<vmem>>, vector<1x8x288xf32>
    %86 = vector.shape_cast %85 : vector<1x8x288xf32> to vector<8x288xf32>
    %cst_91 = arith.constant dense<0.000000e+00> : vector<8x288xf32>
    %87 = tpu.matmul %84, %83, %cst_91 {dimension_numbers = #tpu.dot_dimension_numbers<[1], [0], [0], [1], [0, 0, 1, 1], [], []>} : vector<8x4xf32>, vector<4x288xf32>, vector<8x288xf32> -> vector<8x288xf32>
    %88 = arith.addf %86, %87 : vector<8x288xf32>
    %c0_92 = arith.constant 0 : index
    %c0_93 = arith.constant 0 : index
    %c0_94 = arith.constant 0 : index
    %89 = vector.load %arg5[%c0_92, %c0_93, %c0_94] : memref<2x8x288xf32, #tpu.memory_space<vmem>>, vector<1x8x288xf32>
    %90 = vector.shape_cast %89 : vector<1x8x288xf32> to vector<8x288xf32>
    %91 = vector.shape_cast %88 : vector<8x288xf32> to vector<1x8x288xf32>
    tpu.vector_store %arg5[%c0_92, %c0_93, %c0_94], %91 {strides = array<i32>} : memref<2x8x288xf32, #tpu.memory_space<vmem>>, vector<1x8x288xf32>,
    %c1_95 = arith.constant 1 : index
    %c0_96 = arith.constant 0 : index
    %c0_97 = arith.constant 0 : index
    %92 = vector.load %arg0[%c1_95, %c0_96, %c0_97] : memref<2x4x384xf32, #tpu.memory_space<vmem>>, vector<1x4x288xf32>
    %93 = vector.shape_cast %92 : vector<1x4x288xf32> to vector<4x288xf32>
    %c0_98 = arith.constant 0 : index
    %c0_99 = arith.constant 0 : index
    %94 = vector.load %arg1[%c0_98, %c0_99] : memref<8x36xf32, #tpu.memory_space<vmem>>, vector<8x4xf32>
    %c1_100 = arith.constant 1 : index
    %c0_101 = arith.constant 0 : index
    %c0_102 = arith.constant 0 : index
    %95 = vector.load %arg5[%c1_100, %c0_101, %c0_102] : memref<2x8x288xf32, #tpu.memory_space<vmem>>, vector<1x8x288xf32>
    %96 = vector.shape_cast %95 : vector<1x8x288xf32> to vector<8x288xf32>
    %cst_103 = arith.constant dense<0.000000e+00> : vector<8x288xf32>
    %97 = tpu.matmul %94, %93, %cst_103 {dimension_numbers = #tpu.dot_dimension_numbers<[1], [0], [0], [1], [0, 0, 1, 1], [], []>} : vector<8x4xf32>, vector<4x288xf32>, vector<8x288xf32> -> vector<8x288xf32>
    %98 = arith.addf %96, %97 : vector<8x288xf32>
    %c1_104 = arith.constant 1 : index
    %c0_105 = arith.constant 0 : index
    %c0_106 = arith.constant 0 : index
    %99 = vector.load %arg5[%c1_104, %c0_105, %c0_106] : memref<2x8x288xf32, #tpu.memory_space<vmem>>, vector<1x8x288xf32>
    %100 = vector.shape_cast %99 : vector<1x8x288xf32> to vector<8x288xf32>
    %101 = vector.shape_cast %98 : vector<8x288xf32> to vector<1x8x288xf32>
    tpu.vector_store %arg5[%c1_104, %c0_105, %c0_106], %101 {strides = array<i32>} : memref<2x8x288xf32, #tpu.memory_space<vmem>>, vector<1x8x288xf32>,
    %c1_107 = arith.constant 1 : index
    %c0_108 = arith.constant 0 : index
    %c1_109 = arith.constant 1 : index
    %102 = vector.load %arg0[%c1_107, %c0_108, %c1_109] : memref<2x4x384xf32, #tpu.memory_space<vmem>>, vector<1x4x288xf32>
    %103 = vector.shape_cast %102 : vector<1x4x288xf32> to vector<4x288xf32>
    %c0_110 = arith.constant 0 : index
    %c4_111 = arith.constant 4 : index
    %104 = vector.load %arg1[%c0_110, %c4_111] : memref<8x36xf32, #tpu.memory_space<vmem>>, vector<8x4xf32>
    %c1_112 = arith.constant 1 : index
    %c0_113 = arith.constant 0 : index
    %c0_114 = arith.constant 0 : index
    %105 = vector.load %arg5[%c1_112, %c0_113, %c0_114] : memref<2x8x288xf32, #tpu.memory_space<vmem>>, vector<1x8x288xf32>
    %106 = vector.shape_cast %105 : vector<1x8x288xf32> to vector<8x288xf32>
    %cst_115 = arith.constant dense<0.000000e+00> : vector<8x288xf32>
    %107 = tpu.matmul %104, %103, %cst_115 {dimension_numbers = #tpu.dot_dimension_numbers<[1], [0], [0], [1], [0, 0, 1, 1], [], []>} : vector<8x4xf32>, vector<4x288xf32>, vector<8x288xf32> -> vector<8x288xf32>
    %108 = arith.addf %106, %107 : vector<8x288xf32>
    %c1_116 = arith.constant 1 : index
    %c0_117 = arith.constant 0 : index
    %c0_118 = arith.constant 0 : index
    %109 = vector.load %arg5[%c1_116, %c0_117, %c0_118] : memref<2x8x288xf32, #tpu.memory_space<vmem>>, vector<1x8x288xf32>
    %110 = vector.shape_cast %109 : vector<1x8x288xf32> to vector<8x288xf32>
    %111 = vector.shape_cast %108 : vector<8x288xf32> to vector<1x8x288xf32>
    tpu.vector_store %arg5[%c1_116, %c0_117, %c0_118], %111 {strides = array<i32>} : memref<2x8x288xf32, #tpu.memory_space<vmem>>, vector<1x8x288xf32>,
    %c1_119 = arith.constant 1 : index
    %c0_120 = arith.constant 0 : index
    %c2_121 = arith.constant 2 : index
    %112 = vector.load %arg0[%c1_119, %c0_120, %c2_121] : memref<2x4x384xf32, #tpu.memory_space<vmem>>, vector<1x4x288xf32>
    %113 = vector.shape_cast %112 : vector<1x4x288xf32> to vector<4x288xf32>
    %c0_122 = arith.constant 0 : index
    %c8_123 = arith.constant 8 : index
    %114 = vector.load %arg1[%c0_122, %c8_123] : memref<8x36xf32, #tpu.memory_space<vmem>>, vector<8x4xf32>
    %c1_124 = arith.constant 1 : index
    %c0_125 = arith.constant 0 : index
    %c0_126 = arith.constant 0 : index
    %115 = vector.load %arg5[%c1_124, %c0_125, %c0_126] : memref<2x8x288xf32, #tpu.memory_space<vmem>>, vector<1x8x288xf32>
    %116 = vector.shape_cast %115 : vector<1x8x288xf32> to vector<8x288xf32>
    %cst_127 = arith.constant dense<0.000000e+00> : vector<8x288xf32>
    %117 = tpu.matmul %114, %113, %cst_127 {dimension_numbers = #tpu.dot_dimension_numbers<[1], [0], [0], [1], [0, 0, 1, 1], [], []>} : vector<8x4xf32>, vector<4x288xf32>, vector<8x288xf32> -> vector<8x288xf32>
    %118 = arith.addf %116, %117 : vector<8x288xf32>
    %c1_128 = arith.constant 1 : index
    %c0_129 = arith.constant 0 : index
    %c0_130 = arith.constant 0 : index
    %119 = vector.load %arg5[%c1_128, %c0_129, %c0_130] : memref<2x8x288xf32, #tpu.memory_space<vmem>>, vector<1x8x288xf32>
    %120 = vector.shape_cast %119 : vector<1x8x288xf32> to vector<8x288xf32>
    %121 = vector.shape_cast %118 : vector<8x288xf32> to vector<1x8x288xf32>
    tpu.vector_store %arg5[%c1_128, %c0_129, %c0_130], %121 {strides = array<i32>} : memref<2x8x288xf32, #tpu.memory_space<vmem>>, vector<1x8x288xf32>,
    %c1_131 = arith.constant 1 : index
    %c0_132 = arith.constant 0 : index
    %c18_133 = arith.constant 18 : index
    %122 = vector.load %arg0[%c1_131, %c0_132, %c18_133] : memref<2x4x384xf32, #tpu.memory_space<vmem>>, vector<1x4x288xf32>
    %123 = vector.shape_cast %122 : vector<1x4x288xf32> to vector<4x288xf32>
    %c0_134 = arith.constant 0 : index
    %c12_135 = arith.constant 12 : index
    %124 = vector.load %arg1[%c0_134, %c12_135] : memref<8x36xf32, #tpu.memory_space<vmem>>, vector<8x4xf32>
    %c1_136 = arith.constant 1 : index
    %c0_137 = arith.constant 0 : index
    %c0_138 = arith.constant 0 : index
    %125 = vector.load %arg5[%c1_136, %c0_137, %c0_138] : memref<2x8x288xf32, #tpu.memory_space<vmem>>, vector<1x8x288xf32>
    %126 = vector.shape_cast %125 : vector<1x8x288xf32> to vector<8x288xf32>
    %cst_139 = arith.constant dense<0.000000e+00> : vector<8x288xf32>
    %127 = tpu.matmul %124, %123, %cst_139 {dimension_numbers = #tpu.dot_dimension_numbers<[1], [0], [0], [1], [0, 0, 1, 1], [], []>} : vector<8x4xf32>, vector<4x288xf32>, vector<8x288xf32> -> vector<8x288xf32>
    %128 = arith.addf %126, %127 : vector<8x288xf32>
    %c1_140 = arith.constant 1 : index
    %c0_141 = arith.constant 0 : index
    %c0_142 = arith.constant 0 : index
    %129 = vector.load %arg5[%c1_140, %c0_141, %c0_142] : memref<2x8x288xf32, #tpu.memory_space<vmem>>, vector<1x8x288xf32>
    %130 = vector.shape_cast %129 : vector<1x8x288xf32> to vector<8x288xf32>
    %131 = vector.shape_cast %128 : vector<8x288xf32> to vector<1x8x288xf32>
    tpu.vector_store %arg5[%c1_140, %c0_141, %c0_142], %131 {strides = array<i32>} : memref<2x8x288xf32, #tpu.memory_space<vmem>>, vector<1x8x288xf32>,
    %c1_143 = arith.constant 1 : index
    %c0_144 = arith.constant 0 : index
    %c19_145 = arith.constant 19 : index
    %132 = vector.load %arg0[%c1_143, %c0_144, %c19_145] : memref<2x4x384xf32, #tpu.memory_space<vmem>>, vector<1x4x288xf32>
    %133 = vector.shape_cast %132 : vector<1x4x288xf32> to vector<4x288xf32>
    %c0_146 = arith.constant 0 : index
    %c16_147 = arith.constant 16 : index
    %134 = vector.load %arg1[%c0_146, %c16_147] : memref<8x36xf32, #tpu.memory_space<vmem>>, vector<8x4xf32>
    %c1_148 = arith.constant 1 : index
    %c0_149 = arith.constant 0 : index
    %c0_150 = arith.constant 0 : index
    %135 = vector.load %arg5[%c1_148, %c0_149, %c0_150] : memref<2x8x288xf32, #tpu.memory_space<vmem>>, vector<1x8x288xf32>
    %136 = vector.shape_cast %135 : vector<1x8x288xf32> to vector<8x288xf32>
    %cst_151 = arith.constant dense<0.000000e+00> : vector<8x288xf32>
    %137 = tpu.matmul %134, %133, %cst_151 {dimension_numbers = #tpu.dot_dimension_numbers<[1], [0], [0], [1], [0, 0, 1, 1], [], []>} : vector<8x4xf32>, vector<4x288xf32>, vector<8x288xf32> -> vector<8x288xf32>
    %138 = arith.addf %136, %137 : vector<8x288xf32>
    %c1_152 = arith.constant 1 : index
    %c0_153 = arith.constant 0 : index
    %c0_154 = arith.constant 0 : index
    %139 = vector.load %arg5[%c1_152, %c0_153, %c0_154] : memref<2x8x288xf32, #tpu.memory_space<vmem>>, vector<1x8x288xf32>
    %140 = vector.shape_cast %139 : vector<1x8x288xf32> to vector<8x288xf32>
    %141 = vector.shape_cast %138 : vector<8x288xf32> to vector<1x8x288xf32>
    tpu.vector_store %arg5[%c1_152, %c0_153, %c0_154], %141 {strides = array<i32>} : memref<2x8x288xf32, #tpu.memory_space<vmem>>, vector<1x8x288xf32>,
    %c1_155 = arith.constant 1 : index
    %c0_156 = arith.constant 0 : index
    %c20_157 = arith.constant 20 : index
    %142 = vector.load %arg0[%c1_155, %c0_156, %c20_157] : memref<2x4x384xf32, #tpu.memory_space<vmem>>, vector<1x4x288xf32>
    %143 = vector.shape_cast %142 : vector<1x4x288xf32> to vector<4x288xf32>
    %c0_158 = arith.constant 0 : index
    %c20_159 = arith.constant 20 : index
    %144 = vector.load %arg1[%c0_158, %c20_159] : memref<8x36xf32, #tpu.memory_space<vmem>>, vector<8x4xf32>
    %c1_160 = arith.constant 1 : index
    %c0_161 = arith.constant 0 : index
    %c0_162 = arith.constant 0 : index
    %145 = vector.load %arg5[%c1_160, %c0_161, %c0_162] : memref<2x8x288xf32, #tpu.memory_space<vmem>>, vector<1x8x288xf32>
    %146 = vector.shape_cast %145 : vector<1x8x288xf32> to vector<8x288xf32>
    %cst_163 = arith.constant dense<0.000000e+00> : vector<8x288xf32>
    %147 = tpu.matmul %144, %143, %cst_163 {dimension_numbers = #tpu.dot_dimension_numbers<[1], [0], [0], [1], [0, 0, 1, 1], [], []>} : vector<8x4xf32>, vector<4x288xf32>, vector<8x288xf32> -> vector<8x288xf32>
    %148 = arith.addf %146, %147 : vector<8x288xf32>
    %c1_164 = arith.constant 1 : index
    %c0_165 = arith.constant 0 : index
    %c0_166 = arith.constant 0 : index
    %149 = vector.load %arg5[%c1_164, %c0_165, %c0_166] : memref<2x8x288xf32, #tpu.memory_space<vmem>>, vector<1x8x288xf32>
    %150 = vector.shape_cast %149 : vector<1x8x288xf32> to vector<8x288xf32>
    %151 = vector.shape_cast %148 : vector<8x288xf32> to vector<1x8x288xf32>
    tpu.vector_store %arg5[%c1_164, %c0_165, %c0_166], %151 {strides = array<i32>} : memref<2x8x288xf32, #tpu.memory_space<vmem>>, vector<1x8x288xf32>,
    %c1_167 = arith.constant 1 : index
    %c0_168 = arith.constant 0 : index
    %c36_169 = arith.constant 36 : index
    %152 = vector.load %arg0[%c1_167, %c0_168, %c36_169] : memref<2x4x384xf32, #tpu.memory_space<vmem>>, vector<1x4x288xf32>
    %153 = vector.shape_cast %152 : vector<1x4x288xf32> to vector<4x288xf32>
    %c0_170 = arith.constant 0 : index
    %c24_171 = arith.constant 24 : index
    %154 = vector.load %arg1[%c0_170, %c24_171] : memref<8x36xf32, #tpu.memory_space<vmem>>, vector<8x4xf32>
    %c1_172 = arith.constant 1 : index
    %c0_173 = arith.constant 0 : index
    %c0_174 = arith.constant 0 : index
    %155 = vector.load %arg5[%c1_172, %c0_173, %c0_174] : memref<2x8x288xf32, #tpu.memory_space<vmem>>, vector<1x8x288xf32>
    %156 = vector.shape_cast %155 : vector<1x8x288xf32> to vector<8x288xf32>
    %cst_175 = arith.constant dense<0.000000e+00> : vector<8x288xf32>
    %157 = tpu.matmul %154, %153, %cst_175 {dimension_numbers = #tpu.dot_dimension_numbers<[1], [0], [0], [1], [0, 0, 1, 1], [], []>} : vector<8x4xf32>, vector<4x288xf32>, vector<8x288xf32> -> vector<8x288xf32>
    %158 = arith.addf %156, %157 : vector<8x288xf32>
    %c1_176 = arith.constant 1 : index
    %c0_177 = arith.constant 0 : index
    %c0_178 = arith.constant 0 : index
    %159 = vector.load %arg5[%c1_176, %c0_177, %c0_178] : memref<2x8x288xf32, #tpu.memory_space<vmem>>, vector<1x8x288xf32>
    %160 = vector.shape_cast %159 : vector<1x8x288xf32> to vector<8x288xf32>
    %161 = vector.shape_cast %158 : vector<8x288xf32> to vector<1x8x288xf32>
    tpu.vector_store %arg5[%c1_176, %c0_177, %c0_178], %161 {strides = array<i32>} : memref<2x8x288xf32, #tpu.memory_space<vmem>>, vector<1x8x288xf32>,
    %c1_179 = arith.constant 1 : index
    %c0_180 = arith.constant 0 : index
    %c37_181 = arith.constant 37 : index
    %162 = vector.load %arg0[%c1_179, %c0_180, %c37_181] : memref<2x4x384xf32, #tpu.memory_space<vmem>>, vector<1x4x288xf32>
    %163 = vector.shape_cast %162 : vector<1x4x288xf32> to vector<4x288xf32>
    %c0_182 = arith.constant 0 : index
    %c28_183 = arith.constant 28 : index
    %164 = vector.load %arg1[%c0_182, %c28_183] : memref<8x36xf32, #tpu.memory_space<vmem>>, vector<8x4xf32>
    %c1_184 = arith.constant 1 : index
    %c0_185 = arith.constant 0 : index
    %c0_186 = arith.constant 0 : index
    %165 = vector.load %arg5[%c1_184, %c0_185, %c0_186] : memref<2x8x288xf32, #tpu.memory_space<vmem>>, vector<1x8x288xf32>
    %166 = vector.shape_cast %165 : vector<1x8x288xf32> to vector<8x288xf32>
    %cst_187 = arith.constant dense<0.000000e+00> : vector<8x288xf32>
    %167 = tpu.matmul %164, %163, %cst_187 {dimension_numbers = #tpu.dot_dimension_numbers<[1], [0], [0], [1], [0, 0, 1, 1], [], []>} : vector<8x4xf32>, vector<4x288xf32>, vector<8x288xf32> -> vector<8x288xf32>
    %168 = arith.addf %166, %167 : vector<8x288xf32>
    %c1_188 = arith.constant 1 : index
    %c0_189 = arith.constant 0 : index
    %c0_190 = arith.constant 0 : index
    %169 = vector.load %arg5[%c1_188, %c0_189, %c0_190] : memref<2x8x288xf32, #tpu.memory_space<vmem>>, vector<1x8x288xf32>
    %170 = vector.shape_cast %169 : vector<1x8x288xf32> to vector<8x288xf32>
    %171 = vector.shape_cast %168 : vector<8x288xf32> to vector<1x8x288xf32>
    tpu.vector_store %arg5[%c1_188, %c0_189, %c0_190], %171 {strides = array<i32>} : memref<2x8x288xf32, #tpu.memory_space<vmem>>, vector<1x8x288xf32>,
    %c1_191 = arith.constant 1 : index
    %c0_192 = arith.constant 0 : index
    %c38_193 = arith.constant 38 : index
    %172 = vector.load %arg0[%c1_191, %c0_192, %c38_193] : memref<2x4x384xf32, #tpu.memory_space<vmem>>, vector<1x4x288xf32>
    %173 = vector.shape_cast %172 : vector<1x4x288xf32> to vector<4x288xf32>
    %c0_194 = arith.constant 0 : index
    %c32_195 = arith.constant 32 : index
    %174 = vector.load %arg1[%c0_194, %c32_195] : memref<8x36xf32, #tpu.memory_space<vmem>>, vector<8x4xf32>
    %c1_196 = arith.constant 1 : index
    %c0_197 = arith.constant 0 : index
    %c0_198 = arith.constant 0 : index
    %175 = vector.load %arg5[%c1_196, %c0_197, %c0_198] : memref<2x8x288xf32, #tpu.memory_space<vmem>>, vector<1x8x288xf32>
    %176 = vector.shape_cast %175 : vector<1x8x288xf32> to vector<8x288xf32>
    %cst_199 = arith.constant dense<0.000000e+00> : vector<8x288xf32>
    %177 = tpu.matmul %174, %173, %cst_199 {dimension_numbers = #tpu.dot_dimension_numbers<[1], [0], [0], [1], [0, 0, 1, 1], [], []>} : vector<8x4xf32>, vector<4x288xf32>, vector<8x288xf32> -> vector<8x288xf32>
    %178 = arith.addf %176, %177 : vector<8x288xf32>
    %c1_200 = arith.constant 1 : index
    %c0_201 = arith.constant 0 : index
    %c0_202 = arith.constant 0 : index
    %179 = vector.load %arg5[%c1_200, %c0_201, %c0_202] : memref<2x8x288xf32, #tpu.memory_space<vmem>>, vector<1x8x288xf32>
    %180 = vector.shape_cast %179 : vector<1x8x288xf32> to vector<8x288xf32>
    %181 = vector.shape_cast %178 : vector<8x288xf32> to vector<1x8x288xf32>
    tpu.vector_store %arg5[%c1_200, %c0_201, %c0_202], %181 {strides = array<i32>} : memref<2x8x288xf32, #tpu.memory_space<vmem>>, vector<1x8x288xf32>,
    %c0_203 = arith.constant 0 : index
    %c0_204 = arith.constant 0 : index
    %c0_205 = arith.constant 0 : index
    %182 = vector.load %arg5[%c0_203, %c0_204, %c0_205] : memref<2x8x288xf32, #tpu.memory_space<vmem>>, vector<2x8x288xf32>
    %183 = tpu.iota {dimensions = array<i32: 2>} : vector<1x1x288xi32>
    %c18_i32 = arith.constant 18 : i32
    %c0_i32 = arith.constant 0 : i32
    %184 = arith.cmpi eq, %c18_i32, %c0_i32 : i32
    %c1_i32 = arith.constant 1 : i32
    %185 = arith.select %184, %c1_i32, %c18_i32 : i32
    %186 = vector.broadcast %185 : i32 to vector<1x1x288xi32>
    %187 = arith.remsi %183, %186 : vector<1x1x288xi32>
    %c0_i32_206 = arith.constant 0 : i32
    %188 = vector.broadcast %c0_i32_206 : i32 to vector<1x1x288xi32>
    %189 = arith.cmpi ne, %187, %188 : vector<1x1x288xi32>
    %c0_i32_207 = arith.constant 0 : i32
    %190 = vector.broadcast %c0_i32_207 : i32 to vector<1x1x288xi32>
    %191 = arith.cmpi slt, %187, %190 : vector<1x1x288xi32>
    %c0_i32_208 = arith.constant 0 : i32
    %192 = arith.cmpi slt, %185, %c0_i32_208 : i32
    %193 = vector.broadcast %192 : i1 to vector<1x1x288xi1>
    %194 = vector.broadcast %193 : vector<1x1x288xi1> to vector<1x1x288xi1>
    %195 = arith.xori %191, %194 : vector<1x1x288xi1>
    %196 = arith.andi %195, %189 : vector<1x1x288xi1>
    %197 = vector.broadcast %185 : i32 to vector<1x1x288xi32>
    %198 = arith.addi %187, %197 : vector<1x1x288xi32>
    %199 = arith.select %196, %198, %187 : vector<1x1x288xi1>, vector<1x1x288xi32>
    %c16_i32 = arith.constant 16 : i32
    %200 = vector.broadcast %c16_i32 : i32 to vector<1x1x288xi32>
    %201 = arith.cmpi slt, %199, %200 : vector<1x1x288xi32>
    %cst_209 = arith.constant 0.000000e+00 : f32
    %202 = vector.shape_cast %201 : vector<1x1x288xi1> to vector<1x1x288xi1>
    %203 = vector.broadcast %202 : vector<1x1x288xi1> to vector<2x8x288xi1>
    %204 = vector.broadcast %cst_209 : f32 to vector<2x8x288xf32>
    %205 = arith.select %203, %182, %204 : vector<2x8x288xi1>, vector<2x8x288xf32>
    %cst_210 = arith.constant dense<0.000000e+00> : vector<2x8xf32>
    %206 = vector.multi_reduction <add>, %205, %cst_210 [2] : vector<2x8x288xf32> to vector<2x8xf32>
    %207 = vector.shape_cast %206 : vector<2x8xf32> to vector<2x8x1xf32>
    %cst_211 = arith.constant dense<0.000000e+00> : vector<8x1xf32>
    %208 = vector.multi_reduction <add>, %207, %cst_211 [0] : vector<2x8x1xf32> to vector<8x1xf32>
    %209 = vector.shape_cast %208 : vector<8x1xf32> to vector<1x8x1xf32>
    %cst_212 = arith.constant 5.120000e+02 : f32
    %210 = vector.broadcast %cst_212 : f32 to vector<1x8x1xf32>
    %211 = arith.divf %209, %210 : vector<1x8x1xf32>
    %212 = vector.broadcast %211 : vector<1x8x1xf32> to vector<2x8x288xf32>
    %213 = arith.subf %182, %212 : vector<2x8x288xf32>
    %214 = arith.mulf %213, %213 : vector<2x8x288xf32>
    %cst_213 = arith.constant 0.000000e+00 : f32
    %215 = vector.shape_cast %201 : vector<1x1x288xi1> to vector<1x1x288xi1>
    %216 = vector.broadcast %215 : vector<1x1x288xi1> to vector<2x8x288xi1>
    %217 = vector.broadcast %cst_213 : f32 to vector<2x8x288xf32>
    %218 = arith.select %216, %214, %217 : vector<2x8x288xi1>, vector<2x8x288xf32>
    %cst_214 = arith.constant dense<0.000000e+00> : vector<2x8xf32>
    %219 = vector.multi_reduction <add>, %218, %cst_214 [2] : vector<2x8x288xf32> to vector<2x8xf32>
    %220 = vector.shape_cast %219 : vector<2x8xf32> to vector<2x8x1xf32>
    %cst_215 = arith.constant dense<0.000000e+00> : vector<8x1xf32>
    %221 = vector.multi_reduction <add>, %220, %cst_215 [0] : vector<2x8x1xf32> to vector<8x1xf32>
    %222 = vector.shape_cast %221 : vector<8x1xf32> to vector<1x8x1xf32>
    %cst_216 = arith.constant 5.120000e+02 : f32
    %223 = vector.broadcast %cst_216 : f32 to vector<1x8x1xf32>
    %224 = arith.divf %222, %223 : vector<1x8x1xf32>
    %cst_217 = arith.constant 9.99999974E-6 : f32
    %225 = vector.broadcast %cst_217 : f32 to vector<1x8x1xf32>
    %226 = arith.addf %224, %225 : vector<1x8x1xf32>
    %227 = math.rsqrt %226 : vector<1x8x1xf32>
    %228 = vector.broadcast %227 : vector<1x8x1xf32> to vector<2x8x288xf32>
    %229 = arith.mulf %213, %228 : vector<2x8x288xf32>
    %c0_218 = arith.constant 0 : index
    %c0_219 = arith.constant 0 : index
    %230 = vector.load %arg2[%c0_218, %c0_219] : memref<8x1xf32, #tpu.memory_space<vmem>>, vector<8x1xf32>
    %231 = vector.shape_cast %230 : vector<8x1xf32> to vector<1x8x1xf32>
    %232 = vector.broadcast %231 : vector<1x8x1xf32> to vector<2x8x288xf32>
    %233 = arith.mulf %229, %232 : vector<2x8x288xf32>
    %c0_220 = arith.constant 0 : index
    %c0_221 = arith.constant 0 : index
    %234 = vector.load %arg3[%c0_220, %c0_221] : memref<8x1xf32, #tpu.memory_space<vmem>>, vector<8x1xf32>
    %235 = vector.shape_cast %234 : vector<8x1xf32> to vector<1x8x1xf32>
    %236 = vector.broadcast %235 : vector<1x8x1xf32> to vector<2x8x288xf32>
    %237 = arith.addf %233, %236 : vector<2x8x288xf32>
    %c0_222 = arith.constant 0 : index
    %c0_223 = arith.constant 0 : index
    %c0_224 = arith.constant 0 : index
    %238 = vector.load %arg4[%c0_222, %c0_223, %c0_224] : memref<2x8x288xf32, #tpu.memory_space<vmem>>, vector<2x8x288xf32>
    tpu.vector_store %arg4[%c0_222, %c0_223, %c0_224], %237 {strides = array<i32>} : memref<2x8x288xf32, #tpu.memory_space<vmem>>, vector<2x8x288xf32>,
    return
  }
}

</mosaic_0001>

<llo_original>
// kernel: tpu_custom_call.1
$region0: #{tpu_custom_call.1}
  #allocation0 [shape = 'u32[]', space=smem, size = 0x4, offset = 0x4, fixed_abs, tag = 'smem constant byte address 0x4 - core index']
  #allocation1 [shape = 'u32[144,128]{1,0:T(1,128)}', space=vmem, size = 0x12000, scoped, tag = 'internal scratch']
  #allocation2 [shape = 'f32[2,8,288]{2,1,0:T(8,128)}', space=vmem, size = 0x6000, scoped, tag = 'scratch operand']
  %s0 = inlined_call_operand.hbm [shape: f32[2,4,384], index: 0, kind: input, shape index: {}]
  %s1 = inlined_call_operand.vmem [shape: f32[8,36], index: 1, kind: input, shape index: {}]
  %s2 = inlined_call_operand.vmem [shape: f32[8,1], index: 2, kind: input, shape index: {}]
  %s3 = inlined_call_operand.vmem [shape: f32[8,1], index: 3, kind: input, shape index: {}]
  %s4 = inlined_call_operand.hbm [shape: f32[2,8,288], index: 4, kind: output, shape index: {}]
  %s5 = sld [smem:[#allocation0]]
  $region30: #{tpu_custom_call.1} parent=0
    _
  %s7 = ssub.s32 1, %s5
  %s8 = scalar_select 0, %s7, %s5
  $region1: #{tpu_custom_call.1} parent=0
    #allocation3 [shape = 'u8[12288]{0}', space=vmem, size = 0x3000, scoped, tag = 'input window, operand 0, single buffered']
    #allocation4 [shape = 's32[1]{0}', space=sflag, size = 0x4, scoped, tag = 'scoped memory for tpu_custom_call.1']
    #allocation5 [shape = 's32[1]{0}', space=sflag, size = 0x4, scoped, tag = 'scoped memory for tpu_custom_call.1']
    #allocation6 [shape = 'u8[24576]{0}', space=vmem, size = 0x6000, scoped, tag = 'output window, operand 0, single buffered']
    %9 = vsyncpa [#allocation4], 0
    %10 = vsyncpa [#allocation5], 0
    // Predicated region
    $region2: #{tpu_custom_call.1} parent=1 // pred_check
      _
    $region3: #{tpu_custom_call.1} parent=1 // pred_check_branch
      %12 = sbr.rel (0) target = $region5
    $region4: #{tpu_custom_call.1} parent=1 // pred_region
      %s14 = ssub.s32 384, 384
      %15 = vsyncadd [#allocation4], %s14
      %s16 = sshll.u32 [#allocation3], 4
      %s17 = int_to_ptr.vmem [resolvable:$true] %s16
      %22 = dma.hbm_to_vmem [thread:$0]  %s0, 384, %s17, [#allocation4], 192, 192, 12
    $region5: #{tpu_custom_call.1} parent=1 // pred_fallthru
      _
    // Predicated region
    $region6: #{tpu_custom_call.1} parent=1 // pred_check
      _
    $region7: #{tpu_custom_call.1} parent=1 // pred_check_branch
      %24 = sbr.rel (0) target = $region9
    $region8: #{tpu_custom_call.1} parent=1 // pred_region
      _
    $region9: #{tpu_custom_call.1} parent=1 // pred_fallthru
      _
    // Predicated region
    $region10: #{tpu_custom_call.1} parent=1 // pred_check
      _
    $region11: #{tpu_custom_call.1} parent=1 // pred_check_branch
      %26 = sbr.rel (0) target = $region13
    $region12: #{tpu_custom_call.1} parent=1 // pred_region
      _
    $region13: #{tpu_custom_call.1} parent=1 // pred_fallthru
      _
    // Predicated region
    $region14: #{tpu_custom_call.1} parent=1 // pred_check
      _
    $region15: #{tpu_custom_call.1} parent=1 // pred_check_branch
      %28 = sbr.rel (0) target = $region17
    $region16: #{tpu_custom_call.1} parent=1 // pred_region
      _
    $region17: #{tpu_custom_call.1} parent=1 // pred_fallthru
      _
    // Predicated region
    $region18: #{tpu_custom_call.1} parent=1 // pred_check
      _
    $region19: #{tpu_custom_call.1} parent=1 // pred_check_branch
      %30 = sbr.rel (0) target = $region21
    $region20: #{tpu_custom_call.1} parent=1 // pred_region
      %31 = dma.done [#allocation4], 384
    $region21: #{tpu_custom_call.1} parent=1 // pred_fallthru
      _
    %32 = vst [vmem:[#allocation2] sm:$0xff] 0.0
    %33 = vst [vmem:[#allocation2 + $0x8] sm:$0xff] 0.0
    %vm34 = vcmask 261120
    %35 = vst.msk [vmem:[#allocation2 + $0x10] sm:$0xff] %vm34, 0.0
    %36 = vst [vmem:[#allocation2 + $0x18] sm:$0xff] 0.0
    %37 = vst [vmem:[#allocation2 + $0x20] sm:$0xff] 0.0
    %38 = vst.msk [vmem:[#allocation2 + $0x28] sm:$0xff] %vm34, 0.0
    %v39 = vld [vmem:[#allocation3] sm:$0xff]
    %v40 = vld [vmem:[#allocation3 + $0x8] sm:$0xf]
    %v41 = vld [vmem:[%s1] sm:$0xff]
    %v42 = vld [vmem:[#allocation2] sm:$0xff]
    %v43 = vld [vmem:[#allocation2 + $0x8] sm:$0xff]
    %v44 = vld [vmem:[#allocation2 + $0x10] sm:$0xff]
    %v47 = vcombine.high %v39, %v39
    %vm48 = vcmask 31744
    %v50 = vsel %vm48, %v41, 0
    %vm52 = vcmask 1043456
    %v53 = vsel %vm52, %v39, 0
    %v55 = vsel %vm52, %v47, 0
    %v57 = vsel %vm52, %v40, 0
    %59 = vmatprep.subr.mxu0 %v55
    %60 = vmatpush1.msra.mxu0 %v53
    %61 = vmatprep.subr.mxu0 0.0
    %62 = vmatpush1.msra.mxu0 0.0
    %63 = vmatprep.subr.mxu0 0.0
    %64 = vmatpush1.msra.mxu0 0.0
    %65 = vmatprep.subr.mxu0 0.0
    %66 = vmatpush1.msra.mxu0 0.0
    %67 = vmatprep.subr.mxu0 0.0
    %68 = vmatpush1.msra.mxu0 0.0
    %69 = vmatprep.subr.mxu0 0.0
    %70 = vmatpush1.msra.mxu0 0.0
    %71 = vmatprep.subr.mxu0 0.0
    %72 = vmatpush1.msra.mxu0 0.0
    %73 = vmatprep.subr.mxu0 0.0
    %74 = vmatpush1.msra.mxu0 0.0
    %75 = vmatprep.subr.mxu0 0.0
    %76 = vmatpush1.msra.mxu0 0.0
    %77 = vmatprep.subr.mxu0 0.0
    %78 = vmatpush1.msra.mxu0 0.0
    %79 = vmatprep.subr.mxu0 0.0
    %80 = vmatpush1.msra.mxu0 0.0
    %81 = vmatprep.subr.mxu0 0.0
    %82 = vmatpush1.msra.mxu0 0.0
    %83 = vmatprep.subr.mxu0 0.0
    %84 = vmatpush1.msra.mxu0 0.0
    %85 = vmatprep.subr.mxu0 0.0
    %86 = vmatpush1.msra.mxu0 0.0
    %87 = vmatprep.subr.mxu0 0.0
    %88 = vmatpush1.msra.mxu0 0.0
    %89 = vmatprep.subr.mxu0 0.0
    %90 = vmatpush1.msra.mxu0 0.0
    %91 = vmatprep.subr.mxu0 0.0
    %92 = vmatpush1.msra.mxu0 0.0
    %93 = vmatprep.subr.mxu0 0.0
    %94 = vmatpush1.msra.mxu0 0.0
    %95 = vmatprep.subr.mxu0 0.0
    %96 = vmatpush1.msra.mxu0 0.0
    %97 = vmatprep.subr.mxu0 0.0
    %98 = vmatpush1.msra.mxu0 0.0
    %99 = vmatprep.subr.mxu0 0.0
    %100 = vmatpush1.msra.mxu0 0.0
    %101 = vmatprep.subr.mxu0 0.0
    %102 = vmatpush1.msra.mxu0 0.0
    %103 = vmatprep.subr.mxu0 0.0
    %104 = vmatpush1.msra.mxu0 0.0
    %105 = vmatprep.subr.mxu0 0.0
    %106 = vmatpush1.msra.mxu0 0.0
    %107 = vmatprep.subr.mxu0 0.0
    %108 = vmatpush1.msra.mxu0 0.0
    %109 = vmatprep.subr.mxu0 0.0
    %110 = vmatpush1.msra.mxu0 0.0
    %111 = vmatprep.subr.mxu0 0.0
    %112 = vmatpush1.msra.mxu0 0.0
    %113 = vmatprep.subr.mxu0 0.0
    %114 = vmatpush1.msra.mxu0 0.0
    %115 = vmatprep.subr.mxu0 0.0
    %116 = vmatpush1.msra.mxu0 0.0
    %117 = vmatprep.subr.mxu0 0.0
    %118 = vmatpush1.msra.mxu0 0.0
    %119 = vmatprep.subr.mxu0 0.0
    %120 = vmatpush1.msra.mxu0 0.0
    %121 = vmatprep.subr.mxu0 0.0
    %122 = vmatpush1.msra.mxu0 0.0
    %123 = vmatprep.mubr.f32.mxu0 0.0
    %124 = vmatmul.mubr.f32.gmra.mrb[0].mxu0 %v50
    %v125 = vpop.f32.mrb[0].mxu0
    %v126 = vadd.f32 0.0, %v125
    %v127 = vpop.f32.mrb[0].mxu0
    %v128 = vadd.f32 0.0, %v127
    %129 = vdwg.mxu0
    %130 = vmatprep.subr.mxu0 0.0
    %131 = vmatpush1.msra.mxu0 %v57
    %132 = vmatprep.subr.mxu0 0.0
    %133 = vmatpush1.msra.mxu0 0.0
    %134 = vmatprep.subr.mxu0 0.0
    %135 = vmatpush1.msra.mxu0 0.0
    %136 = vmatprep.subr.mxu0 0.0
    %137 = vmatpush1.msra.mxu0 0.0
    %138 = vmatprep.subr.mxu0 0.0
    %139 = vmatpush1.msra.mxu0 0.0
    %140 = vmatprep.subr.mxu0 0.0
    %141 = vmatpush1.msra.mxu0 0.0
    %142 = vmatprep.subr.mxu0 0.0
    %143 = vmatpush1.msra.mxu0 0.0
    %144 = vmatprep.subr.mxu0 0.0
    %145 = vmatpush1.msra.mxu0 0.0
    %146 = vmatprep.subr.mxu0 0.0
    %147 = vmatpush1.msra.mxu0 0.0
    %148 = vmatprep.subr.mxu0 0.0
    %149 = vmatpush1.msra.mxu0 0.0
    %150 = vmatprep.subr.mxu0 0.0
    %151 = vmatpush1.msra.mxu0 0.0
    %152 = vmatprep.subr.mxu0 0.0
    %153 = vmatpush1.msra.mxu0 0.0
    %154 = vmatprep.subr.mxu0 0.0
    %155 = vmatpush1.msra.mxu0 0.0
    %156 = vmatprep.subr.mxu0 0.0
    %157 = vmatpush1.msra.mxu0 0.0
    %158 = vmatprep.subr.mxu0 0.0
    %159 = vmatpush1.msra.mxu0 0.0
    %160 = vmatprep.subr.mxu0 0.0
    %161 = vmatpush1.msra.mxu0 0.0
    %162 = vmatprep.subr.mxu0 0.0
    %163 = vmatpush1.msra.mxu0 0.0
    %164 = vmatprep.subr.mxu0 0.0
    %165 = vmatpush1.msra.mxu0 0.0
    %166 = vmatprep.subr.mxu0 0.0
    %167 = vmatpush1.msra.mxu0 0.0
    %168 = vmatprep.subr.mxu0 0.0
    %169 = vmatpush1.msra.mxu0 0.0
    %170 = vmatprep.subr.mxu0 0.0
    %171 = vmatpush1.msra.mxu0 0.0
    %172 = vmatprep.subr.mxu0 0.0
    %173 = vmatpush1.msra.mxu0 0.0
    %174 = vmatprep.subr.mxu0 0.0
    %175 = vmatpush1.msra.mxu0 0.0
    %176 = vmatprep.subr.mxu0 0.0
    %177 = vmatpush1.msra.mxu0 0.0
    %178 = vmatprep.subr.mxu0 0.0
    %179 = vmatpush1.msra.mxu0 0.0
    %180 = vmatprep.subr.mxu0 0.0
    %181 = vmatpush1.msra.mxu0 0.0
    %182 = vmatprep.subr.mxu0 0.0
    %183 = vmatpush1.msra.mxu0 0.0
    %184 = vmatprep.subr.mxu0 0.0
    %185 = vmatpush1.msra.mxu0 0.0
    %186 = vmatprep.subr.mxu0 0.0
    %187 = vmatpush1.msra.mxu0 0.0
    %188 = vmatprep.subr.mxu0 0.0
    %189 = vmatpush1.msra.mxu0 0.0
    %190 = vmatprep.subr.mxu0 0.0
    %191 = vmatpush1.msra.mxu0 0.0
    %192 = vmatprep.subr.mxu0 0.0
    %193 = vmatpush1.msra.mxu0 0.0
    %194 = vmatprep.mubr.f32.mxu0 0.0
    %195 = vmatmul.mubr.f32.gmra.mrb[0].mxu0 %v50
    %v196 = vpop.f32.mrb[0].mxu0
    %v197 = vadd.f32 0.0, %v196
    %v198 = vpop.f32.mrb[0].mxu0
    %199 = vdwg.mxu0
    %v200 = vadd.f32 %v42, %v126
    %v201 = vadd.f32 %v43, %v128
    %v202 = vadd.f32 %v44, %v197
    %203 = vst [vmem:[#allocation2] sm:$0xff] %v200
    %204 = vst [vmem:[#allocation2 + $0x8] sm:$0xff] %v201
    %205 = vst.msk [vmem:[#allocation2 + $0x10] sm:$0xff] %vm34, %v202
    %v206 = vld [vmem:[#allocation3] sm:$0xff]
    %v207 = vld [vmem:[#allocation3 + $0x8] sm:$0xf]
    %v208 = vld [vmem:[%s1] sm:$0xff]
    %v209 = vld [vmem:[#allocation2] sm:$0xff]
    %v210 = vld [vmem:[#allocation2 + $0x8] sm:$0xff]
    %v211 = vld [vmem:[#allocation2 + $0x10] sm:$0xff]
    %213 = vrot.lane.b32.xlu0 %v208, 124
    %v214 = vpop.permute.xlu0 %213
    %v217 = vcombine.high %v206, %v206
    %218 = vrot.lane.b32.xlu0 %v206, 127
    %v219 = vpop.permute.xlu0 %218
    %220 = vrot.lane.b32.xlu0 %v217, 127
    %v221 = vpop.permute.xlu0 %220
    %222 = vrot.lane.b32.xlu0 %v207, 127
    %v223 = vpop.permute.xlu0 %222
    %vm224 = vcmask 1039360
    %v225 = vsel %vm224, %v219, %v221
    %v226 = vsel %vm224, %v221, %v223
    %v227 = vsel %vm48, %v214, 0
    %v229 = vsel %vm52, %v225, 0
    %v231 = vsel %vm52, %v226, 0
    %v233 = vsel %vm52, %v223, 0
    %235 = vmatprep.subr.mxu0 %v231
    %236 = vmatpush1.msra.mxu0 %v229
    %237 = vmatprep.subr.mxu0 0.0
    %238 = vmatpush1.msra.mxu0 0.0
    %239 = vmatprep.subr.mxu0 0.0
    %240 = vmatpush1.msra.mxu0 0.0
    %241 = vmatprep.subr.mxu0 0.0
    %242 = vmatpush1.msra.mxu0 0.0
    %243 = vmatprep.subr.mxu0 0.0
    %244 = vmatpush1.msra.mxu0 0.0
    %245 = vmatprep.subr.mxu0 0.0
    %246 = vmatpush1.msra.mxu0 0.0
    %247 = vmatprep.subr.mxu0 0.0
    %248 = vmatpush1.msra.mxu0 0.0
    %249 = vmatprep.subr.mxu0 0.0
    %250 = vmatpush1.msra.mxu0 0.0
    %251 = vmatprep.subr.mxu0 0.0
    %252 = vmatpush1.msra.mxu0 0.0
    %253 = vmatprep.subr.mxu0 0.0
    %254 = vmatpush1.msra.mxu0 0.0
    %255 = vmatprep.subr.mxu0 0.0
    %256 = vmatpush1.msra.mxu0 0.0
    %257 = vmatprep.subr.mxu0 0.0
    %258 = vmatpush1.msra.mxu0 0.0
    %259 = vmatprep.subr.mxu0 0.0
    %260 = vmatpush1.msra.mxu0 0.0
    %261 = vmatprep.subr.mxu0 0.0
    %262 = vmatpush1.msra.mxu0 0.0
    %263 = vmatprep.subr.mxu0 0.0
    %264 = vmatpush1.msra.mxu0 0.0
    %265 = vmatprep.subr.mxu0 0.0
    %266 = vmatpush1.msra.mxu0 0.0
    %267 = vmatprep.subr.mxu0 0.0
    %268 = vmatpush1.msra.mxu0 0.0
    %269 = vmatprep.subr.mxu0 0.0
    %270 = vmatpush1.msra.mxu0 0.0
    %271 = vmatprep.subr.mxu0 0.0
    %272 = vmatpush1.msra.mxu0 0.0
    %273 = vmatprep.subr.mxu0 0.0
    %274 = vmatpush1.msra.mxu0 0.0
    %275 = vmatprep.subr.mxu0 0.0
    %276 = vmatpush1.msra.mxu0 0.0
    %277 = vmatprep.subr.mxu0 0.0
    %278 = vmatpush1.msra.mxu0 0.0
    %279 = vmatprep.subr.mxu0 0.0
    %280 = vmatpush1.msra.mxu0 0.0
    %281 = vmatprep.subr.mxu0 0.0
    %282 = vmatpush1.msra.mxu0 0.0
    %283 = vmatprep.subr.mxu0 0.0
    %284 = vmatpush1.msra.mxu0 0.0
    %285 = vmatprep.subr.mxu0 0.0
    %286 = vmatpush1.msra.mxu0 0.0
    %287 = vmatprep.subr.mxu0 0.0
    %288 = vmatpush1.msra.mxu0 0.0
    %289 = vmatprep.subr.mxu0 0.0
    %290 = vmatpush1.msra.mxu0 0.0
    %291 = vmatprep.subr.mxu0 0.0
    %292 = vmatpush1.msra.mxu0 0.0
    %293 = vmatprep.subr.mxu0 0.0
    %294 = vmatpush1.msra.mxu0 0.0
    %295 = vmatprep.subr.mxu0 0.0
    %296 = vmatpush1.msra.mxu0 0.0
    %297 = vmatprep.subr.mxu0 0.0
    %298 = vmatpush1.msra.mxu0 0.0
    %299 = vmatprep.mubr.f32.mxu0 0.0
    %300 = vmatmul.mubr.f32.gmra.mrb[0].mxu0 %v227
    %v301 = vpop.f32.mrb[0].mxu0
    %v302 = vadd.f32 0.0, %v301
    %v303 = vpop.f32.mrb[0].mxu0
    %v304 = vadd.f32 0.0, %v303
    %305 = vdwg.mxu0
    %306 = vmatprep.subr.mxu0 0.0
    %307 = vmatpush1.msra.mxu0 %v233
    %308 = vmatprep.subr.mxu0 0.0
    %309 = vmatpush1.msra.mxu0 0.0
    %310 = vmatprep.subr.mxu0 0.0
    %311 = vmatpush1.msra.mxu0 0.0
    %312 = vmatprep.subr.mxu0 0.0
    %313 = vmatpush1.msra.mxu0 0.0
    %314 = vmatprep.subr.mxu0 0.0
    %315 = vmatpush1.msra.mxu0 0.0
    %316 = vmatprep.subr.mxu0 0.0
    %317 = vmatpush1.msra.mxu0 0.0
    %318 = vmatprep.subr.mxu0 0.0
    %319 = vmatpush1.msra.mxu0 0.0
    %320 = vmatprep.subr.mxu0 0.0
    %321 = vmatpush1.msra.mxu0 0.0
    %322 = vmatprep.subr.mxu0 0.0
    %323 = vmatpush1.msra.mxu0 0.0
    %324 = vmatprep.subr.mxu0 0.0
    %325 = vmatpush1.msra.mxu0 0.0
    %326 = vmatprep.subr.mxu0 0.0
    %327 = vmatpush1.msra.mxu0 0.0
    %328 = vmatprep.subr.mxu0 0.0
    %329 = vmatpush1.msra.mxu0 0.0
    %330 = vmatprep.subr.mxu0 0.0
    %331 = vmatpush1.msra.mxu0 0.0
    %332 = vmatprep.subr.mxu0 0.0
    %333 = vmatpush1.msra.mxu0 0.0
    %334 = vmatprep.subr.mxu0 0.0
    %335 = vmatpush1.msra.mxu0 0.0
    %336 = vmatprep.subr.mxu0 0.0
    %337 = vmatpush1.msra.mxu0 0.0
    %338 = vmatprep.subr.mxu0 0.0
    %339 = vmatpush1.msra.mxu0 0.0
    %340 = vmatprep.subr.mxu0 0.0
    %341 = vmatpush1.msra.mxu0 0.0
    %342 = vmatprep.subr.mxu0 0.0
    %343 = vmatpush1.msra.mxu0 0.0
    %344 = vmatprep.subr.mxu0 0.0
    %345 = vmatpush1.msra.mxu0 0.0
    %346 = vmatprep.subr.mxu0 0.0
    %347 = vmatpush1.msra.mxu0 0.0
    %348 = vmatprep.subr.mxu0 0.0
    %349 = vmatpush1.msra.mxu0 0.0
    %350 = vmatprep.subr.mxu0 0.0
    %351 = vmatpush1.msra.mxu0 0.0
    %352 = vmatprep.subr.mxu0 0.0
    %353 = vmatpush1.msra.mxu0 0.0
    %354 = vmatprep.subr.mxu0 0.0
    %355 = vmatpush1.msra.mxu0 0.0
    %356 = vmatprep.subr.mxu0 0.0
    %357 = vmatpush1.msra.mxu0 0.0
    %358 = vmatprep.subr.mxu0 0.0
    %359 = vmatpush1.msra.mxu0 0.0
    %360 = vmatprep.subr.mxu0 0.0
    %361 = vmatpush1.msra.mxu0 0.0
    %362 = vmatprep.subr.mxu0 0.0
    %363 = vmatpush1.msra.mxu0 0.0
    %364 = vmatprep.subr.mxu0 0.0
    %365 = vmatpush1.msra.mxu0 0.0
    %366 = vmatprep.subr.mxu0 0.0
    %367 = vmatpush1.msra.mxu0 0.0
    %368 = vmatprep.subr.mxu0 0.0
    %369 = vmatpush1.msra.mxu0 0.0
    %370 = vmatprep.mubr.f32.mxu0 0.0
    %371 = vmatmul.mubr.f32.gmra.mrb[0].mxu0 %v227
    %v372 = vpop.f32.mrb[0].mxu0
    %v373 = vadd.f32 0.0, %v372
    %v374 = vpop.f32.mrb[0].mxu0
    %375 = vdwg.mxu0
    %v376 = vadd.f32 %v209, %v302
    %v377 = vadd.f32 %v210, %v304
    %v378 = vadd.f32 %v211, %v373
    %379 = vst [vmem:[#allocation2] sm:$0xff] %v376
    %380 = vst [vmem:[#allocation2 + $0x8] sm:$0xff] %v377
    %381 = vst.msk [vmem:[#allocation2 + $0x10] sm:$0xff] %vm34, %v378
    %v382 = vld [vmem:[#allocation3] sm:$0xff]
    %v383 = vld [vmem:[#allocation3 + $0x8] sm:$0xf]
    %v384 = vld [vmem:[%s1] sm:$0xff]
    %v385 = vld [vmem:[#allocation2] sm:$0xff]
    %v386 = vld [vmem:[#allocation2 + $0x8] sm:$0xff]
    %v387 = vld [vmem:[#allocation2 + $0x10] sm:$0xff]
    %389 = vrot.lane.b32.xlu0 %v384, 120
    %v390 = vpop.permute.xlu0 %389
    %v393 = vcombine.high %v382, %v382
    %394 = vrot.lane.b32.xlu0 %v382, 126
    %v395 = vpop.permute.xlu0 %394
    %396 = vrot.lane.b32.xlu0 %v393, 126
    %v397 = vpop.permute.xlu0 %396
    %398 = vrot.lane.b32.xlu0 %v383, 126
    %v399 = vpop.permute.xlu0 %398
    %vm400 = vcmask 1031168
    %v401 = vsel %vm400, %v395, %v397
    %v402 = vsel %vm400, %v397, %v399
    %v403 = vsel %vm48, %v390, 0
    %v405 = vsel %vm52, %v401, 0
    %v407 = vsel %vm52, %v402, 0
    %v409 = vsel %vm52, %v399, 0
    %411 = vmatprep.subr.mxu0 %v407
    %412 = vmatpush1.msra.mxu0 %v405
    %413 = vmatprep.subr.mxu0 0.0
    %414 = vmatpush1.msra.mxu0 0.0
    %415 = vmatprep.subr.mxu0 0.0
    %416 = vmatpush1.msra.mxu0 0.0
    %417 = vmatprep.subr.mxu0 0.0
    %418 = vmatpush1.msra.mxu0 0.0
    %419 = vmatprep.subr.mxu0 0.0
    %420 = vmatpush1.msra.mxu0 0.0
    %421 = vmatprep.subr.mxu0 0.0
    %422 = vmatpush1.msra.mxu0 0.0
    %423 = vmatprep.subr.mxu0 0.0
    %424 = vmatpush1.msra.mxu0 0.0
    %425 = vmatprep.subr.mxu0 0.0
    %426 = vmatpush1.msra.mxu0 0.0
    %427 = vmatprep.subr.mxu0 0.0
    %428 = vmatpush1.msra.mxu0 0.0
    %429 = vmatprep.subr.mxu0 0.0
    %430 = vmatpush1.msra.mxu0 0.0
    %431 = vmatprep.subr.mxu0 0.0
    %432 = vmatpush1.msra.mxu0 0.0
    %433 = vmatprep.subr.mxu0 0.0
    %434 = vmatpush1.msra.mxu0 0.0
    %435 = vmatprep.subr.mxu0 0.0
    %436 = vmatpush1.msra.mxu0 0.0
    %437 = vmatprep.subr.mxu0 0.0
    %438 = vmatpush1.msra.mxu0 0.0
    %439 = vmatprep.subr.mxu0 0.0
    %440 = vmatpush1.msra.mxu0 0.0
    %441 = vmatprep.subr.mxu0 0.0
    %442 = vmatpush1.msra.mxu0 0.0
    %443 = vmatprep.subr.mxu0 0.0
    %444 = vmatpush1.msra.mxu0 0.0
    %445 = vmatprep.subr.mxu0 0.0
    %446 = vmatpush1.msra.mxu0 0.0
    %447 = vmatprep.subr.mxu0 0.0
    %448 = vmatpush1.msra.mxu0 0.0
    %449 = vmatprep.subr.mxu0 0.0
    %450 = vmatpush1.msra.mxu0 0.0
    %451 = vmatprep.subr.mxu0 0.0
    %452 = vmatpush1.msra.mxu0 0.0
    %453 = vmatprep.subr.mxu0 0.0
    %454 = vmatpush1.msra.mxu0 0.0
    %455 = vmatprep.subr.mxu0 0.0
    %456 = vmatpush1.msra.mxu0 0.0
    %457 = vmatprep.subr.mxu0 0.0
    %458 = vmatpush1.msra.mxu0 0.0
    %459 = vmatprep.subr.mxu0 0.0
    %460 = vmatpush1.msra.mxu0 0.0
    %461 = vmatprep.subr.mxu0 0.0
    %462 = vmatpush1.msra.mxu0 0.0
    %463 = vmatprep.subr.mxu0 0.0
    %464 = vmatpush1.msra.mxu0 0.0
    %465 = vmatprep.subr.mxu0 0.0
    %466 = vmatpush1.msra.mxu0 0.0
    %467 = vmatprep.subr.mxu0 0.0
    %468 = vmatpush1.msra.mxu0 0.0
    %469 = vmatprep.subr.mxu0 0.0
    %470 = vmatpush1.msra.mxu0 0.0
    %471 = vmatprep.subr.mxu0 0.0
    %472 = vmatpush1.msra.mxu0 0.0
    %473 = vmatprep.subr.mxu0 0.0
    %474 = vmatpush1.msra.mxu0 0.0
    %475 = vmatprep.mubr.f32.mxu0 0.0
    %476 = vmatmul.mubr.f32.gmra.mrb[0].mxu0 %v403
    %v477 = vpop.f32.mrb[0].mxu0
    %v478 = vadd.f32 0.0, %v477
    %v479 = vpop.f32.mrb[0].mxu0
    %v480 = vadd.f32 0.0, %v479
    %481 = vdwg.mxu0
    %482 = vmatprep.subr.mxu0 0.0
    %483 = vmatpush1.msra.mxu0 %v409
    %484 = vmatprep.subr.mxu0 0.0
    %485 = vmatpush1.msra.mxu0 0.0
    %486 = vmatprep.subr.mxu0 0.0
    %487 = vmatpush1.msra.mxu0 0.0
    %488 = vmatprep.subr.mxu0 0.0
    %489 = vmatpush1.msra.mxu0 0.0
    %490 = vmatprep.subr.mxu0 0.0
    %491 = vmatpush1.msra.mxu0 0.0
    %492 = vmatprep.subr.mxu0 0.0
    %493 = vmatpush1.msra.mxu0 0.0
    %494 = vmatprep.subr.mxu0 0.0
    %495 = vmatpush1.msra.mxu0 0.0
    %496 = vmatprep.subr.mxu0 0.0
    %497 = vmatpush1.msra.mxu0 0.0
    %498 = vmatprep.subr.mxu0 0.0
    %499 = vmatpush1.msra.mxu0 0.0
    %500 = vmatprep.subr.mxu0 0.0
    %501 = vmatpush1.msra.mxu0 0.0
    %502 = vmatprep.subr.mxu0 0.0
    %503 = vmatpush1.msra.mxu0 0.0
    %504 = vmatprep.subr.mxu0 0.0
    %505 = vmatpush1.msra.mxu0 0.0
    %506 = vmatprep.subr.mxu0 0.0
    %507 = vmatpush1.msra.mxu0 0.0
    %508 = vmatprep.subr.mxu0 0.0
    %509 = vmatpush1.msra.mxu0 0.0
    %510 = vmatprep.subr.mxu0 0.0
    %511 = vmatpush1.msra.mxu0 0.0
    %512 = vmatprep.subr.mxu0 0.0
    %513 = vmatpush1.msra.mxu0 0.0
    %514 = vmatprep.subr.mxu0 0.0
    %515 = vmatpush1.msra.mxu0 0.0
    %516 = vmatprep.subr.mxu0 0.0
    %517 = vmatpush1.msra.mxu0 0.0
    %518 = vmatprep.subr.mxu0 0.0
    %519 = vmatpush1.msra.mxu0 0.0
    %520 = vmatprep.subr.mxu0 0.0
    %521 = vmatpush1.msra.mxu0 0.0
    %522 = vmatprep.subr.mxu0 0.0
    %523 = vmatpush1.msra.mxu0 0.0
    %524 = vmatprep.subr.mxu0 0.0
    %525 = vmatpush1.msra.mxu0 0.0
    %526 = vmatprep.subr.mxu0 0.0
    %527 = vmatpush1.msra.mxu0 0.0
    %528 = vmatprep.subr.mxu0 0.0
    %529 = vmatpush1.msra.mxu0 0.0
    %530 = vmatprep.subr.mxu0 0.0
    %531 = vmatpush1.msra.mxu0 0.0
    %532 = vmatprep.subr.mxu0 0.0
    %533 = vmatpush1.msra.mxu0 0.0
    %534 = vmatprep.subr.mxu0 0.0
    %535 = vmatpush1.msra.mxu0 0.0
    %536 = vmatprep.subr.mxu0 0.0
    %537 = vmatpush1.msra.mxu0 0.0
    %538 = vmatprep.subr.mxu0 0.0
    %539 = vmatpush1.msra.mxu0 0.0
    %540 = vmatprep.subr.mxu0 0.0
    %541 = vmatpush1.msra.mxu0 0.0
    %542 = vmatprep.subr.mxu0 0.0
    %543 = vmatpush1.msra.mxu0 0.0
    %544 = vmatprep.subr.mxu0 0.0
    %545 = vmatpush1.msra.mxu0 0.0
    %546 = vmatprep.mubr.f32.mxu0 0.0
    %547 = vmatmul.mubr.f32.gmra.mrb[0].mxu0 %v403
    %v548 = vpop.f32.mrb[0].mxu0
    %v549 = vadd.f32 0.0, %v548
    %v550 = vpop.f32.mrb[0].mxu0
    %551 = vdwg.mxu0
    %v552 = vadd.f32 %v385, %v478
    %v553 = vadd.f32 %v386, %v480
    %v554 = vadd.f32 %v387, %v549
    %555 = vst [vmem:[#allocation2] sm:$0xff] %v552
    %556 = vst [vmem:[#allocation2 + $0x8] sm:$0xff] %v553
    %557 = vst.msk [vmem:[#allocation2 + $0x10] sm:$0xff] %vm34, %v554
    %v558 = vld [vmem:[#allocation3] sm:$0xff]
    %v559 = vld [vmem:[#allocation3 + $0x8] sm:$0xf]
    %v560 = vld [vmem:[%s1] sm:$0xff]
    %v561 = vld [vmem:[#allocation2] sm:$0xff]
    %v562 = vld [vmem:[#allocation2 + $0x8] sm:$0xff]
    %v563 = vld [vmem:[#allocation2 + $0x10] sm:$0xff]
    %565 = vrot.lane.b32.xlu0 %v560, 116
    %v566 = vpop.permute.xlu0 %565
    %v569 = vcombine.high %v558, %v558
    %570 = vrot.lane.b32.xlu0 %v558, 110
    %v571 = vpop.permute.xlu0 %570
    %572 = vrot.lane.b32.xlu0 %v569, 110
    %v573 = vpop.permute.xlu0 %572
    %574 = vrot.lane.b32.xlu0 %v559, 110
    %v575 = vpop.permute.xlu0 %574
    %vm576 = vcmask 900096
    %v577 = vsel %vm576, %v571, %v573
    %v578 = vsel %vm576, %v573, %v575
    %v579 = vsel %vm48, %v566, 0
    %v581 = vsel %vm52, %v577, 0
    %v583 = vsel %vm52, %v578, 0
    %v585 = vsel %vm52, %v575, 0
    %587 = vmatprep.subr.mxu0 %v583
    %588 = vmatpush1.msra.mxu0 %v581
    %589 = vmatprep.subr.mxu0 0.0
    %590 = vmatpush1.msra.mxu0 0.0
    %591 = vmatprep.subr.mxu0 0.0
    %592 = vmatpush1.msra.mxu0 0.0
    %593 = vmatprep.subr.mxu0 0.0
    %594 = vmatpush1.msra.mxu0 0.0
    %595 = vmatprep.subr.mxu0 0.0
    %596 = vmatpush1.msra.mxu0 0.0
    %597 = vmatprep.subr.mxu0 0.0
    %598 = vmatpush1.msra.mxu0 0.0
    %599 = vmatprep.subr.mxu0 0.0
    %600 = vmatpush1.msra.mxu0 0.0
    %601 = vmatprep.subr.mxu0 0.0
    %602 = vmatpush1.msra.mxu0 0.0
    %603 = vmatprep.subr.mxu0 0.0
    %604 = vmatpush1.msra.mxu0 0.0
    %605 = vmatprep.subr.mxu0 0.0
    %606 = vmatpush1.msra.mxu0 0.0
    %607 = vmatprep.subr.mxu0 0.0
    %608 = vmatpush1.msra.mxu0 0.0
    %609 = vmatprep.subr.mxu0 0.0
    %610 = vmatpush1.msra.mxu0 0.0
    %611 = vmatprep.subr.mxu0 0.0
    %612 = vmatpush1.msra.mxu0 0.0
    %613 = vmatprep.subr.mxu0 0.0
    %614 = vmatpush1.msra.mxu0 0.0
    %615 = vmatprep.subr.mxu0 0.0
    %616 = vmatpush1.msra.mxu0 0.0
    %617 = vmatprep.subr.mxu0 0.0
    %618 = vmatpush1.msra.mxu0 0.0
    %619 = vmatprep.subr.mxu0 0.0
    %620 = vmatpush1.msra.mxu0 0.0
    %621 = vmatprep.subr.mxu0 0.0
    %622 = vmatpush1.msra.mxu0 0.0
    %623 = vmatprep.subr.mxu0 0.0
    %624 = vmatpush1.msra.mxu0 0.0
    %625 = vmatprep.subr.mxu0 0.0
    %626 = vmatpush1.msra.mxu0 0.0
    %627 = vmatprep.subr.mxu0 0.0
    %628 = vmatpush1.msra.mxu0 0.0
    %629 = vmatprep.subr.mxu0 0.0
    %630 = vmatpush1.msra.mxu0 0.0
    %631 = vmatprep.subr.mxu0 0.0
    %632 = vmatpush1.msra.mxu0 0.0
    %633 = vmatprep.subr.mxu0 0.0
    %634 = vmatpush1.msra.mxu0 0.0
    %635 = vmatprep.subr.mxu0 0.0
    %636 = vmatpush1.msra.mxu0 0.0
    %637 = vmatprep.subr.mxu0 0.0
    %638 = vmatpush1.msra.mxu0 0.0
    %639 = vmatprep.subr.mxu0 0.0
    %640 = vmatpush1.msra.mxu0 0.0
    %641 = vmatprep.subr.mxu0 0.0
    %642 = vmatpush1.msra.mxu0 0.0
    %643 = vmatprep.subr.mxu0 0.0
    %644 = vmatpush1.msra.mxu0 0.0
    %645 = vmatprep.subr.mxu0 0.0
    %646 = vmatpush1.msra.mxu0 0.0
    %647 = vmatprep.subr.mxu0 0.0
    %648 = vmatpush1.msra.mxu0 0.0
    %649 = vmatprep.subr.mxu0 0.0
    %650 = vmatpush1.msra.mxu0 0.0
    %651 = vmatprep.mubr.f32.mxu0 0.0
    %652 = vmatmul.mubr.f32.gmra.mrb[0].mxu0 %v579
    %v653 = vpop.f32.mrb[0].mxu0
    %v654 = vadd.f32 0.0, %v653
    %v655 = vpop.f32.mrb[0].mxu0
    %v656 = vadd.f32 0.0, %v655
    %657 = vdwg.mxu0
    %658 = vmatprep.subr.mxu0 0.0
    %659 = vmatpush1.msra.mxu0 %v585
    %660 = vmatprep.subr.mxu0 0.0
    %661 = vmatpush1.msra.mxu0 0.0
    %662 = vmatprep.subr.mxu0 0.0
    %663 = vmatpush1.msra.mxu0 0.0
    %664 = vmatprep.subr.mxu0 0.0
    %665 = vmatpush1.msra.mxu0 0.0
    %666 = vmatprep.subr.mxu0 0.0
    %667 = vmatpush1.msra.mxu0 0.0
    %668 = vmatprep.subr.mxu0 0.0
    %669 = vmatpush1.msra.mxu0 0.0
    %670 = vmatprep.subr.mxu0 0.0
    %671 = vmatpush1.msra.mxu0 0.0
    %672 = vmatprep.subr.mxu0 0.0
    %673 = vmatpush1.msra.mxu0 0.0
    %674 = vmatprep.subr.mxu0 0.0
    %675 = vmatpush1.msra.mxu0 0.0
    %676 = vmatprep.subr.mxu0 0.0
    %677 = vmatpush1.msra.mxu0 0.0
    %678 = vmatprep.subr.mxu0 0.0
    %679 = vmatpush1.msra.mxu0 0.0
    %680 = vmatprep.subr.mxu0 0.0
    %681 = vmatpush1.msra.mxu0 0.0
    %682 = vmatprep.subr.mxu0 0.0
    %683 = vmatpush1.msra.mxu0 0.0
    %684 = vmatprep.subr.mxu0 0.0
    %685 = vmatpush1.msra.mxu0 0.0
    %686 = vmatprep.subr.mxu0 0.0
    %687 = vmatpush1.msra.mxu0 0.0
    %688 = vmatprep.subr.mxu0 0.0
    %689 = vmatpush1.msra.mxu0 0.0
    %690 = vmatprep.subr.mxu0 0.0
    %691 = vmatpush1.msra.mxu0 0.0
    %692 = vmatprep.subr.mxu0 0.0
    %693 = vmatpush1.msra.mxu0 0.0
    %694 = vmatprep.subr.mxu0 0.0
    %695 = vmatpush1.msra.mxu0 0.0
    %696 = vmatprep.subr.mxu0 0.0
    %697 = vmatpush1.msra.mxu0 0.0
    %698 = vmatprep.subr.mxu0 0.0
    %699 = vmatpush1.msra.mxu0 0.0
    %700 = vmatprep.subr.mxu0 0.0
    %701 = vmatpush1.msra.mxu0 0.0
    %702 = vmatprep.subr.mxu0 0.0
    %703 = vmatpush1.msra.mxu0 0.0
    %704 = vmatprep.subr.mxu0 0.0
    %705 = vmatpush1.msra.mxu0 0.0
    %706 = vmatprep.subr.mxu0 0.0
    %707 = vmatpush1.msra.mxu0 0.0
    %708 = vmatprep.subr.mxu0 0.0
    %709 = vmatpush1.msra.mxu0 0.0
    %710 = vmatprep.subr.mxu0 0.0
    %711 = vmatpush1.msra.mxu0 0.0
    %712 = vmatprep.subr.mxu0 0.0
    %713 = vmatpush1.msra.mxu0 0.0
    %714 = vmatprep.subr.mxu0 0.0
    %715 = vmatpush1.msra.mxu0 0.0
    %716 = vmatprep.subr.mxu0 0.0
    %717 = vmatpush1.msra.mxu0 0.0
    %718 = vmatprep.subr.mxu0 0.0
    %719 = vmatpush1.msra.mxu0 0.0
    %720 = vmatprep.subr.mxu0 0.0
    %721 = vmatpush1.msra.mxu0 0.0
    %722 = vmatprep.mubr.f32.mxu0 0.0
    %723 = vmatmul.mubr.f32.gmra.mrb[0].mxu0 %v579
    %v724 = vpop.f32.mrb[0].mxu0
    %v725 = vadd.f32 0.0, %v724
    %v726 = vpop.f32.mrb[0].mxu0
    %727 = vdwg.mxu0
    %v728 = vadd.f32 %v561, %v654
    %v729 = vadd.f32 %v562, %v656
    %v730 = vadd.f32 %v563, %v725
    %731 = vst [vmem:[#allocation2] sm:$0xff] %v728
    %732 = vst [vmem:[#allocation2 + $0x8] sm:$0xff] %v729
    %733 = vst.msk [vmem:[#allocation2 + $0x10] sm:$0xff] %vm34, %v730
    %v734 = vld [vmem:[#allocation3] sm:$0xff]
    %v735 = vld [vmem:[#allocation3 + $0x8] sm:$0xf]
    %v736 = vld [vmem:[%s1] sm:$0xff]
    %v737 = vld [vmem:[#allocation2] sm:$0xff]
    %v738 = vld [vmem:[#allocation2 + $0x8] sm:$0xff]
    %v739 = vld [vmem:[#allocation2 + $0x10] sm:$0xff]
    %741 = vrot.lane.b32.xlu0 %v736, 112
    %v742 = vpop.permute.xlu0 %741
    %v745 = vcombine.high %v734, %v734
    %746 = vrot.lane.b32.xlu0 %v734, 109
    %v747 = vpop.permute.xlu0 %746
    %748 = vrot.lane.b32.xlu0 %v745, 109
    %v749 = vpop.permute.xlu0 %748
    %750 = vrot.lane.b32.xlu0 %v735, 109
    %v751 = vpop.permute.xlu0 %750
    %vm752 = vcmask 891904
    %v753 = vsel %vm752, %v747, %v749
    %v754 = vsel %vm752, %v749, %v751
    %v755 = vsel %vm48, %v742, 0
    %v757 = vsel %vm52, %v753, 0
    %v759 = vsel %vm52, %v754, 0
    %v761 = vsel %vm52, %v751, 0
    %763 = vmatprep.subr.mxu0 %v759
    %764 = vmatpush1.msra.mxu0 %v757
    %765 = vmatprep.subr.mxu0 0.0
    %766 = vmatpush1.msra.mxu0 0.0
    %767 = vmatprep.subr.mxu0 0.0
    %768 = vmatpush1.msra.mxu0 0.0
    %769 = vmatprep.subr.mxu0 0.0
    %770 = vmatpush1.msra.mxu0 0.0
    %771 = vmatprep.subr.mxu0 0.0
    %772 = vmatpush1.msra.mxu0 0.0
    %773 = vmatprep.subr.mxu0 0.0
    %774 = vmatpush1.msra.mxu0 0.0
    %775 = vmatprep.subr.mxu0 0.0
    %776 = vmatpush1.msra.mxu0 0.0
    %777 = vmatprep.subr.mxu0 0.0
    %778 = vmatpush1.msra.mxu0 0.0
    %779 = vmatprep.subr.mxu0 0.0
    %780 = vmatpush1.msra.mxu0 0.0
    %781 = vmatprep.subr.mxu0 0.0
    %782 = vmatpush1.msra.mxu0 0.0
    %783 = vmatprep.subr.mxu0 0.0
    %784 = vmatpush1.msra.mxu0 0.0
    %785 = vmatprep.subr.mxu0 0.0
    %786 = vmatpush1.msra.mxu0 0.0
    %787 = vmatprep.subr.mxu0 0.0
    %788 = vmatpush1.msra.mxu0 0.0
    %789 = vmatprep.subr.mxu0 0.0
    %790 = vmatpush1.msra.mxu0 0.0
    %791 = vmatprep.subr.mxu0 0.0
    %792 = vmatpush1.msra.mxu0 0.0
    %793 = vmatprep.subr.mxu0 0.0
    %794 = vmatpush1.msra.mxu0 0.0
    %795 = vmatprep.subr.mxu0 0.0
    %796 = vmatpush1.msra.mxu0 0.0
    %797 = vmatprep.subr.mxu0 0.0
    %798 = vmatpush1.msra.mxu0 0.0
    %799 = vmatprep.subr.mxu0 0.0
    %800 = vmatpush1.msra.mxu0 0.0
    %801 = vmatprep.subr.mxu0 0.0
    %802 = vmatpush1.msra.mxu0 0.0
    %803 = vmatprep.subr.mxu0 0.0
    %804 = vmatpush1.msra.mxu0 0.0
    %805 = vmatprep.subr.mxu0 0.0
    %806 = vmatpush1.msra.mxu0 0.0
    %807 = vmatprep.subr.mxu0 0.0
    %808 = vmatpush1.msra.mxu0 0.0
    %809 = vmatprep.subr.mxu0 0.0
    %810 = vmatpush1.msra.mxu0 0.0
    %811 = vmatprep.subr.mxu0 0.0
    %812 = vmatpush1.msra.mxu0 0.0
    %813 = vmatprep.subr.mxu0 0.0
    %814 = vmatpush1.msra.mxu0 0.0
    %815 = vmatprep.subr.mxu0 0.0
    %816 = vmatpush1.msra.mxu0 0.0
    %817 = vmatprep.subr.mxu0 0.0
    %818 = vmatpush1.msra.mxu0 0.0
    %819 = vmatprep.subr.mxu0 0.0
    %820 = vmatpush1.msra.mxu0 0.0
    %821 = vmatprep.subr.mxu0 0.0
    %822 = vmatpush1.msra.mxu0 0.0
    %823 = vmatprep.subr.mxu0 0.0
    %824 = vmatpush1.msra.mxu0 0.0
    %825 = vmatprep.subr.mxu0 0.0
    %826 = vmatpush1.msra.mxu0 0.0
    %827 = vmatprep.mubr.f32.mxu0 0.0
    %828 = vmatmul.mubr.f32.gmra.mrb[0].mxu0 %v755
    %v829 = vpop.f32.mrb[0].mxu0
    %v830 = vadd.f32 0.0, %v829
    %v831 = vpop.f32.mrb[0].mxu0
    %v832 = vadd.f32 0.0, %v831
    %833 = vdwg.mxu0
    %834 = vmatprep.subr.mxu0 0.0
    %835 = vmatpush1.msra.mxu0 %v761
    %836 = vmatprep.subr.mxu0 0.0
    %837 = vmatpush1.msra.mxu0 0.0
    %838 = vmatprep.subr.mxu0 0.0
    %839 = vmatpush1.msra.mxu0 0.0
    %840 = vmatprep.subr.mxu0 0.0
    %841 = vmatpush1.msra.mxu0 0.0
    %842 = vmatprep.subr.mxu0 0.0
    %843 = vmatpush1.msra.mxu0 0.0
    %844 = vmatprep.subr.mxu0 0.0
    %845 = vmatpush1.msra.mxu0 0.0
    %846 = vmatprep.subr.mxu0 0.0
    %847 = vmatpush1.msra.mxu0 0.0
    %848 = vmatprep.subr.mxu0 0.0
    %849 = vmatpush1.msra.mxu0 0.0
    %850 = vmatprep.subr.mxu0 0.0
    %851 = vmatpush1.msra.mxu0 0.0
    %852 = vmatprep.subr.mxu0 0.0
    %853 = vmatpush1.msra.mxu0 0.0
    %854 = vmatprep.subr.mxu0 0.0
    %855 = vmatpush1.msra.mxu0 0.0
    %856 = vmatprep.subr.mxu0 0.0
    %857 = vmatpush1.msra.mxu0 0.0
    %858 = vmatprep.subr.mxu0 0.0
    %859 = vmatpush1.msra.mxu0 0.0
    %860 = vmatprep.subr.mxu0 0.0
    %861 = vmatpush1.msra.mxu0 0.0
    %862 = vmatprep.subr.mxu0 0.0
    %863 = vmatpush1.msra.mxu0 0.0
    %864 = vmatprep.subr.mxu0 0.0
    %865 = vmatpush1.msra.mxu0 0.0
    %866 = vmatprep.subr.mxu0 0.0
    %867 = vmatpush1.msra.mxu0 0.0
    %868 = vmatprep.subr.mxu0 0.0
    %869 = vmatpush1.msra.mxu0 0.0
    %870 = vmatprep.subr.mxu0 0.0
    %871 = vmatpush1.msra.mxu0 0.0
    %872 = vmatprep.subr.mxu0 0.0
    %873 = vmatpush1.msra.mxu0 0.0
    %874 = vmatprep.subr.mxu0 0.0
    %875 = vmatpush1.msra.mxu0 0.0
    %876 = vmatprep.subr.mxu0 0.0
    %877 = vmatpush1.msra.mxu0 0.0
    %878 = vmatprep.subr.mxu0 0.0
    %879 = vmatpush1.msra.mxu0 0.0
    %880 = vmatprep.subr.mxu0 0.0
    %881 = vmatpush1.msra.mxu0 0.0
    %882 = vmatprep.subr.mxu0 0.0
    %883 = vmatpush1.msra.mxu0 0.0
    %884 = vmatprep.subr.mxu0 0.0
    %885 = vmatpush1.msra.mxu0 0.0
    %886 = vmatprep.subr.mxu0 0.0
    %887 = vmatpush1.msra.mxu0 0.0
    %888 = vmatprep.subr.mxu0 0.0
    %889 = vmatpush1.msra.mxu0 0.0
    %890 = vmatprep.subr.mxu0 0.0
    %891 = vmatpush1.msra.mxu0 0.0
    %892 = vmatprep.subr.mxu0 0.0
    %893 = vmatpush1.msra.mxu0 0.0
    %894 = vmatprep.subr.mxu0 0.0
    %895 = vmatpush1.msra.mxu0 0.0
    %896 = vmatprep.subr.mxu0 0.0
    %897 = vmatpush1.msra.mxu0 0.0
    %898 = vmatprep.mubr.f32.mxu0 0.0
    %899 = vmatmul.mubr.f32.gmra.mrb[0].mxu0 %v755
    %v900 = vpop.f32.mrb[0].mxu0
    %v901 = vadd.f32 0.0, %v900
    %v902 = vpop.f32.mrb[0].mxu0
    %903 = vdwg.mxu0
    %v904 = vadd.f32 %v737, %v830
    %v905 = vadd.f32 %v738, %v832
    %v906 = vadd.f32 %v739, %v901
    %907 = vst [vmem:[#allocation2] sm:$0xff] %v904
    %908 = vst [vmem:[#allocation2 + $0x8] sm:$0xff] %v905
    %909 = vst.msk [vmem:[#allocation2 + $0x10] sm:$0xff] %vm34, %v906
    %v910 = vld [vmem:[#allocation3] sm:$0xff]
    %v911 = vld [vmem:[#allocation3 + $0x8] sm:$0xf]
    %v912 = vld [vmem:[%s1] sm:$0xff]
    %v913 = vld [vmem:[#allocation2] sm:$0xff]
    %v914 = vld [vmem:[#allocation2 + $0x8] sm:$0xff]
    %v915 = vld [vmem:[#allocation2 + $0x10] sm:$0xff]
    %917 = vrot.lane.b32.xlu0 %v912, 108
    %v918 = vpop.permute.xlu0 %917
    %v921 = vcombine.high %v910, %v910
    %922 = vrot.lane.b32.xlu0 %v910, 108
    %v923 = vpop.permute.xlu0 %922
    %924 = vrot.lane.b32.xlu0 %v921, 108
    %v925 = vpop.permute.xlu0 %924
    %926 = vrot.lane.b32.xlu0 %v911, 108
    %v927 = vpop.permute.xlu0 %926
    %vm928 = vcmask 883712
    %v929 = vsel %vm928, %v923, %v925
    %v930 = vsel %vm928, %v925, %v927
    %v931 = vsel %vm48, %v918, 0
    %v933 = vsel %vm52, %v929, 0
    %v935 = vsel %vm52, %v930, 0
    %v937 = vsel %vm52, %v927, 0
    %939 = vmatprep.subr.mxu0 %v935
    %940 = vmatpush1.msra.mxu0 %v933
    %941 = vmatprep.subr.mxu0 0.0
    %942 = vmatpush1.msra.mxu0 0.0
    %943 = vmatprep.subr.mxu0 0.0
    %944 = vmatpush1.msra.mxu0 0.0
    %945 = vmatprep.subr.mxu0 0.0
    %946 = vmatpush1.msra.mxu0 0.0
    %947 = vmatprep.subr.mxu0 0.0
    %948 = vmatpush1.msra.mxu0 0.0
    %949 = vmatprep.subr.mxu0 0.0
    %950 = vmatpush1.msra.mxu0 0.0
    %951 = vmatprep.subr.mxu0 0.0
    %952 = vmatpush1.msra.mxu0 0.0
    %953 = vmatprep.subr.mxu0 0.0
    %954 = vmatpush1.msra.mxu0 0.0
    %955 = vmatprep.subr.mxu0 0.0
    %956 = vmatpush1.msra.mxu0 0.0
    %957 = vmatprep.subr.mxu0 0.0
    %958 = vmatpush1.msra.mxu0 0.0
    %959 = vmatprep.subr.mxu0 0.0
    %960 = vmatpush1.msra.mxu0 0.0
    %961 = vmatprep.subr.mxu0 0.0
    %962 = vmatpush1.msra.mxu0 0.0
    %963 = vmatprep.subr.mxu0 0.0
    %964 = vmatpush1.msra.mxu0 0.0
    %965 = vmatprep.subr.mxu0 0.0
    %966 = vmatpush1.msra.mxu0 0.0
    %967 = vmatprep.subr.mxu0 0.0
    %968 = vmatpush1.msra.mxu0 0.0
    %969 = vmatprep.subr.mxu0 0.0
    %970 = vmatpush1.msra.mxu0 0.0
    %971 = vmatprep.subr.mxu0 0.0
    %972 = vmatpush1.msra.mxu0 0.0
    %973 = vmatprep.subr.mxu0 0.0
    %974 = vmatpush1.msra.mxu0 0.0
    %975 = vmatprep.subr.mxu0 0.0
    %976 = vmatpush1.msra.mxu0 0.0
    %977 = vmatprep.subr.mxu0 0.0
    %978 = vmatpush1.msra.mxu0 0.0
    %979 = vmatprep.subr.mxu0 0.0
    %980 = vmatpush1.msra.mxu0 0.0
    %981 = vmatprep.subr.mxu0 0.0
    %982 = vmatpush1.msra.mxu0 0.0
    %983 = vmatprep.subr.mxu0 0.0
    %984 = vmatpush1.msra.mxu0 0.0
    %985 = vmatprep.subr.mxu0 0.0
    %986 = vmatpush1.msra.mxu0 0.0
    %987 = vmatprep.subr.mxu0 0.0
    %988 = vmatpush1.msra.mxu0 0.0
    %989 = vmatprep.subr.mxu0 0.0
    %990 = vmatpush1.msra.mxu0 0.0
    %991 = vmatprep.subr.mxu0 0.0
    %992 = vmatpush1.msra.mxu0 0.0
    %993 = vmatprep.subr.mxu0 0.0
    %994 = vmatpush1.msra.mxu0 0.0
    %995 = vmatprep.subr.mxu0 0.0
    %996 = vmatpush1.msra.mxu0 0.0
    %997 = vmatprep.subr.mxu0 0.0
    %998 = vmatpush1.msra.mxu0 0.0
    %999 = vmatprep.subr.mxu0 0.0
    %1000 = vmatpush1.msra.mxu0 0.0
    %1001 = vmatprep.subr.mxu0 0.0
    %1002 = vmatpush1.msra.mxu0 0.0
    %1003 = vmatprep.mubr.f32.mxu0 0.0
    %1004 = vmatmul.mubr.f32.gmra.mrb[0].mxu0 %v931
    %v1005 = vpop.f32.mrb[0].mxu0
    %v1006 = vadd.f32 0.0, %v1005
    %v1007 = vpop.f32.mrb[0].mxu0
    %v1008 = vadd.f32 0.0, %v1007
    %1009 = vdwg.mxu0
    %1010 = vmatprep.subr.mxu0 0.0
    %1011 = vmatpush1.msra.mxu0 %v937
    %1012 = vmatprep.subr.mxu0 0.0
    %1013 = vmatpush1.msra.mxu0 0.0
    %1014 = vmatprep.subr.mxu0 0.0
    %1015 = vmatpush1.msra.mxu0 0.0
    %1016 = vmatprep.subr.mxu0 0.0
    %1017 = vmatpush1.msra.mxu0 0.0
    %1018 = vmatprep.subr.mxu0 0.0
    %1019 = vmatpush1.msra.mxu0 0.0
    %1020 = vmatprep.subr.mxu0 0.0
    %1021 = vmatpush1.msra.mxu0 0.0
    %1022 = vmatprep.subr.mxu0 0.0
    %1023 = vmatpush1.msra.mxu0 0.0
    %1024 = vmatprep.subr.mxu0 0.0
    %1025 = vmatpush1.msra.mxu0 0.0
    %1026 = vmatprep.subr.mxu0 0.0
    %1027 = vmatpush1.msra.mxu0 0.0
    %1028 = vmatprep.subr.mxu0 0.0
    %1029 = vmatpush1.msra.mxu0 0.0
    %1030 = vmatprep.subr.mxu0 0.0
    %1031 = vmatpush1.msra.mxu0 0.0
    %1032 = vmatprep.subr.mxu0 0.0
    %1033 = vmatpush1.msra.mxu0 0.0
    %1034 = vmatprep.subr.mxu0 0.0
    %1035 = vmatpush1.msra.mxu0 0.0
    %1036 = vmatprep.subr.mxu0 0.0
    %1037 = vmatpush1.msra.mxu0 0.0
    %1038 = vmatprep.subr.mxu0 0.0
    %1039 = vmatpush1.msra.mxu0 0.0
    %1040 = vmatprep.subr.mxu0 0.0
    %1041 = vmatpush1.msra.mxu0 0.0
    %1042 = vmatprep.subr.mxu0 0.0
    %1043 = vmatpush1.msra.mxu0 0.0
    %1044 = vmatprep.subr.mxu0 0.0
    %1045 = vmatpush1.msra.mxu0 0.0
    %1046 = vmatprep.subr.mxu0 0.0
    %1047 = vmatpush1.msra.mxu0 0.0
    %1048 = vmatprep.subr.mxu0 0.0
    %1049 = vmatpush1.msra.mxu0 0.0
    %1050 = vmatprep.subr.mxu0 0.0
    %1051 = vmatpush1.msra.mxu0 0.0
    %1052 = vmatprep.subr.mxu0 0.0
    %1053 = vmatpush1.msra.mxu0 0.0
    %1054 = vmatprep.subr.mxu0 0.0
    %1055 = vmatpush1.msra.mxu0 0.0
    %1056 = vmatprep.subr.mxu0 0.0
    %1057 = vmatpush1.msra.mxu0 0.0
    %1058 = vmatprep.subr.mxu0 0.0
    %1059 = vmatpush1.msra.mxu0 0.0
    %1060 = vmatprep.subr.mxu0 0.0
    %1061 = vmatpush1.msra.mxu0 0.0
    %1062 = vmatprep.subr.mxu0 0.0
    %1063 = vmatpush1.msra.mxu0 0.0
    %1064 = vmatprep.subr.mxu0 0.0
    %1065 = vmatpush1.msra.mxu0 0.0
    %1066 = vmatprep.subr.mxu0 0.0
    %1067 = vmatpush1.msra.mxu0 0.0
    %1068 = vmatprep.subr.mxu0 0.0
    %1069 = vmatpush1.msra.mxu0 0.0
    %1070 = vmatprep.subr.mxu0 0.0
    %1071 = vmatpush1.msra.mxu0 0.0
    %1072 = vmatprep.subr.mxu0 0.0
    %1073 = vmatpush1.msra.mxu0 0.0
    %1074 = vmatprep.mubr.f32.mxu0 0.0
    %1075 = vmatmul.mubr.f32.gmra.mrb[0].mxu0 %v931
    %v1076 = vpop.f32.mrb[0].mxu0
    %v1077 = vadd.f32 0.0, %v1076
    %v1078 = vpop.f32.mrb[0].mxu0
    %1079 = vdwg.mxu0
    %v1080 = vadd.f32 %v913, %v1006
    %v1081 = vadd.f32 %v914, %v1008
    %v1082 = vadd.f32 %v915, %v1077
    %1083 = vst [vmem:[#allocation2] sm:$0xff] %v1080
    %1084 = vst [vmem:[#allocation2 + $0x8] sm:$0xff] %v1081
    %1085 = vst.msk [vmem:[#allocation2 + $0x10] sm:$0xff] %vm34, %v1082
    %v1086 = vld [vmem:[#allocation3] sm:$0xff]
    %v1087 = vld [vmem:[#allocation3 + $0x8] sm:$0xf]
    %v1088 = vld [vmem:[%s1] sm:$0xff]
    %v1089 = vld [vmem:[#allocation2] sm:$0xff]
    %v1090 = vld [vmem:[#allocation2 + $0x8] sm:$0xff]
    %v1091 = vld [vmem:[#allocation2 + $0x10] sm:$0xff]
    %1093 = vrot.lane.b32.xlu0 %v1088, 104
    %v1094 = vpop.permute.xlu0 %1093
    %v1097 = vcombine.high %v1086, %v1086
    %1098 = vrot.lane.b32.xlu0 %v1086, 92
    %v1099 = vpop.permute.xlu0 %1098
    %1100 = vrot.lane.b32.xlu0 %v1097, 92
    %v1101 = vpop.permute.xlu0 %1100
    %1102 = vrot.lane.b32.xlu0 %v1087, 92
    %v1103 = vpop.permute.xlu0 %1102
    %vm1104 = vcmask 752640
    %v1105 = vsel %vm1104, %v1099, %v1101
    %v1106 = vsel %vm1104, %v1101, %v1103
    %v1107 = vsel %vm48, %v1094, 0
    %v1109 = vsel %vm52, %v1105, 0
    %v1111 = vsel %vm52, %v1106, 0
    %v1113 = vsel %vm52, %v1103, 0
    %1115 = vmatprep.subr.mxu0 %v1111
    %1116 = vmatpush1.msra.mxu0 %v1109
    %1117 = vmatprep.subr.mxu0 0.0
    %1118 = vmatpush1.msra.mxu0 0.0
    %1119 = vmatprep.subr.mxu0 0.0
    %1120 = vmatpush1.msra.mxu0 0.0
    %1121 = vmatprep.subr.mxu0 0.0
    %1122 = vmatpush1.msra.mxu0 0.0
    %1123 = vmatprep.subr.mxu0 0.0
    %1124 = vmatpush1.msra.mxu0 0.0
    %1125 = vmatprep.subr.mxu0 0.0
    %1126 = vmatpush1.msra.mxu0 0.0
    %1127 = vmatprep.subr.mxu0 0.0
    %1128 = vmatpush1.msra.mxu0 0.0
    %1129 = vmatprep.subr.mxu0 0.0
    %1130 = vmatpush1.msra.mxu0 0.0
    %1131 = vmatprep.subr.mxu0 0.0
    %1132 = vmatpush1.msra.mxu0 0.0
    %1133 = vmatprep.subr.mxu0 0.0
    %1134 = vmatpush1.msra.mxu0 0.0
    %1135 = vmatprep.subr.mxu0 0.0
    %1136 = vmatpush1.msra.mxu0 0.0
    %1137 = vmatprep.subr.mxu0 0.0
    %1138 = vmatpush1.msra.mxu0 0.0
    %1139 = vmatprep.subr.mxu0 0.0
    %1140 = vmatpush1.msra.mxu0 0.0
    %1141 = vmatprep.subr.mxu0 0.0
    %1142 = vmatpush1.msra.mxu0 0.0
    %1143 = vmatprep.subr.mxu0 0.0
    %1144 = vmatpush1.msra.mxu0 0.0
    %1145 = vmatprep.subr.mxu0 0.0
    %1146 = vmatpush1.msra.mxu0 0.0
    %1147 = vmatprep.subr.mxu0 0.0
    %1148 = vmatpush1.msra.mxu0 0.0
    %1149 = vmatprep.subr.mxu0 0.0
    %1150 = vmatpush1.msra.mxu0 0.0
    %1151 = vmatprep.subr.mxu0 0.0
    %1152 = vmatpush1.msra.mxu0 0.0
    %1153 = vmatprep.subr.mxu0 0.0
    %1154 = vmatpush1.msra.mxu0 0.0
    %1155 = vmatprep.subr.mxu0 0.0
    %1156 = vmatpush1.msra.mxu0 0.0
    %1157 = vmatprep.subr.mxu0 0.0
    %1158 = vmatpush1.msra.mxu0 0.0
    %1159 = vmatprep.subr.mxu0 0.0
    %1160 = vmatpush1.msra.mxu0 0.0
    %1161 = vmatprep.subr.mxu0 0.0
    %1162 = vmatpush1.msra.mxu0 0.0
    %1163 = vmatprep.subr.mxu0 0.0
    %1164 = vmatpush1.msra.mxu0 0.0
    %1165 = vmatprep.subr.mxu0 0.0
    %1166 = vmatpush1.msra.mxu0 0.0
    %1167 = vmatprep.subr.mxu0 0.0
    %1168 = vmatpush1.msra.mxu0 0.0
    %1169 = vmatprep.subr.mxu0 0.0
    %1170 = vmatpush1.msra.mxu0 0.0
    %1171 = vmatprep.subr.mxu0 0.0
    %1172 = vmatpush1.msra.mxu0 0.0
    %1173 = vmatprep.subr.mxu0 0.0
    %1174 = vmatpush1.msra.mxu0 0.0
    %1175 = vmatprep.subr.mxu0 0.0
    %1176 = vmatpush1.msra.mxu0 0.0
    %1177 = vmatprep.subr.mxu0 0.0
    %1178 = vmatpush1.msra.mxu0 0.0
    %1179 = vmatprep.mubr.f32.mxu0 0.0
    %1180 = vmatmul.mubr.f32.gmra.mrb[0].mxu0 %v1107
    %v1181 = vpop.f32.mrb[0].mxu0
    %v1182 = vadd.f32 0.0, %v1181
    %v1183 = vpop.f32.mrb[0].mxu0
    %v1184 = vadd.f32 0.0, %v1183
    %1185 = vdwg.mxu0
    %1186 = vmatprep.subr.mxu0 0.0
    %1187 = vmatpush1.msra.mxu0 %v1113
    %1188 = vmatprep.subr.mxu0 0.0
    %1189 = vmatpush1.msra.mxu0 0.0
    %1190 = vmatprep.subr.mxu0 0.0
    %1191 = vmatpush1.msra.mxu0 0.0
    %1192 = vmatprep.subr.mxu0 0.0
    %1193 = vmatpush1.msra.mxu0 0.0
    %1194 = vmatprep.subr.mxu0 0.0
    %1195 = vmatpush1.msra.mxu0 0.0
    %1196 = vmatprep.subr.mxu0 0.0
    %1197 = vmatpush1.msra.mxu0 0.0
    %1198 = vmatprep.subr.mxu0 0.0
    %1199 = vmatpush1.msra.mxu0 0.0
    %1200 = vmatprep.subr.mxu0 0.0
    %1201 = vmatpush1.msra.mxu0 0.0
    %1202 = vmatprep.subr.mxu0 0.0
    %1203 = vmatpush1.msra.mxu0 0.0
    %1204 = vmatprep.subr.mxu0 0.0
    %1205 = vmatpush1.msra.mxu0 0.0
    %1206 = vmatprep.subr.mxu0 0.0
    %1207 = vmatpush1.msra.mxu0 0.0
    %1208 = vmatprep.subr.mxu0 0.0
    %1209 = vmatpush1.msra.mxu0 0.0
    %1210 = vmatprep.subr.mxu0 0.0
    %1211 = vmatpush1.msra.mxu0 0.0
    %1212 = vmatprep.subr.mxu0 0.0
    %1213 = vmatpush1.msra.mxu0 0.0
    %1214 = vmatprep.subr.mxu0 0.0
    %1215 = vmatpush1.msra.mxu0 0.0
    %1216 = vmatprep.subr.mxu0 0.0
    %1217 = vmatpush1.msra.mxu0 0.0
    %1218 = vmatprep.subr.mxu0 0.0
    %1219 = vmatpush1.msra.mxu0 0.0
    %1220 = vmatprep.subr.mxu0 0.0
    %1221 = vmatpush1.msra.mxu0 0.0
    %1222 = vmatprep.subr.mxu0 0.0
    %1223 = vmatpush1.msra.mxu0 0.0
    %1224 = vmatprep.subr.mxu0 0.0
    %1225 = vmatpush1.msra.mxu0 0.0
    %1226 = vmatprep.subr.mxu0 0.0
    %1227 = vmatpush1.msra.mxu0 0.0
    %1228 = vmatprep.subr.mxu0 0.0
    %1229 = vmatpush1.msra.mxu0 0.0
    %1230 = vmatprep.subr.mxu0 0.0
    %1231 = vmatpush1.msra.mxu0 0.0
    %1232 = vmatprep.subr.mxu0 0.0
    %1233 = vmatpush1.msra.mxu0 0.0
    %1234 = vmatprep.subr.mxu0 0.0
    %1235 = vmatpush1.msra.mxu0 0.0
    %1236 = vmatprep.subr.mxu0 0.0
    %1237 = vmatpush1.msra.mxu0 0.0
    %1238 = vmatprep.subr.mxu0 0.0
    %1239 = vmatpush1.msra.mxu0 0.0
    %1240 = vmatprep.subr.mxu0 0.0
    %1241 = vmatpush1.msra.mxu0 0.0
    %1242 = vmatprep.subr.mxu0 0.0
    %1243 = vmatpush1.msra.mxu0 0.0
    %1244 = vmatprep.subr.mxu0 0.0
    %1245 = vmatpush1.msra.mxu0 0.0
    %1246 = vmatprep.subr.mxu0 0.0
    %1247 = vmatpush1.msra.mxu0 0.0
    %1248 = vmatprep.subr.mxu0 0.0
    %1249 = vmatpush1.msra.mxu0 0.0
    %1250 = vmatprep.mubr.f32.mxu0 0.0
    %1251 = vmatmul.mubr.f32.gmra.mrb[0].mxu0 %v1107
    %v1252 = vpop.f32.mrb[0].mxu0
    %v1253 = vadd.f32 0.0, %v1252
    %v1254 = vpop.f32.mrb[0].mxu0
    %1255 = vdwg.mxu0
    %v1256 = vadd.f32 %v1089, %v1182
    %v1257 = vadd.f32 %v1090, %v1184
    %v1258 = vadd.f32 %v1091, %v1253
    %1259 = vst [vmem:[#allocation2] sm:$0xff] %v1256
    %1260 = vst [vmem:[#allocation2 + $0x8] sm:$0xff] %v1257
    %1261 = vst.msk [vmem:[#allocation2 + $0x10] sm:$0xff] %vm34, %v1258
    %v1262 = vld [vmem:[#allocation3] sm:$0xff]
    %v1263 = vld [vmem:[#allocation3 + $0x8] sm:$0xf]
    %v1264 = vld [vmem:[%s1] sm:$0xff]
    %v1265 = vld [vmem:[#allocation2] sm:$0xff]
    %v1266 = vld [vmem:[#allocation2 + $0x8] sm:$0xff]
    %v1267 = vld [vmem:[#allocation2 + $0x10] sm:$0xff]
    %1269 = vrot.lane.b32.xlu0 %v1264, 100
    %v1270 = vpop.permute.xlu0 %1269
    %v1273 = vcombine.high %v1262, %v1262
    %1274 = vrot.lane.b32.xlu0 %v1262, 91
    %v1275 = vpop.permute.xlu0 %1274
    %1276 = vrot.lane.b32.xlu0 %v1273, 91
    %v1277 = vpop.permute.xlu0 %1276
    %1278 = vrot.lane.b32.xlu0 %v1263, 91
    %v1279 = vpop.permute.xlu0 %1278
    %vm1280 = vcmask 744448
    %v1281 = vsel %vm1280, %v1275, %v1277
    %v1282 = vsel %vm1280, %v1277, %v1279
    %v1283 = vsel %vm48, %v1270, 0
    %v1285 = vsel %vm52, %v1281, 0
    %v1287 = vsel %vm52, %v1282, 0
    %v1289 = vsel %vm52, %v1279, 0
    %1291 = vmatprep.subr.mxu0 %v1287
    %1292 = vmatpush1.msra.mxu0 %v1285
    %1293 = vmatprep.subr.mxu0 0.0
    %1294 = vmatpush1.msra.mxu0 0.0
    %1295 = vmatprep.subr.mxu0 0.0
    %1296 = vmatpush1.msra.mxu0 0.0
    %1297 = vmatprep.subr.mxu0 0.0
    %1298 = vmatpush1.msra.mxu0 0.0
    %1299 = vmatprep.subr.mxu0 0.0
    %1300 = vmatpush1.msra.mxu0 0.0
    %1301 = vmatprep.subr.mxu0 0.0
    %1302 = vmatpush1.msra.mxu0 0.0
    %1303 = vmatprep.subr.mxu0 0.0
    %1304 = vmatpush1.msra.mxu0 0.0
    %1305 = vmatprep.subr.mxu0 0.0
    %1306 = vmatpush1.msra.mxu0 0.0
    %1307 = vmatprep.subr.mxu0 0.0
    %1308 = vmatpush1.msra.mxu0 0.0
    %1309 = vmatprep.subr.mxu0 0.0
    %1310 = vmatpush1.msra.mxu0 0.0
    %1311 = vmatprep.subr.mxu0 0.0
    %1312 = vmatpush1.msra.mxu0 0.0
    %1313 = vmatprep.subr.mxu0 0.0
    %1314 = vmatpush1.msra.mxu0 0.0
    %1315 = vmatprep.subr.mxu0 0.0
    %1316 = vmatpush1.msra.mxu0 0.0
    %1317 = vmatprep.subr.mxu0 0.0
    %1318 = vmatpush1.msra.mxu0 0.0
    %1319 = vmatprep.subr.mxu0 0.0
    %1320 = vmatpush1.msra.mxu0 0.0
    %1321 = vmatprep.subr.mxu0 0.0
    %1322 = vmatpush1.msra.mxu0 0.0
    %1323 = vmatprep.subr.mxu0 0.0
    %1324 = vmatpush1.msra.mxu0 0.0
    %1325 = vmatprep.subr.mxu0 0.0
    %1326 = vmatpush1.msra.mxu0 0.0
    %1327 = vmatprep.subr.mxu0 0.0
    %1328 = vmatpush1.msra.mxu0 0.0
    %1329 = vmatprep.subr.mxu0 0.0
    %1330 = vmatpush1.msra.mxu0 0.0
    %1331 = vmatprep.subr.mxu0 0.0
    %1332 = vmatpush1.msra.mxu0 0.0
    %1333 = vmatprep.subr.mxu0 0.0
    %1334 = vmatpush1.msra.mxu0 0.0
    %1335 = vmatprep.subr.mxu0 0.0
    %1336 = vmatpush1.msra.mxu0 0.0
    %1337 = vmatprep.subr.mxu0 0.0
    %1338 = vmatpush1.msra.mxu0 0.0
    %1339 = vmatprep.subr.mxu0 0.0
    %1340 = vmatpush1.msra.mxu0 0.0
    %1341 = vmatprep.subr.mxu0 0.0
    %1342 = vmatpush1.msra.mxu0 0.0
    %1343 = vmatprep.subr.mxu0 0.0
    %1344 = vmatpush1.msra.mxu0 0.0
    %1345 = vmatprep.subr.mxu0 0.0
    %1346 = vmatpush1.msra.mxu0 0.0
    %1347 = vmatprep.subr.mxu0 0.0
    %1348 = vmatpush1.msra.mxu0 0.0
    %1349 = vmatprep.subr.mxu0 0.0
    %1350 = vmatpush1.msra.mxu0 0.0
    %1351 = vmatprep.subr.mxu0 0.0
    %1352 = vmatpush1.msra.mxu0 0.0
    %1353 = vmatprep.subr.mxu0 0.0
    %1354 = vmatpush1.msra.mxu0 0.0
    %1355 = vmatprep.mubr.f32.mxu0 0.0
    %1356 = vmatmul.mubr.f32.gmra.mrb[0].mxu0 %v1283
    %v1357 = vpop.f32.mrb[0].mxu0
    %v1358 = vadd.f32 0.0, %v1357
    %v1359 = vpop.f32.mrb[0].mxu0
    %v1360 = vadd.f32 0.0, %v1359
    %1361 = vdwg.mxu0
    %1362 = vmatprep.subr.mxu0 0.0
    %1363 = vmatpush1.msra.mxu0 %v1289
    %1364 = vmatprep.subr.mxu0 0.0
    %1365 = vmatpush1.msra.mxu0 0.0
    %1366 = vmatprep.subr.mxu0 0.0
    %1367 = vmatpush1.msra.mxu0 0.0
    %1368 = vmatprep.subr.mxu0 0.0
    %1369 = vmatpush1.msra.mxu0 0.0
    %1370 = vmatprep.subr.mxu0 0.0
    %1371 = vmatpush1.msra.mxu0 0.0
    %1372 = vmatprep.subr.mxu0 0.0
    %1373 = vmatpush1.msra.mxu0 0.0
    %1374 = vmatprep.subr.mxu0 0.0
    %1375 = vmatpush1.msra.mxu0 0.0
    %1376 = vmatprep.subr.mxu0 0.0
    %1377 = vmatpush1.msra.mxu0 0.0
    %1378 = vmatprep.subr.mxu0 0.0
    %1379 = vmatpush1.msra.mxu0 0.0
    %1380 = vmatprep.subr.mxu0 0.0
    %1381 = vmatpush1.msra.mxu0 0.0
    %1382 = vmatprep.subr.mxu0 0.0
    %1383 = vmatpush1.msra.mxu0 0.0
    %1384 = vmatprep.subr.mxu0 0.0
    %1385 = vmatpush1.msra.mxu0 0.0
    %1386 = vmatprep.subr.mxu0 0.0
    %1387 = vmatpush1.msra.mxu0 0.0
    %1388 = vmatprep.subr.mxu0 0.0
    %1389 = vmatpush1.msra.mxu0 0.0
    %1390 = vmatprep.subr.mxu0 0.0
    %1391 = vmatpush1.msra.mxu0 0.0
    %1392 = vmatprep.subr.mxu0 0.0
    %1393 = vmatpush1.msra.mxu0 0.0
    %1394 = vmatprep.subr.mxu0 0.0
    %1395 = vmatpush1.msra.mxu0 0.0
    %1396 = vmatprep.subr.mxu0 0.0
    %1397 = vmatpush1.msra.mxu0 0.0
    %1398 = vmatprep.subr.mxu0 0.0
    %1399 = vmatpush1.msra.mxu0 0.0
    %1400 = vmatprep.subr.mxu0 0.0
    %1401 = vmatpush1.msra.mxu0 0.0
    %1402 = vmatprep.subr.mxu0 0.0
    %1403 = vmatpush1.msra.mxu0 0.0
    %1404 = vmatprep.subr.mxu0 0.0
    %1405 = vmatpush1.msra.mxu0 0.0
    %1406 = vmatprep.subr.mxu0 0.0
    %1407 = vmatpush1.msra.mxu0 0.0
    %1408 = vmatprep.subr.mxu0 0.0
    %1409 = vmatpush1.msra.mxu0 0.0
    %1410 = vmatprep.subr.mxu0 0.0
    %1411 = vmatpush1.msra.mxu0 0.0
    %1412 = vmatprep.subr.mxu0 0.0
    %1413 = vmatpush1.msra.mxu0 0.0
    %1414 = vmatprep.subr.mxu0 0.0
    %1415 = vmatpush1.msra.mxu0 0.0
    %1416 = vmatprep.subr.mxu0 0.0
    %1417 = vmatpush1.msra.mxu0 0.0
    %1418 = vmatprep.subr.mxu0 0.0
    %1419 = vmatpush1.msra.mxu0 0.0
    %1420 = vmatprep.subr.mxu0 0.0
    %1421 = vmatpush1.msra.mxu0 0.0
    %1422 = vmatprep.subr.mxu0 0.0
    %1423 = vmatpush1.msra.mxu0 0.0
    %1424 = vmatprep.subr.mxu0 0.0
    %1425 = vmatpush1.msra.mxu0 0.0
    %1426 = vmatprep.mubr.f32.mxu0 0.0
    %1427 = vmatmul.mubr.f32.gmra.mrb[0].mxu0 %v1283
    %v1428 = vpop.f32.mrb[0].mxu0
    %v1429 = vadd.f32 0.0, %v1428
    %v1430 = vpop.f32.mrb[0].mxu0
    %1431 = vdwg.mxu0
    %v1432 = vadd.f32 %v1265, %v1358
    %v1433 = vadd.f32 %v1266, %v1360
    %v1434 = vadd.f32 %v1267, %v1429
    %1435 = vst [vmem:[#allocation2] sm:$0xff] %v1432
    %1436 = vst [vmem:[#allocation2 + $0x8] sm:$0xff] %v1433
    %1437 = vst.msk [vmem:[#allocation2 + $0x10] sm:$0xff] %vm34, %v1434
    %v1438 = vld [vmem:[#allocation3] sm:$0xff]
    %v1439 = vld [vmem:[#allocation3 + $0x8] sm:$0xf]
    %v1440 = vld [vmem:[%s1] sm:$0xff]
    %v1441 = vld [vmem:[#allocation2] sm:$0xff]
    %v1442 = vld [vmem:[#allocation2 + $0x8] sm:$0xff]
    %v1443 = vld [vmem:[#allocation2 + $0x10] sm:$0xff]
    %1445 = vrot.lane.b32.xlu0 %v1440, 96
    %v1446 = vpop.permute.xlu0 %1445
    %v1449 = vcombine.high %v1438, %v1438
    %1450 = vrot.lane.b32.xlu0 %v1438, 90
    %v1451 = vpop.permute.xlu0 %1450
    %1452 = vrot.lane.b32.xlu0 %v1449, 90
    %v1453 = vpop.permute.xlu0 %1452
    %1454 = vrot.lane.b32.xlu0 %v1439, 90
    %v1455 = vpop.permute.xlu0 %1454
    %vm1456 = vcmask 736256
    %v1457 = vsel %vm1456, %v1451, %v1453
    %v1458 = vsel %vm1456, %v1453, %v1455
    %v1459 = vsel %vm48, %v1446, 0
    %v1461 = vsel %vm52, %v1457, 0
    %v1463 = vsel %vm52, %v1458, 0
    %v1465 = vsel %vm52, %v1455, 0
    %1467 = vmatprep.subr.mxu0 %v1463
    %1468 = vmatpush1.msra.mxu0 %v1461
    %1469 = vmatprep.subr.mxu0 0.0
    %1470 = vmatpush1.msra.mxu0 0.0
    %1471 = vmatprep.subr.mxu0 0.0
    %1472 = vmatpush1.msra.mxu0 0.0
    %1473 = vmatprep.subr.mxu0 0.0
    %1474 = vmatpush1.msra.mxu0 0.0
    %1475 = vmatprep.subr.mxu0 0.0
    %1476 = vmatpush1.msra.mxu0 0.0
    %1477 = vmatprep.subr.mxu0 0.0
    %1478 = vmatpush1.msra.mxu0 0.0
    %1479 = vmatprep.subr.mxu0 0.0
    %1480 = vmatpush1.msra.mxu0 0.0
    %1481 = vmatprep.subr.mxu0 0.0
    %1482 = vmatpush1.msra.mxu0 0.0
    %1483 = vmatprep.subr.mxu0 0.0
    %1484 = vmatpush1.msra.mxu0 0.0
    %1485 = vmatprep.subr.mxu0 0.0
    %1486 = vmatpush1.msra.mxu0 0.0
    %1487 = vmatprep.subr.mxu0 0.0
    %1488 = vmatpush1.msra.mxu0 0.0
    %1489 = vmatprep.subr.mxu0 0.0
    %1490 = vmatpush1.msra.mxu0 0.0
    %1491 = vmatprep.subr.mxu0 0.0
    %1492 = vmatpush1.msra.mxu0 0.0
    %1493 = vmatprep.subr.mxu0 0.0
    %1494 = vmatpush1.msra.mxu0 0.0
    %1495 = vmatprep.subr.mxu0 0.0
    %1496 = vmatpush1.msra.mxu0 0.0
    %1497 = vmatprep.subr.mxu0 0.0
    %1498 = vmatpush1.msra.mxu0 0.0
    %1499 = vmatprep.subr.mxu0 0.0
    %1500 = vmatpush1.msra.mxu0 0.0
    %1501 = vmatprep.subr.mxu0 0.0
    %1502 = vmatpush1.msra.mxu0 0.0
    %1503 = vmatprep.subr.mxu0 0.0
    %1504 = vmatpush1.msra.mxu0 0.0
    %1505 = vmatprep.subr.mxu0 0.0
    %1506 = vmatpush1.msra.mxu0 0.0
    %1507 = vmatprep.subr.mxu0 0.0
    %1508 = vmatpush1.msra.mxu0 0.0
    %1509 = vmatprep.subr.mxu0 0.0
    %1510 = vmatpush1.msra.mxu0 0.0
    %1511 = vmatprep.subr.mxu0 0.0
    %1512 = vmatpush1.msra.mxu0 0.0
    %1513 = vmatprep.subr.mxu0 0.0
    %1514 = vmatpush1.msra.mxu0 0.0
    %1515 = vmatprep.subr.mxu0 0.0
    %1516 = vmatpush1.msra.mxu0 0.0
    %1517 = vmatprep.subr.mxu0 0.0
    %1518 = vmatpush1.msra.mxu0 0.0
    %1519 = vmatprep.subr.mxu0 0.0
    %1520 = vmatpush1.msra.mxu0 0.0
    %1521 = vmatprep.subr.mxu0 0.0
    %1522 = vmatpush1.msra.mxu0 0.0
    %1523 = vmatprep.subr.mxu0 0.0
    %1524 = vmatpush1.msra.mxu0 0.0
    %1525 = vmatprep.subr.mxu0 0.0
    %1526 = vmatpush1.msra.mxu0 0.0
    %1527 = vmatprep.subr.mxu0 0.0
    %1528 = vmatpush1.msra.mxu0 0.0
    %1529 = vmatprep.subr.mxu0 0.0
    %1530 = vmatpush1.msra.mxu0 0.0
    %1531 = vmatprep.mubr.f32.mxu0 0.0
    %1532 = vmatmul.mubr.f32.gmra.mrb[0].mxu0 %v1459
    %v1533 = vpop.f32.mrb[0].mxu0
    %v1534 = vadd.f32 0.0, %v1533
    %v1535 = vpop.f32.mrb[0].mxu0
    %v1536 = vadd.f32 0.0, %v1535
    %1537 = vdwg.mxu0
    %1538 = vmatprep.subr.mxu0 0.0
    %1539 = vmatpush1.msra.mxu0 %v1465
    %1540 = vmatprep.subr.mxu0 0.0
    %1541 = vmatpush1.msra.mxu0 0.0
    %1542 = vmatprep.subr.mxu0 0.0
    %1543 = vmatpush1.msra.mxu0 0.0
    %1544 = vmatprep.subr.mxu0 0.0
    %1545 = vmatpush1.msra.mxu0 0.0
    %1546 = vmatprep.subr.mxu0 0.0
    %1547 = vmatpush1.msra.mxu0 0.0
    %1548 = vmatprep.subr.mxu0 0.0
    %1549 = vmatpush1.msra.mxu0 0.0
    %1550 = vmatprep.subr.mxu0 0.0
    %1551 = vmatpush1.msra.mxu0 0.0
    %1552 = vmatprep.subr.mxu0 0.0
    %1553 = vmatpush1.msra.mxu0 0.0
    %1554 = vmatprep.subr.mxu0 0.0
    %1555 = vmatpush1.msra.mxu0 0.0
    %1556 = vmatprep.subr.mxu0 0.0
    %1557 = vmatpush1.msra.mxu0 0.0
    %1558 = vmatprep.subr.mxu0 0.0
    %1559 = vmatpush1.msra.mxu0 0.0
    %1560 = vmatprep.subr.mxu0 0.0
    %1561 = vmatpush1.msra.mxu0 0.0
    %1562 = vmatprep.subr.mxu0 0.0
    %1563 = vmatpush1.msra.mxu0 0.0
    %1564 = vmatprep.subr.mxu0 0.0
    %1565 = vmatpush1.msra.mxu0 0.0
    %1566 = vmatprep.subr.mxu0 0.0
    %1567 = vmatpush1.msra.mxu0 0.0
    %1568 = vmatprep.subr.mxu0 0.0
    %1569 = vmatpush1.msra.mxu0 0.0
    %1570 = vmatprep.subr.mxu0 0.0
    %1571 = vmatpush1.msra.mxu0 0.0
    %1572 = vmatprep.subr.mxu0 0.0
    %1573 = vmatpush1.msra.mxu0 0.0
    %1574 = vmatprep.subr.mxu0 0.0
    %1575 = vmatpush1.msra.mxu0 0.0
    %1576 = vmatprep.subr.mxu0 0.0
    %1577 = vmatpush1.msra.mxu0 0.0
    %1578 = vmatprep.subr.mxu0 0.0
    %1579 = vmatpush1.msra.mxu0 0.0
    %1580 = vmatprep.subr.mxu0 0.0
    %1581 = vmatpush1.msra.mxu0 0.0
    %1582 = vmatprep.subr.mxu0 0.0
    %1583 = vmatpush1.msra.mxu0 0.0
    %1584 = vmatprep.subr.mxu0 0.0
    %1585 = vmatpush1.msra.mxu0 0.0
    %1586 = vmatprep.subr.mxu0 0.0
    %1587 = vmatpush1.msra.mxu0 0.0
    %1588 = vmatprep.subr.mxu0 0.0
    %1589 = vmatpush1.msra.mxu0 0.0
    %1590 = vmatprep.subr.mxu0 0.0
    %1591 = vmatpush1.msra.mxu0 0.0
    %1592 = vmatprep.subr.mxu0 0.0
    %1593 = vmatpush1.msra.mxu0 0.0
    %1594 = vmatprep.subr.mxu0 0.0
    %1595 = vmatpush1.msra.mxu0 0.0
    %1596 = vmatprep.subr.mxu0 0.0
    %1597 = vmatpush1.msra.mxu0 0.0
    %1598 = vmatprep.subr.mxu0 0.0
    %1599 = vmatpush1.msra.mxu0 0.0
    %1600 = vmatprep.subr.mxu0 0.0
    %1601 = vmatpush1.msra.mxu0 0.0
    %1602 = vmatprep.mubr.f32.mxu0 0.0
    %1603 = vmatmul.mubr.f32.gmra.mrb[0].mxu0 %v1459
    %v1604 = vpop.f32.mrb[0].mxu0
    %v1605 = vadd.f32 0.0, %v1604
    %v1606 = vpop.f32.mrb[0].mxu0
    %1607 = vdwg.mxu0
    %v1608 = vadd.f32 %v1441, %v1534
    %v1609 = vadd.f32 %v1442, %v1536
    %v1610 = vadd.f32 %v1443, %v1605
    %1611 = vst [vmem:[#allocation2] sm:$0xff] %v1608
    %1612 = vst [vmem:[#allocation2 + $0x8] sm:$0xff] %v1609
    %1613 = vst.msk [vmem:[#allocation2 + $0x10] sm:$0xff] %vm34, %v1610
    %s1614 = scalar_lea.vmem [#allocation3], 12
    %v1615 = vld [vmem:[%s1614] sm:$0xff]
    %v1616 = vld [vmem:[%s1614 + $0x8] sm:$0xf]
    %v1617 = vld [vmem:[%s1] sm:$0xff]
    %s1618 = scalar_lea.vmem [#allocation2], 24
    %v1619 = vld [vmem:[%s1618] sm:$0xff]
    %v1620 = vld [vmem:[%s1618 + $0x8] sm:$0xff]
    %v1621 = vld [vmem:[%s1618 + $0x10] sm:$0xff]
    %v1624 = vcombine.high %v1615, %v1615
    %v1626 = vsel %vm48, %v1617, 0
    %v1628 = vsel %vm52, %v1615, 0
    %v1630 = vsel %vm52, %v1624, 0
    %v1632 = vsel %vm52, %v1616, 0
    %1634 = vmatprep.subr.mxu0 %v1630
    %1635 = vmatpush1.msra.mxu0 %v1628
    %1636 = vmatprep.subr.mxu0 0.0
    %1637 = vmatpush1.msra.mxu0 0.0
    %1638 = vmatprep.subr.mxu0 0.0
    %1639 = vmatpush1.msra.mxu0 0.0
    %1640 = vmatprep.subr.mxu0 0.0
    %1641 = vmatpush1.msra.mxu0 0.0
    %1642 = vmatprep.subr.mxu0 0.0
    %1643 = vmatpush1.msra.mxu0 0.0
    %1644 = vmatprep.subr.mxu0 0.0
    %1645 = vmatpush1.msra.mxu0 0.0
    %1646 = vmatprep.subr.mxu0 0.0
    %1647 = vmatpush1.msra.mxu0 0.0
    %1648 = vmatprep.subr.mxu0 0.0
    %1649 = vmatpush1.msra.mxu0 0.0
    %1650 = vmatprep.subr.mxu0 0.0
    %1651 = vmatpush1.msra.mxu0 0.0
    %1652 = vmatprep.subr.mxu0 0.0
    %1653 = vmatpush1.msra.mxu0 0.0
    %1654 = vmatprep.subr.mxu0 0.0
    %1655 = vmatpush1.msra.mxu0 0.0
    %1656 = vmatprep.subr.mxu0 0.0
    %1657 = vmatpush1.msra.mxu0 0.0
    %1658 = vmatprep.subr.mxu0 0.0
    %1659 = vmatpush1.msra.mxu0 0.0
    %1660 = vmatprep.subr.mxu0 0.0
    %1661 = vmatpush1.msra.mxu0 0.0
    %1662 = vmatprep.subr.mxu0 0.0
    %1663 = vmatpush1.msra.mxu0 0.0
    %1664 = vmatprep.subr.mxu0 0.0
    %1665 = vmatpush1.msra.mxu0 0.0
    %1666 = vmatprep.subr.mxu0 0.0
    %1667 = vmatpush1.msra.mxu0 0.0
    %1668 = vmatprep.subr.mxu0 0.0
    %1669 = vmatpush1.msra.mxu0 0.0
    %1670 = vmatprep.subr.mxu0 0.0
    %1671 = vmatpush1.msra.mxu0 0.0
    %1672 = vmatprep.subr.mxu0 0.0
    %1673 = vmatpush1.msra.mxu0 0.0
    %1674 = vmatprep.subr.mxu0 0.0
    %1675 = vmatpush1.msra.mxu0 0.0
    %1676 = vmatprep.subr.mxu0 0.0
    %1677 = vmatpush1.msra.mxu0 0.0
    %1678 = vmatprep.subr.mxu0 0.0
    %1679 = vmatpush1.msra.mxu0 0.0
    %1680 = vmatprep.subr.mxu0 0.0
    %1681 = vmatpush1.msra.mxu0 0.0
    %1682 = vmatprep.subr.mxu0 0.0
    %1683 = vmatpush1.msra.mxu0 0.0
    %1684 = vmatprep.subr.mxu0 0.0
    %1685 = vmatpush1.msra.mxu0 0.0
    %1686 = vmatprep.subr.mxu0 0.0
    %1687 = vmatpush1.msra.mxu0 0.0
    %1688 = vmatprep.subr.mxu0 0.0
    %1689 = vmatpush1.msra.mxu0 0.0
    %1690 = vmatprep.subr.mxu0 0.0
    %1691 = vmatpush1.msra.mxu0 0.0
    %1692 = vmatprep.subr.mxu0 0.0
    %1693 = vmatpush1.msra.mxu0 0.0
    %1694 = vmatprep.subr.mxu0 0.0
    %1695 = vmatpush1.msra.mxu0 0.0
    %1696 = vmatprep.subr.mxu0 0.0
    %1697 = vmatpush1.msra.mxu0 0.0
    %1698 = vmatprep.mubr.f32.mxu0 0.0
    %1699 = vmatmul.mubr.f32.gmra.mrb[0].mxu0 %v1626
    %v1700 = vpop.f32.mrb[0].mxu0
    %v1701 = vadd.f32 0.0, %v1700
    %v1702 = vpop.f32.mrb[0].mxu0
    %v1703 = vadd.f32 0.0, %v1702
    %1704 = vdwg.mxu0
    %1705 = vmatprep.subr.mxu0 0.0
    %1706 = vmatpush1.msra.mxu0 %v1632
    %1707 = vmatprep.subr.mxu0 0.0
    %1708 = vmatpush1.msra.mxu0 0.0
    %1709 = vmatprep.subr.mxu0 0.0
    %1710 = vmatpush1.msra.mxu0 0.0
    %1711 = vmatprep.subr.mxu0 0.0
    %1712 = vmatpush1.msra.mxu0 0.0
    %1713 = vmatprep.subr.mxu0 0.0
    %1714 = vmatpush1.msra.mxu0 0.0
    %1715 = vmatprep.subr.mxu0 0.0
    %1716 = vmatpush1.msra.mxu0 0.0
    %1717 = vmatprep.subr.mxu0 0.0
    %1718 = vmatpush1.msra.mxu0 0.0
    %1719 = vmatprep.subr.mxu0 0.0
    %1720 = vmatpush1.msra.mxu0 0.0
    %1721 = vmatprep.subr.mxu0 0.0
    %1722 = vmatpush1.msra.mxu0 0.0
    %1723 = vmatprep.subr.mxu0 0.0
    %1724 = vmatpush1.msra.mxu0 0.0
    %1725 = vmatprep.subr.mxu0 0.0
    %1726 = vmatpush1.msra.mxu0 0.0
    %1727 = vmatprep.subr.mxu0 0.0
    %1728 = vmatpush1.msra.mxu0 0.0
    %1729 = vmatprep.subr.mxu0 0.0
    %1730 = vmatpush1.msra.mxu0 0.0
    %1731 = vmatprep.subr.mxu0 0.0
    %1732 = vmatpush1.msra.mxu0 0.0
    %1733 = vmatprep.subr.mxu0 0.0
    %1734 = vmatpush1.msra.mxu0 0.0
    %1735 = vmatprep.subr.mxu0 0.0
    %1736 = vmatpush1.msra.mxu0 0.0
    %1737 = vmatprep.subr.mxu0 0.0
    %1738 = vmatpush1.msra.mxu0 0.0
    %1739 = vmatprep.subr.mxu0 0.0
    %1740 = vmatpush1.msra.mxu0 0.0
    %1741 = vmatprep.subr.mxu0 0.0
    %1742 = vmatpush1.msra.mxu0 0.0
    %1743 = vmatprep.subr.mxu0 0.0
    %1744 = vmatpush1.msra.mxu0 0.0
    %1745 = vmatprep.subr.mxu0 0.0
    %1746 = vmatpush1.msra.mxu0 0.0
    %1747 = vmatprep.subr.mxu0 0.0
    %1748 = vmatpush1.msra.mxu0 0.0
    %1749 = vmatprep.subr.mxu0 0.0
    %1750 = vmatpush1.msra.mxu0 0.0
    %1751 = vmatprep.subr.mxu0 0.0
    %1752 = vmatpush1.msra.mxu0 0.0
    %1753 = vmatprep.subr.mxu0 0.0
    %1754 = vmatpush1.msra.mxu0 0.0
    %1755 = vmatprep.subr.mxu0 0.0
    %1756 = vmatpush1.msra.mxu0 0.0
    %1757 = vmatprep.subr.mxu0 0.0
    %1758 = vmatpush1.msra.mxu0 0.0
    %1759 = vmatprep.subr.mxu0 0.0
    %1760 = vmatpush1.msra.mxu0 0.0
    %1761 = vmatprep.subr.mxu0 0.0
    %1762 = vmatpush1.msra.mxu0 0.0
    %1763 = vmatprep.subr.mxu0 0.0
    %1764 = vmatpush1.msra.mxu0 0.0
    %1765 = vmatprep.subr.mxu0 0.0
    %1766 = vmatpush1.msra.mxu0 0.0
    %1767 = vmatprep.subr.mxu0 0.0
    %1768 = vmatpush1.msra.mxu0 0.0
    %1769 = vmatprep.mubr.f32.mxu0 0.0
    %1770 = vmatmul.mubr.f32.gmra.mrb[0].mxu0 %v1626
    %v1771 = vpop.f32.mrb[0].mxu0
    %v1772 = vadd.f32 0.0, %v1771
    %v1773 = vpop.f32.mrb[0].mxu0
    %1774 = vdwg.mxu0
    %v1775 = vadd.f32 %v1619, %v1701
    %v1776 = vadd.f32 %v1620, %v1703
    %v1777 = vadd.f32 %v1621, %v1772
    %1778 = vst [vmem:[%s1618] sm:$0xff] %v1775
    %1779 = vst [vmem:[%s1618 + $0x8] sm:$0xff] %v1776
    %1780 = vst.msk [vmem:[%s1618 + $0x10] sm:$0xff] %vm34, %v1777
    %v1781 = vld [vmem:[%s1614] sm:$0xff]
    %v1782 = vld [vmem:[%s1614 + $0x8] sm:$0xf]
    %v1783 = vld [vmem:[%s1] sm:$0xff]
    %v1784 = vld [vmem:[%s1618] sm:$0xff]
    %v1785 = vld [vmem:[%s1618 + $0x8] sm:$0xff]
    %v1786 = vld [vmem:[%s1618 + $0x10] sm:$0xff]
    %1788 = vrot.lane.b32.xlu0 %v1783, 124
    %v1789 = vpop.permute.xlu0 %1788
    %v1792 = vcombine.high %v1781, %v1781
    %1793 = vrot.lane.b32.xlu0 %v1781, 127
    %v1794 = vpop.permute.xlu0 %1793
    %1795 = vrot.lane.b32.xlu0 %v1792, 127
    %v1796 = vpop.permute.xlu0 %1795
    %1797 = vrot.lane.b32.xlu0 %v1782, 127
    %v1798 = vpop.permute.xlu0 %1797
    %v1799 = vsel %vm224, %v1794, %v1796
    %v1800 = vsel %vm224, %v1796, %v1798
    %v1801 = vsel %vm48, %v1789, 0
    %v1803 = vsel %vm52, %v1799, 0
    %v1805 = vsel %vm52, %v1800, 0
    %v1807 = vsel %vm52, %v1798, 0
    %1809 = vmatprep.subr.mxu0 %v1805
    %1810 = vmatpush1.msra.mxu0 %v1803
    %1811 = vmatprep.subr.mxu0 0.0
    %1812 = vmatpush1.msra.mxu0 0.0
    %1813 = vmatprep.subr.mxu0 0.0
    %1814 = vmatpush1.msra.mxu0 0.0
    %1815 = vmatprep.subr.mxu0 0.0
    %1816 = vmatpush1.msra.mxu0 0.0
    %1817 = vmatprep.subr.mxu0 0.0
    %1818 = vmatpush1.msra.mxu0 0.0
    %1819 = vmatprep.subr.mxu0 0.0
    %1820 = vmatpush1.msra.mxu0 0.0
    %1821 = vmatprep.subr.mxu0 0.0
    %1822 = vmatpush1.msra.mxu0 0.0
    %1823 = vmatprep.subr.mxu0 0.0
    %1824 = vmatpush1.msra.mxu0 0.0
    %1825 = vmatprep.subr.mxu0 0.0
    %1826 = vmatpush1.msra.mxu0 0.0
    %1827 = vmatprep.subr.mxu0 0.0
    %1828 = vmatpush1.msra.mxu0 0.0
    %1829 = vmatprep.subr.mxu0 0.0
    %1830 = vmatpush1.msra.mxu0 0.0
    %1831 = vmatprep.subr.mxu0 0.0
    %1832 = vmatpush1.msra.mxu0 0.0
    %1833 = vmatprep.subr.mxu0 0.0
    %1834 = vmatpush1.msra.mxu0 0.0
    %1835 = vmatprep.subr.mxu0 0.0
    %1836 = vmatpush1.msra.mxu0 0.0
    %1837 = vmatprep.subr.mxu0 0.0
    %1838 = vmatpush1.msra.mxu0 0.0
    %1839 = vmatprep.subr.mxu0 0.0
    %1840 = vmatpush1.msra.mxu0 0.0
    %1841 = vmatprep.subr.mxu0 0.0
    %1842 = vmatpush1.msra.mxu0 0.0
    %1843 = vmatprep.subr.mxu0 0.0
    %1844 = vmatpush1.msra.mxu0 0.0
    %1845 = vmatprep.subr.mxu0 0.0
    %1846 = vmatpush1.msra.mxu0 0.0
    %1847 = vmatprep.subr.mxu0 0.0
    %1848 = vmatpush1.msra.mxu0 0.0
    %1849 = vmatprep.subr.mxu0 0.0
    %1850 = vmatpush1.msra.mxu0 0.0
    %1851 = vmatprep.subr.mxu0 0.0
    %1852 = vmatpush1.msra.mxu0 0.0
    %1853 = vmatprep.subr.mxu0 0.0
    %1854 = vmatpush1.msra.mxu0 0.0
    %1855 = vmatprep.subr.mxu0 0.0
    %1856 = vmatpush1.msra.mxu0 0.0
    %1857 = vmatprep.subr.mxu0 0.0
    %1858 = vmatpush1.msra.mxu0 0.0
    %1859 = vmatprep.subr.mxu0 0.0
    %1860 = vmatpush1.msra.mxu0 0.0
    %1861 = vmatprep.subr.mxu0 0.0
    %1862 = vmatpush1.msra.mxu0 0.0
    %1863 = vmatprep.subr.mxu0 0.0
    %1864 = vmatpush1.msra.mxu0 0.0
    %1865 = vmatprep.subr.mxu0 0.0
    %1866 = vmatpush1.msra.mxu0 0.0
    %1867 = vmatprep.subr.mxu0 0.0
    %1868 = vmatpush1.msra.mxu0 0.0
    %1869 = vmatprep.subr.mxu0 0.0
    %1870 = vmatpush1.msra.mxu0 0.0
    %1871 = vmatprep.subr.mxu0 0.0
    %1872 = vmatpush1.msra.mxu0 0.0
    %1873 = vmatprep.mubr.f32.mxu0 0.0
    %1874 = vmatmul.mubr.f32.gmra.mrb[0].mxu0 %v1801
    %v1875 = vpop.f32.mrb[0].mxu0
    %v1876 = vadd.f32 0.0, %v1875
    %v1877 = vpop.f32.mrb[0].mxu0
    %v1878 = vadd.f32 0.0, %v1877
    %1879 = vdwg.mxu0
    %1880 = vmatprep.subr.mxu0 0.0
    %1881 = vmatpush1.msra.mxu0 %v1807
    %1882 = vmatprep.subr.mxu0 0.0
    %1883 = vmatpush1.msra.mxu0 0.0
    %1884 = vmatprep.subr.mxu0 0.0
    %1885 = vmatpush1.msra.mxu0 0.0
    %1886 = vmatprep.subr.mxu0 0.0
    %1887 = vmatpush1.msra.mxu0 0.0
    %1888 = vmatprep.subr.mxu0 0.0
    %1889 = vmatpush1.msra.mxu0 0.0
    %1890 = vmatprep.subr.mxu0 0.0
    %1891 = vmatpush1.msra.mxu0 0.0
    %1892 = vmatprep.subr.mxu0 0.0
    %1893 = vmatpush1.msra.mxu0 0.0
    %1894 = vmatprep.subr.mxu0 0.0
    %1895 = vmatpush1.msra.mxu0 0.0
    %1896 = vmatprep.subr.mxu0 0.0
    %1897 = vmatpush1.msra.mxu0 0.0
    %1898 = vmatprep.subr.mxu0 0.0
    %1899 = vmatpush1.msra.mxu0 0.0
    %1900 = vmatprep.subr.mxu0 0.0
    %1901 = vmatpush1.msra.mxu0 0.0
    %1902 = vmatprep.subr.mxu0 0.0
    %1903 = vmatpush1.msra.mxu0 0.0
    %1904 = vmatprep.subr.mxu0 0.0
    %1905 = vmatpush1.msra.mxu0 0.0
    %1906 = vmatprep.subr.mxu0 0.0
    %1907 = vmatpush1.msra.mxu0 0.0
    %1908 = vmatprep.subr.mxu0 0.0
    %1909 = vmatpush1.msra.mxu0 0.0
    %1910 = vmatprep.subr.mxu0 0.0
    %1911 = vmatpush1.msra.mxu0 0.0
    %1912 = vmatprep.subr.mxu0 0.0
    %1913 = vmatpush1.msra.mxu0 0.0
    %1914 = vmatprep.subr.mxu0 0.0
    %1915 = vmatpush1.msra.mxu0 0.0
    %1916 = vmatprep.subr.mxu0 0.0
    %1917 = vmatpush1.msra.mxu0 0.0
    %1918 = vmatprep.subr.mxu0 0.0
    %1919 = vmatpush1.msra.mxu0 0.0
    %1920 = vmatprep.subr.mxu0 0.0
    %1921 = vmatpush1.msra.mxu0 0.0
    %1922 = vmatprep.subr.mxu0 0.0
    %1923 = vmatpush1.msra.mxu0 0.0
    %1924 = vmatprep.subr.mxu0 0.0
    %1925 = vmatpush1.msra.mxu0 0.0
    %1926 = vmatprep.subr.mxu0 0.0
    %1927 = vmatpush1.msra.mxu0 0.0
    %1928 = vmatprep.subr.mxu0 0.0
    %1929 = vmatpush1.msra.mxu0 0.0
    %1930 = vmatprep.subr.mxu0 0.0
    %1931 = vmatpush1.msra.mxu0 0.0
    %1932 = vmatprep.subr.mxu0 0.0
    %1933 = vmatpush1.msra.mxu0 0.0
    %1934 = vmatprep.subr.mxu0 0.0
    %1935 = vmatpush1.msra.mxu0 0.0
    %1936 = vmatprep.subr.mxu0 0.0
    %1937 = vmatpush1.msra.mxu0 0.0
    %1938 = vmatprep.subr.mxu0 0.0
    %1939 = vmatpush1.msra.mxu0 0.0
    %1940 = vmatprep.subr.mxu0 0.0
    %1941 = vmatpush1.msra.mxu0 0.0
    %1942 = vmatprep.subr.mxu0 0.0
    %1943 = vmatpush1.msra.mxu0 0.0
    %1944 = vmatprep.mubr.f32.mxu0 0.0
    %1945 = vmatmul.mubr.f32.gmra.mrb[0].mxu0 %v1801
    %v1946 = vpop.f32.mrb[0].mxu0
    %v1947 = vadd.f32 0.0, %v1946
    %v1948 = vpop.f32.mrb[0].mxu0
    %1949 = vdwg.mxu0
    %v1950 = vadd.f32 %v1784, %v1876
    %v1951 = vadd.f32 %v1785, %v1878
    %v1952 = vadd.f32 %v1786, %v1947
    %1953 = vst [vmem:[%s1618] sm:$0xff] %v1950
    %1954 = vst [vmem:[%s1618 + $0x8] sm:$0xff] %v1951
    %1955 = vst.msk [vmem:[%s1618 + $0x10] sm:$0xff] %vm34, %v1952
    %v1956 = vld [vmem:[%s1614] sm:$0xff]
    %v1957 = vld [vmem:[%s1614 + $0x8] sm:$0xf]
    %v1958 = vld [vmem:[%s1] sm:$0xff]
    %v1959 = vld [vmem:[%s1618] sm:$0xff]
    %v1960 = vld [vmem:[%s1618 + $0x8] sm:$0xff]
    %v1961 = vld [vmem:[%s1618 + $0x10] sm:$0xff]
    %1963 = vrot.lane.b32.xlu0 %v1958, 120
    %v1964 = vpop.permute.xlu0 %1963
    %v1967 = vcombine.high %v1956, %v1956
    %1968 = vrot.lane.b32.xlu0 %v1956, 126
    %v1969 = vpop.permute.xlu0 %1968
    %1970 = vrot.lane.b32.xlu0 %v1967, 126
    %v1971 = vpop.permute.xlu0 %1970
    %1972 = vrot.lane.b32.xlu0 %v1957, 126
    %v1973 = vpop.permute.xlu0 %1972
    %v1974 = vsel %vm400, %v1969, %v1971
    %v1975 = vsel %vm400, %v1971, %v1973
    %v1976 = vsel %vm48, %v1964, 0
    %v1978 = vsel %vm52, %v1974, 0
    %v1980 = vsel %vm52, %v1975, 0
    %v1982 = vsel %vm52, %v1973, 0
    %1984 = vmatprep.subr.mxu0 %v1980
    %1985 = vmatpush1.msra.mxu0 %v1978
    %1986 = vmatprep.subr.mxu0 0.0
    %1987 = vmatpush1.msra.mxu0 0.0
    %1988 = vmatprep.subr.mxu0 0.0
    %1989 = vmatpush1.msra.mxu0 0.0
    %1990 = vmatprep.subr.mxu0 0.0
    %1991 = vmatpush1.msra.mxu0 0.0
    %1992 = vmatprep.subr.mxu0 0.0
    %1993 = vmatpush1.msra.mxu0 0.0
    %1994 = vmatprep.subr.mxu0 0.0
    %1995 = vmatpush1.msra.mxu0 0.0
    %1996 = vmatprep.subr.mxu0 0.0
    %1997 = vmatpush1.msra.mxu0 0.0
    %1998 = vmatprep.subr.mxu0 0.0
    %1999 = vmatpush1.msra.mxu0 0.0
    %2000 = vmatprep.subr.mxu0 0.0
    %2001 = vmatpush1.msra.mxu0 0.0
    %2002 = vmatprep.subr.mxu0 0.0
    %2003 = vmatpush1.msra.mxu0 0.0
    %2004 = vmatprep.subr.mxu0 0.0
    %2005 = vmatpush1.msra.mxu0 0.0
    %2006 = vmatprep.subr.mxu0 0.0
    %2007 = vmatpush1.msra.mxu0 0.0
    %2008 = vmatprep.subr.mxu0 0.0
    %2009 = vmatpush1.msra.mxu0 0.0
    %2010 = vmatprep.subr.mxu0 0.0
    %2011 = vmatpush1.msra.mxu0 0.0
    %2012 = vmatprep.subr.mxu0 0.0
    %2013 = vmatpush1.msra.mxu0 0.0
    %2014 = vmatprep.subr.mxu0 0.0
    %2015 = vmatpush1.msra.mxu0 0.0
    %2016 = vmatprep.subr.mxu0 0.0
    %2017 = vmatpush1.msra.mxu0 0.0
    %2018 = vmatprep.subr.mxu0 0.0
    %2019 = vmatpush1.msra.mxu0 0.0
    %2020 = vmatprep.subr.mxu0 0.0
    %2021 = vmatpush1.msra.mxu0 0.0
    %2022 = vmatprep.subr.mxu0 0.0
    %2023 = vmatpush1.msra.mxu0 0.0
    %2024 = vmatprep.subr.mxu0 0.0
    %2025 = vmatpush1.msra.mxu0 0.0
    %2026 = vmatprep.subr.mxu0 0.0
    %2027 = vmatpush1.msra.mxu0 0.0
    %2028 = vmatprep.subr.mxu0 0.0
    %2029 = vmatpush1.msra.mxu0 0.0
    %2030 = vmatprep.subr.mxu0 0.0
    %2031 = vmatpush1.msra.mxu0 0.0
    %2032 = vmatprep.subr.mxu0 0.0
    %2033 = vmatpush1.msra.mxu0 0.0
    %2034 = vmatprep.subr.mxu0 0.0
    %2035 = vmatpush1.msra.mxu0 0.0
    %2036 = vmatprep.subr.mxu0 0.0
    %2037 = vmatpush1.msra.mxu0 0.0
    %2038 = vmatprep.subr.mxu0 0.0
    %2039 = vmatpush1.msra.mxu0 0.0
    %2040 = vmatprep.subr.mxu0 0.0
    %2041 = vmatpush1.msra.mxu0 0.0
    %2042 = vmatprep.subr.mxu0 0.0
    %2043 = vmatpush1.msra.mxu0 0.0
    %2044 = vmatprep.subr.mxu0 0.0
    %2045 = vmatpush1.msra.mxu0 0.0
    %2046 = vmatprep.subr.mxu0 0.0
    %2047 = vmatpush1.msra.mxu0 0.0
    %2048 = vmatprep.mubr.f32.mxu0 0.0
    %2049 = vmatmul.mubr.f32.gmra.mrb[0].mxu0 %v1976
    %v2050 = vpop.f32.mrb[0].mxu0
    %v2051 = vadd.f32 0.0, %v2050
    %v2052 = vpop.f32.mrb[0].mxu0
    %v2053 = vadd.f32 0.0, %v2052
    %2054 = vdwg.mxu0
    %2055 = vmatprep.subr.mxu0 0.0
    %2056 = vmatpush1.msra.mxu0 %v1982
    %2057 = vmatprep.subr.mxu0 0.0
    %2058 = vmatpush1.msra.mxu0 0.0
    %2059 = vmatprep.subr.mxu0 0.0
    %2060 = vmatpush1.msra.mxu0 0.0
    %2061 = vmatprep.subr.mxu0 0.0
    %2062 = vmatpush1.msra.mxu0 0.0
    %2063 = vmatprep.subr.mxu0 0.0
    %2064 = vmatpush1.msra.mxu0 0.0
    %2065 = vmatprep.subr.mxu0 0.0
    %2066 = vmatpush1.msra.mxu0 0.0
    %2067 = vmatprep.subr.mxu0 0.0
    %2068 = vmatpush1.msra.mxu0 0.0
    %2069 = vmatprep.subr.mxu0 0.0
    %2070 = vmatpush1.msra.mxu0 0.0
    %2071 = vmatprep.subr.mxu0 0.0
    %2072 = vmatpush1.msra.mxu0 0.0
    %2073 = vmatprep.subr.mxu0 0.0
    %2074 = vmatpush1.msra.mxu0 0.0
    %2075 = vmatprep.subr.mxu0 0.0
    %2076 = vmatpush1.msra.mxu0 0.0
    %2077 = vmatprep.subr.mxu0 0.0
    %2078 = vmatpush1.msra.mxu0 0.0
    %2079 = vmatprep.subr.mxu0 0.0
    %2080 = vmatpush1.msra.mxu0 0.0
    %2081 = vmatprep.subr.mxu0 0.0
    %2082 = vmatpush1.msra.mxu0 0.0
    %2083 = vmatprep.subr.mxu0 0.0
    %2084 = vmatpush1.msra.mxu0 0.0
    %2085 = vmatprep.subr.mxu0 0.0
    %2086 = vmatpush1.msra.mxu0 0.0
    %2087 = vmatprep.subr.mxu0 0.0
    %2088 = vmatpush1.msra.mxu0 0.0
    %2089 = vmatprep.subr.mxu0 0.0
    %2090 = vmatpush1.msra.mxu0 0.0
    %2091 = vmatprep.subr.mxu0 0.0
    %2092 = vmatpush1.msra.mxu0 0.0
    %2093 = vmatprep.subr.mxu0 0.0
    %2094 = vmatpush1.msra.mxu0 0.0
    %2095 = vmatprep.subr.mxu0 0.0
    %2096 = vmatpush1.msra.mxu0 0.0
    %2097 = vmatprep.subr.mxu0 0.0
    %2098 = vmatpush1.msra.mxu0 0.0
    %2099 = vmatprep.subr.mxu0 0.0
    %2100 = vmatpush1.msra.mxu0 0.0
    %2101 = vmatprep.subr.mxu0 0.0
    %2102 = vmatpush1.msra.mxu0 0.0
    %2103 = vmatprep.subr.mxu0 0.0
    %2104 = vmatpush1.msra.mxu0 0.0
    %2105 = vmatprep.subr.mxu0 0.0
    %2106 = vmatpush1.msra.mxu0 0.0
    %2107 = vmatprep.subr.mxu0 0.0
    %2108 = vmatpush1.msra.mxu0 0.0
    %2109 = vmatprep.subr.mxu0 0.0
    %2110 = vmatpush1.msra.mxu0 0.0
    %2111 = vmatprep.subr.mxu0 0.0
    %2112 = vmatpush1.msra.mxu0 0.0
    %2113 = vmatprep.subr.mxu0 0.0
    %2114 = vmatpush1.msra.mxu0 0.0
    %2115 = vmatprep.subr.mxu0 0.0
    %2116 = vmatpush1.msra.mxu0 0.0
    %2117 = vmatprep.subr.mxu0 0.0
    %2118 = vmatpush1.msra.mxu0 0.0
    %2119 = vmatprep.mubr.f32.mxu0 0.0
    %2120 = vmatmul.mubr.f32.gmra.mrb[0].mxu0 %v1976
    %v2121 = vpop.f32.mrb[0].mxu0
    %v2122 = vadd.f32 0.0, %v2121
    %v2123 = vpop.f32.mrb[0].mxu0
    %2124 = vdwg.mxu0
    %v2125 = vadd.f32 %v1959, %v2051
    %v2126 = vadd.f32 %v1960, %v2053
    %v2127 = vadd.f32 %v1961, %v2122
    %2128 = vst [vmem:[%s1618] sm:$0xff] %v2125
    %2129 = vst [vmem:[%s1618 + $0x8] sm:$0xff] %v2126
    %2130 = vst.msk [vmem:[%s1618 + $0x10] sm:$0xff] %vm34, %v2127
    %v2131 = vld [vmem:[%s1614] sm:$0xff]
    %v2132 = vld [vmem:[%s1614 + $0x8] sm:$0xf]
    %v2133 = vld [vmem:[%s1] sm:$0xff]
    %v2134 = vld [vmem:[%s1618] sm:$0xff]
    %v2135 = vld [vmem:[%s1618 + $0x8] sm:$0xff]
    %v2136 = vld [vmem:[%s1618 + $0x10] sm:$0xff]
    %2138 = vrot.lane.b32.xlu0 %v2133, 116
    %v2139 = vpop.permute.xlu0 %2138
    %v2142 = vcombine.high %v2131, %v2131
    %2143 = vrot.lane.b32.xlu0 %v2131, 110
    %v2144 = vpop.permute.xlu0 %2143
    %2145 = vrot.lane.b32.xlu0 %v2142, 110
    %v2146 = vpop.permute.xlu0 %2145
    %2147 = vrot.lane.b32.xlu0 %v2132, 110
    %v2148 = vpop.permute.xlu0 %2147
    %v2149 = vsel %vm576, %v2144, %v2146
    %v2150 = vsel %vm576, %v2146, %v2148
    %v2151 = vsel %vm48, %v2139, 0
    %v2153 = vsel %vm52, %v2149, 0
    %v2155 = vsel %vm52, %v2150, 0
    %v2157 = vsel %vm52, %v2148, 0
    %2159 = vmatprep.subr.mxu0 %v2155
    %2160 = vmatpush1.msra.mxu0 %v2153
    %2161 = vmatprep.subr.mxu0 0.0
    %2162 = vmatpush1.msra.mxu0 0.0
    %2163 = vmatprep.subr.mxu0 0.0
    %2164 = vmatpush1.msra.mxu0 0.0
    %2165 = vmatprep.subr.mxu0 0.0
    %2166 = vmatpush1.msra.mxu0 0.0
    %2167 = vmatprep.subr.mxu0 0.0
    %2168 = vmatpush1.msra.mxu0 0.0
    %2169 = vmatprep.subr.mxu0 0.0
    %2170 = vmatpush1.msra.mxu0 0.0
    %2171 = vmatprep.subr.mxu0 0.0
    %2172 = vmatpush1.msra.mxu0 0.0
    %2173 = vmatprep.subr.mxu0 0.0
    %2174 = vmatpush1.msra.mxu0 0.0
    %2175 = vmatprep.subr.mxu0 0.0
    %2176 = vmatpush1.msra.mxu0 0.0
    %2177 = vmatprep.subr.mxu0 0.0
    %2178 = vmatpush1.msra.mxu0 0.0
    %2179 = vmatprep.subr.mxu0 0.0
    %2180 = vmatpush1.msra.mxu0 0.0
    %2181 = vmatprep.subr.mxu0 0.0
    %2182 = vmatpush1.msra.mxu0 0.0
    %2183 = vmatprep.subr.mxu0 0.0
    %2184 = vmatpush1.msra.mxu0 0.0
    %2185 = vmatprep.subr.mxu0 0.0
    %2186 = vmatpush1.msra.mxu0 0.0
    %2187 = vmatprep.subr.mxu0 0.0
    %2188 = vmatpush1.msra.mxu0 0.0
    %2189 = vmatprep.subr.mxu0 0.0
    %2190 = vmatpush1.msra.mxu0 0.0
    %2191 = vmatprep.subr.mxu0 0.0
    %2192 = vmatpush1.msra.mxu0 0.0
    %2193 = vmatprep.subr.mxu0 0.0
    %2194 = vmatpush1.msra.mxu0 0.0
    %2195 = vmatprep.subr.mxu0 0.0
    %2196 = vmatpush1.msra.mxu0 0.0
    %2197 = vmatprep.subr.mxu0 0.0
    %2198 = vmatpush1.msra.mxu0 0.0
    %2199 = vmatprep.subr.mxu0 0.0
    %2200 = vmatpush1.msra.mxu0 0.0
    %2201 = vmatprep.subr.mxu0 0.0
    %2202 = vmatpush1.msra.mxu0 0.0
    %2203 = vmatprep.subr.mxu0 0.0
    %2204 = vmatpush1.msra.mxu0 0.0
    %2205 = vmatprep.subr.mxu0 0.0
    %2206 = vmatpush1.msra.mxu0 0.0
    %2207 = vmatprep.subr.mxu0 0.0
    %2208 = vmatpush1.msra.mxu0 0.0
    %2209 = vmatprep.subr.mxu0 0.0
    %2210 = vmatpush1.msra.mxu0 0.0
    %2211 = vmatprep.subr.mxu0 0.0
    %2212 = vmatpush1.msra.mxu0 0.0
    %2213 = vmatprep.subr.mxu0 0.0
    %2214 = vmatpush1.msra.mxu0 0.0
    %2215 = vmatprep.subr.mxu0 0.0
    %2216 = vmatpush1.msra.mxu0 0.0
    %2217 = vmatprep.subr.mxu0 0.0
    %2218 = vmatpush1.msra.mxu0 0.0
    %2219 = vmatprep.subr.mxu0 0.0
    %2220 = vmatpush1.msra.mxu0 0.0
    %2221 = vmatprep.subr.mxu0 0.0
    %2222 = vmatpush1.msra.mxu0 0.0
    %2223 = vmatprep.mubr.f32.mxu0 0.0
    %2224 = vmatmul.mubr.f32.gmra.mrb[0].mxu0 %v2151
    %v2225 = vpop.f32.mrb[0].mxu0
    %v2226 = vadd.f32 0.0, %v2225
    %v2227 = vpop.f32.mrb[0].mxu0
    %v2228 = vadd.f32 0.0, %v2227
    %2229 = vdwg.mxu0
    %2230 = vmatprep.subr.mxu0 0.0
    %2231 = vmatpush1.msra.mxu0 %v2157
    %2232 = vmatprep.subr.mxu0 0.0
    %2233 = vmatpush1.msra.mxu0 0.0
    %2234 = vmatprep.subr.mxu0 0.0
    %2235 = vmatpush1.msra.mxu0 0.0
    %2236 = vmatprep.subr.mxu0 0.0
    %2237 = vmatpush1.msra.mxu0 0.0
    %2238 = vmatprep.subr.mxu0 0.0
    %2239 = vmatpush1.msra.mxu0 0.0
    %2240 = vmatprep.subr.mxu0 0.0
    %2241 = vmatpush1.msra.mxu0 0.0
    %2242 = vmatprep.subr.mxu0 0.0
    %2243 = vmatpush1.msra.mxu0 0.0
    %2244 = vmatprep.subr.mxu0 0.0
    %2245 = vmatpush1.msra.mxu0 0.0
    %2246 = vmatprep.subr.mxu0 0.0
    %2247 = vmatpush1.msra.mxu0 0.0
    %2248 = vmatprep.subr.mxu0 0.0
    %2249 = vmatpush1.msra.mxu0 0.0
    %2250 = vmatprep.subr.mxu0 0.0
    %2251 = vmatpush1.msra.mxu0 0.0
    %2252 = vmatprep.subr.mxu0 0.0
    %2253 = vmatpush1.msra.mxu0 0.0
    %2254 = vmatprep.subr.mxu0 0.0
    %2255 = vmatpush1.msra.mxu0 0.0
    %2256 = vmatprep.subr.mxu0 0.0
    %2257 = vmatpush1.msra.mxu0 0.0
    %2258 = vmatprep.subr.mxu0 0.0
    %2259 = vmatpush1.msra.mxu0 0.0
    %2260 = vmatprep.subr.mxu0 0.0
    %2261 = vmatpush1.msra.mxu0 0.0
    %2262 = vmatprep.subr.mxu0 0.0
    %2263 = vmatpush1.msra.mxu0 0.0
    %2264 = vmatprep.subr.mxu0 0.0
    %2265 = vmatpush1.msra.mxu0 0.0
    %2266 = vmatprep.subr.mxu0 0.0
    %2267 = vmatpush1.msra.mxu0 0.0
    %2268 = vmatprep.subr.mxu0 0.0
    %2269 = vmatpush1.msra.mxu0 0.0
    %2270 = vmatprep.subr.mxu0 0.0
    %2271 = vmatpush1.msra.mxu0 0.0
    %2272 = vmatprep.subr.mxu0 0.0
    %2273 = vmatpush1.msra.mxu0 0.0
    %2274 = vmatprep.subr.mxu0 0.0
    %2275 = vmatpush1.msra.mxu0 0.0
    %2276 = vmatprep.subr.mxu0 0.0
    %2277 = vmatpush1.msra.mxu0 0.0
    %2278 = vmatprep.subr.mxu0 0.0
    %2279 = vmatpush1.msra.mxu0 0.0
    %2280 = vmatprep.subr.mxu0 0.0
    %2281 = vmatpush1.msra.mxu0 0.0
    %2282 = vmatprep.subr.mxu0 0.0
    %2283 = vmatpush1.msra.mxu0 0.0
    %2284 = vmatprep.subr.mxu0 0.0
    %2285 = vmatpush1.msra.mxu0 0.0
    %2286 = vmatprep.subr.mxu0 0.0
    %2287 = vmatpush1.msra.mxu0 0.0
    %2288 = vmatprep.subr.mxu0 0.0
    %2289 = vmatpush1.msra.mxu0 0.0
    %2290 = vmatprep.subr.mxu0 0.0
    %2291 = vmatpush1.msra.mxu0 0.0
    %2292 = vmatprep.subr.mxu0 0.0
    %2293 = vmatpush1.msra.mxu0 0.0
    %2294 = vmatprep.mubr.f32.mxu0 0.0
    %2295 = vmatmul.mubr.f32.gmra.mrb[0].mxu0 %v2151
    %v2296 = vpop.f32.mrb[0].mxu0
    %v2297 = vadd.f32 0.0, %v2296
    %v2298 = vpop.f32.mrb[0].mxu0
    %2299 = vdwg.mxu0
    %v2300 = vadd.f32 %v2134, %v2226
    %v2301 = vadd.f32 %v2135, %v2228
    %v2302 = vadd.f32 %v2136, %v2297
    %2303 = vst [vmem:[%s1618] sm:$0xff] %v2300
    %2304 = vst [vmem:[%s1618 + $0x8] sm:$0xff] %v2301
    %2305 = vst.msk [vmem:[%s1618 + $0x10] sm:$0xff] %vm34, %v2302
    %v2306 = vld [vmem:[%s1614] sm:$0xff]
    %v2307 = vld [vmem:[%s1614 + $0x8] sm:$0xf]
    %v2308 = vld [vmem:[%s1] sm:$0xff]
    %v2309 = vld [vmem:[%s1618] sm:$0xff]
    %v2310 = vld [vmem:[%s1618 + $0x8] sm:$0xff]
    %v2311 = vld [vmem:[%s1618 + $0x10] sm:$0xff]
    %2313 = vrot.lane.b32.xlu0 %v2308, 112
    %v2314 = vpop.permute.xlu0 %2313
    %v2317 = vcombine.high %v2306, %v2306
    %2318 = vrot.lane.b32.xlu0 %v2306, 109
    %v2319 = vpop.permute.xlu0 %2318
    %2320 = vrot.lane.b32.xlu0 %v2317, 109
    %v2321 = vpop.permute.xlu0 %2320
    %2322 = vrot.lane.b32.xlu0 %v2307, 109
    %v2323 = vpop.permute.xlu0 %2322
    %v2324 = vsel %vm752, %v2319, %v2321
    %v2325 = vsel %vm752, %v2321, %v2323
    %v2326 = vsel %vm48, %v2314, 0
    %v2328 = vsel %vm52, %v2324, 0
    %v2330 = vsel %vm52, %v2325, 0
    %v2332 = vsel %vm52, %v2323, 0
    %2334 = vmatprep.subr.mxu0 %v2330
    %2335 = vmatpush1.msra.mxu0 %v2328
    %2336 = vmatprep.subr.mxu0 0.0
    %2337 = vmatpush1.msra.mxu0 0.0
    %2338 = vmatprep.subr.mxu0 0.0
    %2339 = vmatpush1.msra.mxu0 0.0
    %2340 = vmatprep.subr.mxu0 0.0
    %2341 = vmatpush1.msra.mxu0 0.0
    %2342 = vmatprep.subr.mxu0 0.0
    %2343 = vmatpush1.msra.mxu0 0.0
    %2344 = vmatprep.subr.mxu0 0.0
    %2345 = vmatpush1.msra.mxu0 0.0
    %2346 = vmatprep.subr.mxu0 0.0
    %2347 = vmatpush1.msra.mxu0 0.0
    %2348 = vmatprep.subr.mxu0 0.0
    %2349 = vmatpush1.msra.mxu0 0.0
    %2350 = vmatprep.subr.mxu0 0.0
    %2351 = vmatpush1.msra.mxu0 0.0
    %2352 = vmatprep.subr.mxu0 0.0
    %2353 = vmatpush1.msra.mxu0 0.0
    %2354 = vmatprep.subr.mxu0 0.0
    %2355 = vmatpush1.msra.mxu0 0.0
    %2356 = vmatprep.subr.mxu0 0.0
    %2357 = vmatpush1.msra.mxu0 0.0
    %2358 = vmatprep.subr.mxu0 0.0
    %2359 = vmatpush1.msra.mxu0 0.0
    %2360 = vmatprep.subr.mxu0 0.0
    %2361 = vmatpush1.msra.mxu0 0.0
    %2362 = vmatprep.subr.mxu0 0.0
    %2363 = vmatpush1.msra.mxu0 0.0
    %2364 = vmatprep.subr.mxu0 0.0
    %2365 = vmatpush1.msra.mxu0 0.0
    %2366 = vmatprep.subr.mxu0 0.0
    %2367 = vmatpush1.msra.mxu0 0.0
    %2368 = vmatprep.subr.mxu0 0.0
    %2369 = vmatpush1.msra.mxu0 0.0
    %2370 = vmatprep.subr.mxu0 0.0
    %2371 = vmatpush1.msra.mxu0 0.0
    %2372 = vmatprep.subr.mxu0 0.0
    %2373 = vmatpush1.msra.mxu0 0.0
    %2374 = vmatprep.subr.mxu0 0.0
    %2375 = vmatpush1.msra.mxu0 0.0
    %2376 = vmatprep.subr.mxu0 0.0
    %2377 = vmatpush1.msra.mxu0 0.0
    %2378 = vmatprep.subr.mxu0 0.0
    %2379 = vmatpush1.msra.mxu0 0.0
    %2380 = vmatprep.subr.mxu0 0.0
    %2381 = vmatpush1.msra.mxu0 0.0
    %2382 = vmatprep.subr.mxu0 0.0
    %2383 = vmatpush1.msra.mxu0 0.0
    %2384 = vmatprep.subr.mxu0 0.0
    %2385 = vmatpush1.msra.mxu0 0.0
    %2386 = vmatprep.subr.mxu0 0.0
    %2387 = vmatpush1.msra.mxu0 0.0
    %2388 = vmatprep.subr.mxu0 0.0
    %2389 = vmatpush1.msra.mxu0 0.0
    %2390 = vmatprep.subr.mxu0 0.0
    %2391 = vmatpush1.msra.mxu0 0.0
    %2392 = vmatprep.subr.mxu0 0.0
    %2393 = vmatpush1.msra.mxu0 0.0
    %2394 = vmatprep.subr.mxu0 0.0
    %2395 = vmatpush1.msra.mxu0 0.0
    %2396 = vmatprep.subr.mxu0 0.0
    %2397 = vmatpush1.msra.mxu0 0.0
    %2398 = vmatprep.mubr.f32.mxu0 0.0
    %2399 = vmatmul.mubr.f32.gmra.mrb[0].mxu0 %v2326
    %v2400 = vpop.f32.mrb[0].mxu0
    %v2401 = vadd.f32 0.0, %v2400
    %v2402 = vpop.f32.mrb[0].mxu0
    %v2403 = vadd.f32 0.0, %v2402
    %2404 = vdwg.mxu0
    %2405 = vmatprep.subr.mxu0 0.0
    %2406 = vmatpush1.msra.mxu0 %v2332
    %2407 = vmatprep.subr.mxu0 0.0
    %2408 = vmatpush1.msra.mxu0 0.0
    %2409 = vmatprep.subr.mxu0 0.0
    %2410 = vmatpush1.msra.mxu0 0.0
    %2411 = vmatprep.subr.mxu0 0.0
    %2412 = vmatpush1.msra.mxu0 0.0
    %2413 = vmatprep.subr.mxu0 0.0
    %2414 = vmatpush1.msra.mxu0 0.0
    %2415 = vmatprep.subr.mxu0 0.0
    %2416 = vmatpush1.msra.mxu0 0.0
    %2417 = vmatprep.subr.mxu0 0.0
    %2418 = vmatpush1.msra.mxu0 0.0
    %2419 = vmatprep.subr.mxu0 0.0
    %2420 = vmatpush1.msra.mxu0 0.0
    %2421 = vmatprep.subr.mxu0 0.0
    %2422 = vmatpush1.msra.mxu0 0.0
    %2423 = vmatprep.subr.mxu0 0.0
    %2424 = vmatpush1.msra.mxu0 0.0
    %2425 = vmatprep.subr.mxu0 0.0
    %2426 = vmatpush1.msra.mxu0 0.0
    %2427 = vmatprep.subr.mxu0 0.0
    %2428 = vmatpush1.msra.mxu0 0.0
    %2429 = vmatprep.subr.mxu0 0.0
    %2430 = vmatpush1.msra.mxu0 0.0
    %2431 = vmatprep.subr.mxu0 0.0
    %2432 = vmatpush1.msra.mxu0 0.0
    %2433 = vmatprep.subr.mxu0 0.0
    %2434 = vmatpush1.msra.mxu0 0.0
    %2435 = vmatprep.subr.mxu0 0.0
    %2436 = vmatpush1.msra.mxu0 0.0
    %2437 = vmatprep.subr.mxu0 0.0
    %2438 = vmatpush1.msra.mxu0 0.0
    %2439 = vmatprep.subr.mxu0 0.0
    %2440 = vmatpush1.msra.mxu0 0.0
    %2441 = vmatprep.subr.mxu0 0.0
    %2442 = vmatpush1.msra.mxu0 0.0
    %2443 = vmatprep.subr.mxu0 0.0
    %2444 = vmatpush1.msra.mxu0 0.0
    %2445 = vmatprep.subr.mxu0 0.0
    %2446 = vmatpush1.msra.mxu0 0.0
    %2447 = vmatprep.subr.mxu0 0.0
    %2448 = vmatpush1.msra.mxu0 0.0
    %2449 = vmatprep.subr.mxu0 0.0
    %2450 = vmatpush1.msra.mxu0 0.0
    %2451 = vmatprep.subr.mxu0 0.0
    %2452 = vmatpush1.msra.mxu0 0.0
    %2453 = vmatprep.subr.mxu0 0.0
    %2454 = vmatpush1.msra.mxu0 0.0
    %2455 = vmatprep.subr.mxu0 0.0
    %2456 = vmatpush1.msra.mxu0 0.0
    %2457 = vmatprep.subr.mxu0 0.0
    %2458 = vmatpush1.msra.mxu0 0.0
    %2459 = vmatprep.subr.mxu0 0.0
    %2460 = vmatpush1.msra.mxu0 0.0
    %2461 = vmatprep.subr.mxu0 0.0
    %2462 = vmatpush1.msra.mxu0 0.0
    %2463 = vmatprep.subr.mxu0 0.0
    %2464 = vmatpush1.msra.mxu0 0.0
    %2465 = vmatprep.subr.mxu0 0.0
    %2466 = vmatpush1.msra.mxu0 0.0
    %2467 = vmatprep.subr.mxu0 0.0
    %2468 = vmatpush1.msra.mxu0 0.0
    %2469 = vmatprep.mubr.f32.mxu0 0.0
    %2470 = vmatmul.mubr.f32.gmra.mrb[0].mxu0 %v2326
    %v2471 = vpop.f32.mrb[0].mxu0
    %v2472 = vadd.f32 0.0, %v2471
    %v2473 = vpop.f32.mrb[0].mxu0
    %2474 = vdwg.mxu0
    %v2475 = vadd.f32 %v2309, %v2401
    %v2476 = vadd.f32 %v2310, %v2403
    %v2477 = vadd.f32 %v2311, %v2472
    %2478 = vst [vmem:[%s1618] sm:$0xff] %v2475
    %2479 = vst [vmem:[%s1618 + $0x8] sm:$0xff] %v2476
    %2480 = vst.msk [vmem:[%s1618 + $0x10] sm:$0xff] %vm34, %v2477
    %v2481 = vld [vmem:[%s1614] sm:$0xff]
    %v2482 = vld [vmem:[%s1614 + $0x8] sm:$0xf]
    %v2483 = vld [vmem:[%s1] sm:$0xff]
    %v2484 = vld [vmem:[%s1618] sm:$0xff]
    %v2485 = vld [vmem:[%s1618 + $0x8] sm:$0xff]
    %v2486 = vld [vmem:[%s1618 + $0x10] sm:$0xff]
    %2488 = vrot.lane.b32.xlu0 %v2483, 108
    %v2489 = vpop.permute.xlu0 %2488
    %v2492 = vcombine.high %v2481, %v2481
    %2493 = vrot.lane.b32.xlu0 %v2481, 108
    %v2494 = vpop.permute.xlu0 %2493
    %2495 = vrot.lane.b32.xlu0 %v2492, 108
    %v2496 = vpop.permute.xlu0 %2495
    %2497 = vrot.lane.b32.xlu0 %v2482, 108
    %v2498 = vpop.permute.xlu0 %2497
    %v2499 = vsel %vm928, %v2494, %v2496
    %v2500 = vsel %vm928, %v2496, %v2498
    %v2501 = vsel %vm48, %v2489, 0
    %v2503 = vsel %vm52, %v2499, 0
    %v2505 = vsel %vm52, %v2500, 0
    %v2507 = vsel %vm52, %v2498, 0
    %2509 = vmatprep.subr.mxu0 %v2505
    %2510 = vmatpush1.msra.mxu0 %v2503
    %2511 = vmatprep.subr.mxu0 0.0
    %2512 = vmatpush1.msra.mxu0 0.0
    %2513 = vmatprep.subr.mxu0 0.0
    %2514 = vmatpush1.msra.mxu0 0.0
    %2515 = vmatprep.subr.mxu0 0.0
    %2516 = vmatpush1.msra.mxu0 0.0
    %2517 = vmatprep.subr.mxu0 0.0
    %2518 = vmatpush1.msra.mxu0 0.0
    %2519 = vmatprep.subr.mxu0 0.0
    %2520 = vmatpush1.msra.mxu0 0.0
    %2521 = vmatprep.subr.mxu0 0.0
    %2522 = vmatpush1.msra.mxu0 0.0
    %2523 = vmatprep.subr.mxu0 0.0
    %2524 = vmatpush1.msra.mxu0 0.0
    %2525 = vmatprep.subr.mxu0 0.0
    %2526 = vmatpush1.msra.mxu0 0.0
    %2527 = vmatprep.subr.mxu0 0.0
    %2528 = vmatpush1.msra.mxu0 0.0
    %2529 = vmatprep.subr.mxu0 0.0
    %2530 = vmatpush1.msra.mxu0 0.0
    %2531 = vmatprep.subr.mxu0 0.0
    %2532 = vmatpush1.msra.mxu0 0.0
    %2533 = vmatprep.subr.mxu0 0.0
    %2534 = vmatpush1.msra.mxu0 0.0
    %2535 = vmatprep.subr.mxu0 0.0
    %2536 = vmatpush1.msra.mxu0 0.0
    %2537 = vmatprep.subr.mxu0 0.0
    %2538 = vmatpush1.msra.mxu0 0.0
    %2539 = vmatprep.subr.mxu0 0.0
    %2540 = vmatpush1.msra.mxu0 0.0
    %2541 = vmatprep.subr.mxu0 0.0
    %2542 = vmatpush1.msra.mxu0 0.0
    %2543 = vmatprep.subr.mxu0 0.0
    %2544 = vmatpush1.msra.mxu0 0.0
    %2545 = vmatprep.subr.mxu0 0.0
    %2546 = vmatpush1.msra.mxu0 0.0
    %2547 = vmatprep.subr.mxu0 0.0
    %2548 = vmatpush1.msra.mxu0 0.0
    %2549 = vmatprep.subr.mxu0 0.0
    %2550 = vmatpush1.msra.mxu0 0.0
    %2551 = vmatprep.subr.mxu0 0.0
    %2552 = vmatpush1.msra.mxu0 0.0
    %2553 = vmatprep.subr.mxu0 0.0
    %2554 = vmatpush1.msra.mxu0 0.0
    %2555 = vmatprep.subr.mxu0 0.0
    %2556 = vmatpush1.msra.mxu0 0.0
    %2557 = vmatprep.subr.mxu0 0.0
    %2558 = vmatpush1.msra.mxu0 0.0
    %2559 = vmatprep.subr.mxu0 0.0
    %2560 = vmatpush1.msra.mxu0 0.0
    %2561 = vmatprep.subr.mxu0 0.0
    %2562 = vmatpush1.msra.mxu0 0.0
    %2563 = vmatprep.subr.mxu0 0.0
    %2564 = vmatpush1.msra.mxu0 0.0
    %2565 = vmatprep.subr.mxu0 0.0
    %2566 = vmatpush1.msra.mxu0 0.0
    %2567 = vmatprep.subr.mxu0 0.0
    %2568 = vmatpush1.msra.mxu0 0.0
    %2569 = vmatprep.subr.mxu0 0.0
    %2570 = vmatpush1.msra.mxu0 0.0
    %2571 = vmatprep.subr.mxu0 0.0
    %2572 = vmatpush1.msra.mxu0 0.0
    %2573 = vmatprep.mubr.f32.mxu0 0.0
    %2574 = vmatmul.mubr.f32.gmra.mrb[0].mxu0 %v2501
    %v2575 = vpop.f32.mrb[0].mxu0
    %v2576 = vadd.f32 0.0, %v2575
    %v2577 = vpop.f32.mrb[0].mxu0
    %v2578 = vadd.f32 0.0, %v2577
    %2579 = vdwg.mxu0
    %2580 = vmatprep.subr.mxu0 0.0
    %2581 = vmatpush1.msra.mxu0 %v2507
    %2582 = vmatprep.subr.mxu0 0.0
    %2583 = vmatpush1.msra.mxu0 0.0
    %2584 = vmatprep.subr.mxu0 0.0
    %2585 = vmatpush1.msra.mxu0 0.0
    %2586 = vmatprep.subr.mxu0 0.0
    %2587 = vmatpush1.msra.mxu0 0.0
    %2588 = vmatprep.subr.mxu0 0.0
    %2589 = vmatpush1.msra.mxu0 0.0
    %2590 = vmatprep.subr.mxu0 0.0
    %2591 = vmatpush1.msra.mxu0 0.0
    %2592 = vmatprep.subr.mxu0 0.0
    %2593 = vmatpush1.msra.mxu0 0.0
    %2594 = vmatprep.subr.mxu0 0.0
    %2595 = vmatpush1.msra.mxu0 0.0
    %2596 = vmatprep.subr.mxu0 0.0
    %2597 = vmatpush1.msra.mxu0 0.0
    %2598 = vmatprep.subr.mxu0 0.0
    %2599 = vmatpush1.msra.mxu0 0.0
    %2600 = vmatprep.subr.mxu0 0.0
    %2601 = vmatpush1.msra.mxu0 0.0
    %2602 = vmatprep.subr.mxu0 0.0
    %2603 = vmatpush1.msra.mxu0 0.0
    %2604 = vmatprep.subr.mxu0 0.0
    %2605 = vmatpush1.msra.mxu0 0.0
    %2606 = vmatprep.subr.mxu0 0.0
    %2607 = vmatpush1.msra.mxu0 0.0
    %2608 = vmatprep.subr.mxu0 0.0
    %2609 = vmatpush1.msra.mxu0 0.0
    %2610 = vmatprep.subr.mxu0 0.0
    %2611 = vmatpush1.msra.mxu0 0.0
    %2612 = vmatprep.subr.mxu0 0.0
    %2613 = vmatpush1.msra.mxu0 0.0
    %2614 = vmatprep.subr.mxu0 0.0
    %2615 = vmatpush1.msra.mxu0 0.0
    %2616 = vmatprep.subr.mxu0 0.0
    %2617 = vmatpush1.msra.mxu0 0.0
    %2618 = vmatprep.subr.mxu0 0.0
    %2619 = vmatpush1.msra.mxu0 0.0
    %2620 = vmatprep.subr.mxu0 0.0
    %2621 = vmatpush1.msra.mxu0 0.0
    %2622 = vmatprep.subr.mxu0 0.0
    %2623 = vmatpush1.msra.mxu0 0.0
    %2624 = vmatprep.subr.mxu0 0.0
    %2625 = vmatpush1.msra.mxu0 0.0
    %2626 = vmatprep.subr.mxu0 0.0
    %2627 = vmatpush1.msra.mxu0 0.0
    %2628 = vmatprep.subr.mxu0 0.0
    %2629 = vmatpush1.msra.mxu0 0.0
    %2630 = vmatprep.subr.mxu0 0.0
    %2631 = vmatpush1.msra.mxu0 0.0
    %2632 = vmatprep.subr.mxu0 0.0
    %2633 = vmatpush1.msra.mxu0 0.0
    %2634 = vmatprep.subr.mxu0 0.0
    %2635 = vmatpush1.msra.mxu0 0.0
    %2636 = vmatprep.subr.mxu0 0.0
    %2637 = vmatpush1.msra.mxu0 0.0
    %2638 = vmatprep.subr.mxu0 0.0
    %2639 = vmatpush1.msra.mxu0 0.0
    %2640 = vmatprep.subr.mxu0 0.0
    %2641 = vmatpush1.msra.mxu0 0.0
    %2642 = vmatprep.subr.mxu0 0.0
    %2643 = vmatpush1.msra.mxu0 0.0
    %2644 = vmatprep.mubr.f32.mxu0 0.0
    %2645 = vmatmul.mubr.f32.gmra.mrb[0].mxu0 %v2501
    %v2646 = vpop.f32.mrb[0].mxu0
    %v2647 = vadd.f32 0.0, %v2646
    %v2648 = vpop.f32.mrb[0].mxu0
    %2649 = vdwg.mxu0
    %v2650 = vadd.f32 %v2484, %v2576
    %v2651 = vadd.f32 %v2485, %v2578
    %v2652 = vadd.f32 %v2486, %v2647
    %2653 = vst [vmem:[%s1618] sm:$0xff] %v2650
    %2654 = vst [vmem:[%s1618 + $0x8] sm:$0xff] %v2651
    %2655 = vst.msk [vmem:[%s1618 + $0x10] sm:$0xff] %vm34, %v2652
    %v2656 = vld [vmem:[%s1614] sm:$0xff]
    %v2657 = vld [vmem:[%s1614 + $0x8] sm:$0xf]
    %v2658 = vld [vmem:[%s1] sm:$0xff]
    %v2659 = vld [vmem:[%s1618] sm:$0xff]
    %v2660 = vld [vmem:[%s1618 + $0x8] sm:$0xff]
    %v2661 = vld [vmem:[%s1618 + $0x10] sm:$0xff]
    %2663 = vrot.lane.b32.xlu0 %v2658, 104
    %v2664 = vpop.permute.xlu0 %2663
    %v2667 = vcombine.high %v2656, %v2656
    %2668 = vrot.lane.b32.xlu0 %v2656, 92
    %v2669 = vpop.permute.xlu0 %2668
    %2670 = vrot.lane.b32.xlu0 %v2667, 92
    %v2671 = vpop.permute.xlu0 %2670
    %2672 = vrot.lane.b32.xlu0 %v2657, 92
    %v2673 = vpop.permute.xlu0 %2672
    %v2674 = vsel %vm1104, %v2669, %v2671
    %v2675 = vsel %vm1104, %v2671, %v2673
    %v2676 = vsel %vm48, %v2664, 0
    %v2678 = vsel %vm52, %v2674, 0
    %v2680 = vsel %vm52, %v2675, 0
    %v2682 = vsel %vm52, %v2673, 0
    %2684 = vmatprep.subr.mxu0 %v2680
    %2685 = vmatpush1.msra.mxu0 %v2678
    %2686 = vmatprep.subr.mxu0 0.0
    %2687 = vmatpush1.msra.mxu0 0.0
    %2688 = vmatprep.subr.mxu0 0.0
    %2689 = vmatpush1.msra.mxu0 0.0
    %2690 = vmatprep.subr.mxu0 0.0
    %2691 = vmatpush1.msra.mxu0 0.0
    %2692 = vmatprep.subr.mxu0 0.0
    %2693 = vmatpush1.msra.mxu0 0.0
    %2694 = vmatprep.subr.mxu0 0.0
    %2695 = vmatpush1.msra.mxu0 0.0
    %2696 = vmatprep.subr.mxu0 0.0
    %2697 = vmatpush1.msra.mxu0 0.0
    %2698 = vmatprep.subr.mxu0 0.0
    %2699 = vmatpush1.msra.mxu0 0.0
    %2700 = vmatprep.subr.mxu0 0.0
    %2701 = vmatpush1.msra.mxu0 0.0
    %2702 = vmatprep.subr.mxu0 0.0
    %2703 = vmatpush1.msra.mxu0 0.0
    %2704 = vmatprep.subr.mxu0 0.0
    %2705 = vmatpush1.msra.mxu0 0.0
    %2706 = vmatprep.subr.mxu0 0.0
    %2707 = vmatpush1.msra.mxu0 0.0
    %2708 = vmatprep.subr.mxu0 0.0
    %2709 = vmatpush1.msra.mxu0 0.0
    %2710 = vmatprep.subr.mxu0 0.0
    %2711 = vmatpush1.msra.mxu0 0.0
    %2712 = vmatprep.subr.mxu0 0.0
    %2713 = vmatpush1.msra.mxu0 0.0
    %2714 = vmatprep.subr.mxu0 0.0
    %2715 = vmatpush1.msra.mxu0 0.0
    %2716 = vmatprep.subr.mxu0 0.0
    %2717 = vmatpush1.msra.mxu0 0.0
    %2718 = vmatprep.subr.mxu0 0.0
    %2719 = vmatpush1.msra.mxu0 0.0
    %2720 = vmatprep.subr.mxu0 0.0
    %2721 = vmatpush1.msra.mxu0 0.0
    %2722 = vmatprep.subr.mxu0 0.0
    %2723 = vmatpush1.msra.mxu0 0.0
    %2724 = vmatprep.subr.mxu0 0.0
    %2725 = vmatpush1.msra.mxu0 0.0
    %2726 = vmatprep.subr.mxu0 0.0
    %2727 = vmatpush1.msra.mxu0 0.0
    %2728 = vmatprep.subr.mxu0 0.0
    %2729 = vmatpush1.msra.mxu0 0.0
    %2730 = vmatprep.subr.mxu0 0.0
    %2731 = vmatpush1.msra.mxu0 0.0
    %2732 = vmatprep.subr.mxu0 0.0
    %2733 = vmatpush1.msra.mxu0 0.0
    %2734 = vmatprep.subr.mxu0 0.0
    %2735 = vmatpush1.msra.mxu0 0.0
    %2736 = vmatprep.subr.mxu0 0.0
    %2737 = vmatpush1.msra.mxu0 0.0
    %2738 = vmatprep.subr.mxu0 0.0
    %2739 = vmatpush1.msra.mxu0 0.0
    %2740 = vmatprep.subr.mxu0 0.0
    %2741 = vmatpush1.msra.mxu0 0.0
    %2742 = vmatprep.subr.mxu0 0.0
    %2743 = vmatpush1.msra.mxu0 0.0
    %2744 = vmatprep.subr.mxu0 0.0
    %2745 = vmatpush1.msra.mxu0 0.0
    %2746 = vmatprep.subr.mxu0 0.0
    %2747 = vmatpush1.msra.mxu0 0.0
    %2748 = vmatprep.mubr.f32.mxu0 0.0
    %2749 = vmatmul.mubr.f32.gmra.mrb[0].mxu0 %v2676
    %v2750 = vpop.f32.mrb[0].mxu0
    %v2751 = vadd.f32 0.0, %v2750
    %v2752 = vpop.f32.mrb[0].mxu0
    %v2753 = vadd.f32 0.0, %v2752
    %2754 = vdwg.mxu0
    %2755 = vmatprep.subr.mxu0 0.0
    %2756 = vmatpush1.msra.mxu0 %v2682
    %2757 = vmatprep.subr.mxu0 0.0
    %2758 = vmatpush1.msra.mxu0 0.0
    %2759 = vmatprep.subr.mxu0 0.0
    %2760 = vmatpush1.msra.mxu0 0.0
    %2761 = vmatprep.subr.mxu0 0.0
    %2762 = vmatpush1.msra.mxu0 0.0
    %2763 = vmatprep.subr.mxu0 0.0
    %2764 = vmatpush1.msra.mxu0 0.0
    %2765 = vmatprep.subr.mxu0 0.0
    %2766 = vmatpush1.msra.mxu0 0.0
    %2767 = vmatprep.subr.mxu0 0.0
    %2768 = vmatpush1.msra.mxu0 0.0
    %2769 = vmatprep.subr.mxu0 0.0
    %2770 = vmatpush1.msra.mxu0 0.0
    %2771 = vmatprep.subr.mxu0 0.0
    %2772 = vmatpush1.msra.mxu0 0.0
    %2773 = vmatprep.subr.mxu0 0.0
    %2774 = vmatpush1.msra.mxu0 0.0
    %2775 = vmatprep.subr.mxu0 0.0
    %2776 = vmatpush1.msra.mxu0 0.0
    %2777 = vmatprep.subr.mxu0 0.0
    %2778 = vmatpush1.msra.mxu0 0.0
    %2779 = vmatprep.subr.mxu0 0.0
    %2780 = vmatpush1.msra.mxu0 0.0
    %2781 = vmatprep.subr.mxu0 0.0
    %2782 = vmatpush1.msra.mxu0 0.0
    %2783 = vmatprep.subr.mxu0 0.0
    %2784 = vmatpush1.msra.mxu0 0.0
    %2785 = vmatprep.subr.mxu0 0.0
    %2786 = vmatpush1.msra.mxu0 0.0
    %2787 = vmatprep.subr.mxu0 0.0
    %2788 = vmatpush1.msra.mxu0 0.0
    %2789 = vmatprep.subr.mxu0 0.0
    %2790 = vmatpush1.msra.mxu0 0.0
    %2791 = vmatprep.subr.mxu0 0.0
    %2792 = vmatpush1.msra.mxu0 0.0
    %2793 = vmatprep.subr.mxu0 0.0
    %2794 = vmatpush1.msra.mxu0 0.0
    %2795 = vmatprep.subr.mxu0 0.0
    %2796 = vmatpush1.msra.mxu0 0.0
    %2797 = vmatprep.subr.mxu0 0.0
    %2798 = vmatpush1.msra.mxu0 0.0
    %2799 = vmatprep.subr.mxu0 0.0
    %2800 = vmatpush1.msra.mxu0 0.0
    %2801 = vmatprep.subr.mxu0 0.0
    %2802 = vmatpush1.msra.mxu0 0.0
    %2803 = vmatprep.subr.mxu0 0.0
    %2804 = vmatpush1.msra.mxu0 0.0
    %2805 = vmatprep.subr.mxu0 0.0
    %2806 = vmatpush1.msra.mxu0 0.0
    %2807 = vmatprep.subr.mxu0 0.0
    %2808 = vmatpush1.msra.mxu0 0.0
    %2809 = vmatprep.subr.mxu0 0.0
    %2810 = vmatpush1.msra.mxu0 0.0
    %2811 = vmatprep.subr.mxu0 0.0
    %2812 = vmatpush1.msra.mxu0 0.0
    %2813 = vmatprep.subr.mxu0 0.0
    %2814 = vmatpush1.msra.mxu0 0.0
    %2815 = vmatprep.subr.mxu0 0.0
    %2816 = vmatpush1.msra.mxu0 0.0
    %2817 = vmatprep.subr.mxu0 0.0
    %2818 = vmatpush1.msra.mxu0 0.0
    %2819 = vmatprep.mubr.f32.mxu0 0.0
    %2820 = vmatmul.mubr.f32.gmra.mrb[0].mxu0 %v2676
    %v2821 = vpop.f32.mrb[0].mxu0
    %v2822 = vadd.f32 0.0, %v2821
    %v2823 = vpop.f32.mrb[0].mxu0
    %2824 = vdwg.mxu0
    %v2825 = vadd.f32 %v2659, %v2751
    %v2826 = vadd.f32 %v2660, %v2753
    %v2827 = vadd.f32 %v2661, %v2822
    %2828 = vst [vmem:[%s1618] sm:$0xff] %v2825
    %2829 = vst [vmem:[%s1618 + $0x8] sm:$0xff] %v2826
    %2830 = vst.msk [vmem:[%s1618 + $0x10] sm:$0xff] %vm34, %v2827
    %v2831 = vld [vmem:[%s1614] sm:$0xff]
    %v2832 = vld [vmem:[%s1614 + $0x8] sm:$0xf]
    %v2833 = vld [vmem:[%s1] sm:$0xff]
    %v2834 = vld [vmem:[%s1618] sm:$0xff]
    %v2835 = vld [vmem:[%s1618 + $0x8] sm:$0xff]
    %v2836 = vld [vmem:[%s1618 + $0x10] sm:$0xff]
    %2838 = vrot.lane.b32.xlu0 %v2833, 100
    %v2839 = vpop.permute.xlu0 %2838
    %v2842 = vcombine.high %v2831, %v2831
    %2843 = vrot.lane.b32.xlu0 %v2831, 91
    %v2844 = vpop.permute.xlu0 %2843
    %2845 = vrot.lane.b32.xlu0 %v2842, 91
    %v2846 = vpop.permute.xlu0 %2845
    %2847 = vrot.lane.b32.xlu0 %v2832, 91
    %v2848 = vpop.permute.xlu0 %2847
    %v2849 = vsel %vm1280, %v2844, %v2846
    %v2850 = vsel %vm1280, %v2846, %v2848
    %v2851 = vsel %vm48, %v2839, 0
    %v2853 = vsel %vm52, %v2849, 0
    %v2855 = vsel %vm52, %v2850, 0
    %v2857 = vsel %vm52, %v2848, 0
    %2859 = vmatprep.subr.mxu0 %v2855
    %2860 = vmatpush1.msra.mxu0 %v2853
    %2861 = vmatprep.subr.mxu0 0.0
    %2862 = vmatpush1.msra.mxu0 0.0
    %2863 = vmatprep.subr.mxu0 0.0
    %2864 = vmatpush1.msra.mxu0 0.0
    %2865 = vmatprep.subr.mxu0 0.0
    %2866 = vmatpush1.msra.mxu0 0.0
    %2867 = vmatprep.subr.mxu0 0.0
    %2868 = vmatpush1.msra.mxu0 0.0
    %2869 = vmatprep.subr.mxu0 0.0
    %2870 = vmatpush1.msra.mxu0 0.0
    %2871 = vmatprep.subr.mxu0 0.0
    %2872 = vmatpush1.msra.mxu0 0.0
    %2873 = vmatprep.subr.mxu0 0.0
    %2874 = vmatpush1.msra.mxu0 0.0
    %2875 = vmatprep.subr.mxu0 0.0
    %2876 = vmatpush1.msra.mxu0 0.0
    %2877 = vmatprep.subr.mxu0 0.0
    %2878 = vmatpush1.msra.mxu0 0.0
    %2879 = vmatprep.subr.mxu0 0.0
    %2880 = vmatpush1.msra.mxu0 0.0
    %2881 = vmatprep.subr.mxu0 0.0
    %2882 = vmatpush1.msra.mxu0 0.0
    %2883 = vmatprep.subr.mxu0 0.0
    %2884 = vmatpush1.msra.mxu0 0.0
    %2885 = vmatprep.subr.mxu0 0.0
    %2886 = vmatpush1.msra.mxu0 0.0
    %2887 = vmatprep.subr.mxu0 0.0
    %2888 = vmatpush1.msra.mxu0 0.0
    %2889 = vmatprep.subr.mxu0 0.0
    %2890 = vmatpush1.msra.mxu0 0.0
    %2891 = vmatprep.subr.mxu0 0.0
    %2892 = vmatpush1.msra.mxu0 0.0
    %2893 = vmatprep.subr.mxu0 0.0
    %2894 = vmatpush1.msra.mxu0 0.0
    %2895 = vmatprep.subr.mxu0 0.0
    %2896 = vmatpush1.msra.mxu0 0.0
    %2897 = vmatprep.subr.mxu0 0.0
    %2898 = vmatpush1.msra.mxu0 0.0
    %2899 = vmatprep.subr.mxu0 0.0
    %2900 = vmatpush1.msra.mxu0 0.0
    %2901 = vmatprep.subr.mxu0 0.0
    %2902 = vmatpush1.msra.mxu0 0.0
    %2903 = vmatprep.subr.mxu0 0.0
    %2904 = vmatpush1.msra.mxu0 0.0
    %2905 = vmatprep.subr.mxu0 0.0
    %2906 = vmatpush1.msra.mxu0 0.0
    %2907 = vmatprep.subr.mxu0 0.0
    %2908 = vmatpush1.msra.mxu0 0.0
    %2909 = vmatprep.subr.mxu0 0.0
    %2910 = vmatpush1.msra.mxu0 0.0
    %2911 = vmatprep.subr.mxu0 0.0
    %2912 = vmatpush1.msra.mxu0 0.0
    %2913 = vmatprep.subr.mxu0 0.0
    %2914 = vmatpush1.msra.mxu0 0.0
    %2915 = vmatprep.subr.mxu0 0.0
    %2916 = vmatpush1.msra.mxu0 0.0
    %2917 = vmatprep.subr.mxu0 0.0
    %2918 = vmatpush1.msra.mxu0 0.0
    %2919 = vmatprep.subr.mxu0 0.0
    %2920 = vmatpush1.msra.mxu0 0.0
    %2921 = vmatprep.subr.mxu0 0.0
    %2922 = vmatpush1.msra.mxu0 0.0
    %2923 = vmatprep.mubr.f32.mxu0 0.0
    %2924 = vmatmul.mubr.f32.gmra.mrb[0].mxu0 %v2851
    %v2925 = vpop.f32.mrb[0].mxu0
    %v2926 = vadd.f32 0.0, %v2925
    %v2927 = vpop.f32.mrb[0].mxu0
    %v2928 = vadd.f32 0.0, %v2927
    %2929 = vdwg.mxu0
    %2930 = vmatprep.subr.mxu0 0.0
    %2931 = vmatpush1.msra.mxu0 %v2857
    %2932 = vmatprep.subr.mxu0 0.0
    %2933 = vmatpush1.msra.mxu0 0.0
    %2934 = vmatprep.subr.mxu0 0.0
    %2935 = vmatpush1.msra.mxu0 0.0
    %2936 = vmatprep.subr.mxu0 0.0
    %2937 = vmatpush1.msra.mxu0 0.0
    %2938 = vmatprep.subr.mxu0 0.0
    %2939 = vmatpush1.msra.mxu0 0.0
    %2940 = vmatprep.subr.mxu0 0.0
    %2941 = vmatpush1.msra.mxu0 0.0
    %2942 = vmatprep.subr.mxu0 0.0
    %2943 = vmatpush1.msra.mxu0 0.0
    %2944 = vmatprep.subr.mxu0 0.0
    %2945 = vmatpush1.msra.mxu0 0.0
    %2946 = vmatprep.subr.mxu0 0.0
    %2947 = vmatpush1.msra.mxu0 0.0
    %2948 = vmatprep.subr.mxu0 0.0
    %2949 = vmatpush1.msra.mxu0 0.0
    %2950 = vmatprep.subr.mxu0 0.0
    %2951 = vmatpush1.msra.mxu0 0.0
    %2952 = vmatprep.subr.mxu0 0.0
    %2953 = vmatpush1.msra.mxu0 0.0
    %2954 = vmatprep.subr.mxu0 0.0
    %2955 = vmatpush1.msra.mxu0 0.0
    %2956 = vmatprep.subr.mxu0 0.0
    %2957 = vmatpush1.msra.mxu0 0.0
    %2958 = vmatprep.subr.mxu0 0.0
    %2959 = vmatpush1.msra.mxu0 0.0
    %2960 = vmatprep.subr.mxu0 0.0
    %2961 = vmatpush1.msra.mxu0 0.0
    %2962 = vmatprep.subr.mxu0 0.0
    %2963 = vmatpush1.msra.mxu0 0.0
    %2964 = vmatprep.subr.mxu0 0.0
    %2965 = vmatpush1.msra.mxu0 0.0
    %2966 = vmatprep.subr.mxu0 0.0
    %2967 = vmatpush1.msra.mxu0 0.0
    %2968 = vmatprep.subr.mxu0 0.0
    %2969 = vmatpush1.msra.mxu0 0.0
    %2970 = vmatprep.subr.mxu0 0.0
    %2971 = vmatpush1.msra.mxu0 0.0
    %2972 = vmatprep.subr.mxu0 0.0
    %2973 = vmatpush1.msra.mxu0 0.0
    %2974 = vmatprep.subr.mxu0 0.0
    %2975 = vmatpush1.msra.mxu0 0.0
    %2976 = vmatprep.subr.mxu0 0.0
    %2977 = vmatpush1.msra.mxu0 0.0
    %2978 = vmatprep.subr.mxu0 0.0
    %2979 = vmatpush1.msra.mxu0 0.0
    %2980 = vmatprep.subr.mxu0 0.0
    %2981 = vmatpush1.msra.mxu0 0.0
    %2982 = vmatprep.subr.mxu0 0.0
    %2983 = vmatpush1.msra.mxu0 0.0
    %2984 = vmatprep.subr.mxu0 0.0
    %2985 = vmatpush1.msra.mxu0 0.0
    %2986 = vmatprep.subr.mxu0 0.0
    %2987 = vmatpush1.msra.mxu0 0.0
    %2988 = vmatprep.subr.mxu0 0.0
    %2989 = vmatpush1.msra.mxu0 0.0
    %2990 = vmatprep.subr.mxu0 0.0
    %2991 = vmatpush1.msra.mxu0 0.0
    %2992 = vmatprep.subr.mxu0 0.0
    %2993 = vmatpush1.msra.mxu0 0.0
    %2994 = vmatprep.mubr.f32.mxu0 0.0
    %2995 = vmatmul.mubr.f32.gmra.mrb[0].mxu0 %v2851
    %v2996 = vpop.f32.mrb[0].mxu0
    %v2997 = vadd.f32 0.0, %v2996
    %v2998 = vpop.f32.mrb[0].mxu0
    %2999 = vdwg.mxu0
    %v3000 = vadd.f32 %v2834, %v2926
    %v3001 = vadd.f32 %v2835, %v2928
    %v3002 = vadd.f32 %v2836, %v2997
    %3003 = vst [vmem:[%s1618] sm:$0xff] %v3000
    %3004 = vst [vmem:[%s1618 + $0x8] sm:$0xff] %v3001
    %3005 = vst.msk [vmem:[%s1618 + $0x10] sm:$0xff] %vm34, %v3002
    %v3006 = vld [vmem:[%s1614] sm:$0xff]
    %v3007 = vld [vmem:[%s1614 + $0x8] sm:$0xf]
    %v3008 = vld [vmem:[%s1] sm:$0xff]
    %v3009 = vld [vmem:[%s1618] sm:$0xff]
    %v3010 = vld [vmem:[%s1618 + $0x8] sm:$0xff]
    %v3011 = vld [vmem:[%s1618 + $0x10] sm:$0xff]
    %3013 = vrot.lane.b32.xlu0 %v3008, 96
    %v3014 = vpop.permute.xlu0 %3013
    %v3017 = vcombine.high %v3006, %v3006
    %3018 = vrot.lane.b32.xlu0 %v3006, 90
    %v3019 = vpop.permute.xlu0 %3018
    %3020 = vrot.lane.b32.xlu0 %v3017, 90
    %v3021 = vpop.permute.xlu0 %3020
    %3022 = vrot.lane.b32.xlu0 %v3007, 90
    %v3023 = vpop.permute.xlu0 %3022
    %v3024 = vsel %vm1456, %v3019, %v3021
    %v3025 = vsel %vm1456, %v3021, %v3023
    %v3026 = vsel %vm48, %v3014, 0
    %v3028 = vsel %vm52, %v3024, 0
    %v3030 = vsel %vm52, %v3025, 0
    %v3032 = vsel %vm52, %v3023, 0
    %3034 = vmatprep.subr.mxu0 %v3030
    %3035 = vmatpush1.msra.mxu0 %v3028
    %3036 = vmatprep.subr.mxu0 0.0
    %3037 = vmatpush1.msra.mxu0 0.0
    %3038 = vmatprep.subr.mxu0 0.0
    %3039 = vmatpush1.msra.mxu0 0.0
    %3040 = vmatprep.subr.mxu0 0.0
    %3041 = vmatpush1.msra.mxu0 0.0
    %3042 = vmatprep.subr.mxu0 0.0
    %3043 = vmatpush1.msra.mxu0 0.0
    %3044 = vmatprep.subr.mxu0 0.0
    %3045 = vmatpush1.msra.mxu0 0.0
    %3046 = vmatprep.subr.mxu0 0.0
    %3047 = vmatpush1.msra.mxu0 0.0
    %3048 = vmatprep.subr.mxu0 0.0
    %3049 = vmatpush1.msra.mxu0 0.0
    %3050 = vmatprep.subr.mxu0 0.0
    %3051 = vmatpush1.msra.mxu0 0.0
    %3052 = vmatprep.subr.mxu0 0.0
    %3053 = vmatpush1.msra.mxu0 0.0
    %3054 = vmatprep.subr.mxu0 0.0
    %3055 = vmatpush1.msra.mxu0 0.0
    %3056 = vmatprep.subr.mxu0 0.0
    %3057 = vmatpush1.msra.mxu0 0.0
    %3058 = vmatprep.subr.mxu0 0.0
    %3059 = vmatpush1.msra.mxu0 0.0
    %3060 = vmatprep.subr.mxu0 0.0
    %3061 = vmatpush1.msra.mxu0 0.0
    %3062 = vmatprep.subr.mxu0 0.0
    %3063 = vmatpush1.msra.mxu0 0.0
    %3064 = vmatprep.subr.mxu0 0.0
    %3065 = vmatpush1.msra.mxu0 0.0
    %3066 = vmatprep.subr.mxu0 0.0
    %3067 = vmatpush1.msra.mxu0 0.0
    %3068 = vmatprep.subr.mxu0 0.0
    %3069 = vmatpush1.msra.mxu0 0.0
    %3070 = vmatprep.subr.mxu0 0.0
    %3071 = vmatpush1.msra.mxu0 0.0
    %3072 = vmatprep.subr.mxu0 0.0
    %3073 = vmatpush1.msra.mxu0 0.0
    %3074 = vmatprep.subr.mxu0 0.0
    %3075 = vmatpush1.msra.mxu0 0.0
    %3076 = vmatprep.subr.mxu0 0.0
    %3077 = vmatpush1.msra.mxu0 0.0
    %3078 = vmatprep.subr.mxu0 0.0
    %3079 = vmatpush1.msra.mxu0 0.0
    %3080 = vmatprep.subr.mxu0 0.0
    %3081 = vmatpush1.msra.mxu0 0.0
    %3082 = vmatprep.subr.mxu0 0.0
    %3083 = vmatpush1.msra.mxu0 0.0
    %3084 = vmatprep.subr.mxu0 0.0
    %3085 = vmatpush1.msra.mxu0 0.0
    %3086 = vmatprep.subr.mxu0 0.0
    %3087 = vmatpush1.msra.mxu0 0.0
    %3088 = vmatprep.subr.mxu0 0.0
    %3089 = vmatpush1.msra.mxu0 0.0
    %3090 = vmatprep.subr.mxu0 0.0
    %3091 = vmatpush1.msra.mxu0 0.0
    %3092 = vmatprep.subr.mxu0 0.0
    %3093 = vmatpush1.msra.mxu0 0.0
    %3094 = vmatprep.subr.mxu0 0.0
    %3095 = vmatpush1.msra.mxu0 0.0
    %3096 = vmatprep.subr.mxu0 0.0
    %3097 = vmatpush1.msra.mxu0 0.0
    %3098 = vmatprep.mubr.f32.mxu0 0.0
    %3099 = vmatmul.mubr.f32.gmra.mrb[0].mxu0 %v3026
    %v3100 = vpop.f32.mrb[0].mxu0
    %v3101 = vadd.f32 0.0, %v3100
    %v3102 = vpop.f32.mrb[0].mxu0
    %v3103 = vadd.f32 0.0, %v3102
    %3104 = vdwg.mxu0
    %3105 = vmatprep.subr.mxu0 0.0
    %3106 = vmatpush1.msra.mxu0 %v3032
    %3107 = vmatprep.subr.mxu0 0.0
    %3108 = vmatpush1.msra.mxu0 0.0
    %3109 = vmatprep.subr.mxu0 0.0
    %3110 = vmatpush1.msra.mxu0 0.0
    %3111 = vmatprep.subr.mxu0 0.0
    %3112 = vmatpush1.msra.mxu0 0.0
    %3113 = vmatprep.subr.mxu0 0.0
    %3114 = vmatpush1.msra.mxu0 0.0
    %3115 = vmatprep.subr.mxu0 0.0
    %3116 = vmatpush1.msra.mxu0 0.0
    %3117 = vmatprep.subr.mxu0 0.0
    %3118 = vmatpush1.msra.mxu0 0.0
    %3119 = vmatprep.subr.mxu0 0.0
    %3120 = vmatpush1.msra.mxu0 0.0
    %3121 = vmatprep.subr.mxu0 0.0
    %3122 = vmatpush1.msra.mxu0 0.0
    %3123 = vmatprep.subr.mxu0 0.0
    %3124 = vmatpush1.msra.mxu0 0.0
    %3125 = vmatprep.subr.mxu0 0.0
    %3126 = vmatpush1.msra.mxu0 0.0
    %3127 = vmatprep.subr.mxu0 0.0
    %3128 = vmatpush1.msra.mxu0 0.0
    %3129 = vmatprep.subr.mxu0 0.0
    %3130 = vmatpush1.msra.mxu0 0.0
    %3131 = vmatprep.subr.mxu0 0.0
    %3132 = vmatpush1.msra.mxu0 0.0
    %3133 = vmatprep.subr.mxu0 0.0
    %3134 = vmatpush1.msra.mxu0 0.0
    %3135 = vmatprep.subr.mxu0 0.0
    %3136 = vmatpush1.msra.mxu0 0.0
    %3137 = vmatprep.subr.mxu0 0.0
    %3138 = vmatpush1.msra.mxu0 0.0
    %3139 = vmatprep.subr.mxu0 0.0
    %3140 = vmatpush1.msra.mxu0 0.0
    %3141 = vmatprep.subr.mxu0 0.0
    %3142 = vmatpush1.msra.mxu0 0.0
    %3143 = vmatprep.subr.mxu0 0.0
    %3144 = vmatpush1.msra.mxu0 0.0
    %3145 = vmatprep.subr.mxu0 0.0
    %3146 = vmatpush1.msra.mxu0 0.0
    %3147 = vmatprep.subr.mxu0 0.0
    %3148 = vmatpush1.msra.mxu0 0.0
    %3149 = vmatprep.subr.mxu0 0.0
    %3150 = vmatpush1.msra.mxu0 0.0
    %3151 = vmatprep.subr.mxu0 0.0
    %3152 = vmatpush1.msra.mxu0 0.0
    %3153 = vmatprep.subr.mxu0 0.0
    %3154 = vmatpush1.msra.mxu0 0.0
    %3155 = vmatprep.subr.mxu0 0.0
    %3156 = vmatpush1.msra.mxu0 0.0
    %3157 = vmatprep.subr.mxu0 0.0
    %3158 = vmatpush1.msra.mxu0 0.0
    %3159 = vmatprep.subr.mxu0 0.0
    %3160 = vmatpush1.msra.mxu0 0.0
    %3161 = vmatprep.subr.mxu0 0.0
    %3162 = vmatpush1.msra.mxu0 0.0
    %3163 = vmatprep.subr.mxu0 0.0
    %3164 = vmatpush1.msra.mxu0 0.0
    %3165 = vmatprep.subr.mxu0 0.0
    %3166 = vmatpush1.msra.mxu0 0.0
    %3167 = vmatprep.subr.mxu0 0.0
    %3168 = vmatpush1.msra.mxu0 0.0
    %3169 = vmatprep.mubr.f32.mxu0 0.0
    %3170 = vmatmul.mubr.f32.gmra.mrb[0].mxu0 %v3026
    %v3171 = vpop.f32.mrb[0].mxu0
    %v3172 = vadd.f32 0.0, %v3171
    %v3173 = vpop.f32.mrb[0].mxu0
    %3174 = vdwg.mxu0
    %v3175 = vadd.f32 %v3009, %v3101
    %v3176 = vadd.f32 %v3010, %v3103
    %v3177 = vadd.f32 %v3011, %v3172
    %3178 = vst [vmem:[%s1618] sm:$0xff] %v3175
    %3179 = vst [vmem:[%s1618 + $0x8] sm:$0xff] %v3176
    %3180 = vst.msk [vmem:[%s1618 + $0x10] sm:$0xff] %vm34, %v3177
    %v3181 = vld [vmem:[#allocation2] sm:$0xff]
    %v3182 = vld [vmem:[#allocation2 + $0x8] sm:$0xff]
    %v3183 = vld [vmem:[#allocation2 + $0x10] sm:$0xff]
    %v3184 = vld [vmem:[#allocation2 + $0x18] sm:$0xff]
    %v3185 = vld [vmem:[#allocation2 + $0x20] sm:$0xff]
    %v3186 = vld [vmem:[#allocation2 + $0x28] sm:$0xff]
    %v3187 = vlaneseq
    %v3188 = vand.u32 %v3187, 127
    %v3189 = vadd.s32 %v3188, 128
    %v3190 = vadd.s32 %v3188, 256
    %vm3191 = vcmp.lt.s32.totalorder %v3188, 0
    %v3192 = vsub.s32 0, %v3188
    %v3193 = vsel %vm3191, %v3192, %v3188
    %v3194 = vmul.u32.u64.compose %v3193, 3817748708
    %v3195 = vextract.low.u32 %v3194
    %v3196 = vextract.high.u32 %v3194
    %v3197 = vshrl.u32 %v3196, 4
    %v3198 = vmul.u32 %v3197, 18
    %v3199 = vsub.s32 %v3193, %v3198
    %v3200 = vsub.s32 0, %v3199
    %v3201 = vsel %vm3191, %v3200, %v3199
    %vm3202 = vcmp.lt.s32.totalorder %v3189, 0
    %v3203 = vsub.s32 0, %v3189
    %v3204 = vsel %vm3202, %v3203, %v3189
    %v3205 = vmul.u32.u64.compose %v3204, 3817748708
    %v3206 = vextract.low.u32 %v3205
    %v3207 = vextract.high.u32 %v3205
    %v3208 = vshrl.u32 %v3207, 4
    %v3209 = vmul.u32 %v3208, 18
    %v3210 = vsub.s32 %v3204, %v3209
    %v3211 = vsub.s32 0, %v3210
    %v3212 = vsel %vm3202, %v3211, %v3210
    %vm3213 = vcmp.lt.s32.totalorder %v3190, 0
    %v3214 = vsub.s32 0, %v3190
    %v3215 = vsel %vm3213, %v3214, %v3190
    %v3216 = vmul.u32.u64.compose %v3215, 3817748708
    %v3217 = vextract.low.u32 %v3216
    %v3218 = vextract.high.u32 %v3216
    %v3219 = vshrl.u32 %v3218, 4
    %v3220 = vmul.u32 %v3219, 18
    %v3221 = vsub.s32 %v3215, %v3220
    %v3222 = vsub.s32 0, %v3221
    %v3223 = vsel %vm3213, %v3222, %v3221
    %vm3224 = vcmp.ne.s32.totalorder %v3201, 0
    %vm3225 = vcmp.ne.s32.totalorder %v3212, 0
    %vm3226 = vcmp.ne.s32.totalorder %v3223, 0
    %vm3227 = vcmp.lt.s32.totalorder %v3201, 0
    %vm3228 = vcmp.lt.s32.totalorder %v3212, 0
    %vm3229 = vcmp.lt.s32.totalorder %v3223, 0
    %vm3230 = vmand %vm3227, %vm3224
    %vm3231 = vmand %vm3228, %vm3225
    %vm3232 = vmand %vm3229, %vm3226
    %v3233 = vadd.s32 %v3201, 18
    %v3234 = vadd.s32 %v3212, 18
    %v3235 = vadd.s32 %v3223, 18
    %v3236 = vsel %vm3230, %v3233, %v3201
    %v3237 = vsel %vm3231, %v3234, %v3212
    %v3238 = vsel %vm3232, %v3235, %v3223
    %vm3239 = vcmp.lt.s32.totalorder %v3236, 16
    %vm3240 = vcmp.lt.s32.totalorder %v3237, 16
    %vm3241 = vcmp.lt.s32.totalorder %v3238, 16
    %v3242 = vsel %vm3239, 1, 0
    %v3243 = vsel %vm3240, 1, 0
    %v3244 = vsel %vm3241, 1, 0
    %vm3245 = vcmp.eq.s32.totalorder %v3242, 1
    %vm3246 = vcmp.eq.s32.totalorder %v3243, 1
    %vm3247 = vcmp.eq.s32.totalorder %v3244, 1
    %v3248 = vsel %vm3245, %v3181, 0.0
    %v3249 = vsel %vm3246, %v3182, 0.0
    %v3250 = vsel %vm3247, %v3183, 0.0
    %v3251 = vsel %vm3245, %v3184, 0.0
    %v3252 = vsel %vm3246, %v3185, 0.0
    %v3253 = vsel %vm3247, %v3186, 0.0
    %v3254 = vadd.f32 %v3248, %v3249
    %v3255 = vsel %vm34, %v3250, 0.0
    %v3256 = vadd.f32 %v3254, %v3255
    %3257 = vadd.xlane.f32.xlu0 %v3256
    %v3258 = vpop.xlane.xlu0 %3257
    %v3259 = vadd.f32 %v3251, %v3252
    %v3260 = vsel %vm34, %v3253, 0.0
    %v3261 = vadd.f32 %v3259, %v3260
    %3262 = vadd.xlane.f32.xlu0 %v3261
    %v3263 = vpop.xlane.xlu0 %3262
    %v3264 = vadd.f32 %v3258, %v3263
    %v3265 = vrcp.pop 512.0
    %v3266 = vmul.f32 %v3264, %v3265
    %v3267 = vsub.f32 %v3181, %v3266
    %v3268 = vsub.f32 %v3182, %v3266
    %v3269 = vsub.f32 %v3183, %v3266
    %v3270 = vsub.f32 %v3184, %v3266
    %v3271 = vsub.f32 %v3185, %v3266
    %v3272 = vsub.f32 %v3186, %v3266
    %v3273 = vmul.f32 %v3267, %v3267
    %v3274 = vmul.f32 %v3268, %v3268
    %v3275 = vmul.f32 %v3269, %v3269
    %v3276 = vmul.f32 %v3270, %v3270
    %v3277 = vmul.f32 %v3271, %v3271
    %v3278 = vmul.f32 %v3272, %v3272
    %v3279 = vsel %vm3245, %v3273, 0.0
    %v3280 = vsel %vm3246, %v3274, 0.0
    %v3281 = vsel %vm3247, %v3275, 0.0
    %v3282 = vsel %vm3245, %v3276, 0.0
    %v3283 = vsel %vm3246, %v3277, 0.0
    %v3284 = vsel %vm3247, %v3278, 0.0
    %v3285 = vadd.f32 %v3279, %v3280
    %v3286 = vsel %vm34, %v3281, 0.0
    %v3287 = vadd.f32 %v3285, %v3286
    %3288 = vadd.xlane.f32.xlu0 %v3287
    %v3289 = vpop.xlane.xlu0 %3288
    %v3290 = vadd.f32 %v3282, %v3283
    %v3291 = vsel %vm34, %v3284, 0.0
    %v3292 = vadd.f32 %v3290, %v3291
    %3293 = vadd.xlane.f32.xlu0 %v3292
    %v3294 = vpop.xlane.xlu0 %3293
    %v3295 = vadd.f32 %v3289, %v3294
    %v3296 = vmul.f32 %v3295, %v3265
    %v3297 = vadd.f32 %v3296, 1e-05
    %v3298 = vrsqrt.pop %v3297
    %v3299 = vmul.f32 %v3267, %v3298
    %v3300 = vmul.f32 %v3268, %v3298
    %v3301 = vmul.f32 %v3269, %v3298
    %v3302 = vmul.f32 %v3270, %v3298
    %v3303 = vmul.f32 %v3271, %v3298
    %v3304 = vmul.f32 %v3272, %v3298
    %v3305 = vld [vmem:[%s2] sm:$0xff]
    %3307 = vset.pattern.permute.xlu0 0
    %3308 = vperm.xlu0 %3307, %v3305
    %v3309 = vpop.permute.xlu0 %3308
    %v3311 = vmul.f32 %v3299, %v3309
    %v3312 = vmul.f32 %v3300, %v3309
    %v3313 = vmul.f32 %v3301, %v3309
    %v3314 = vmul.f32 %v3302, %v3309
    %v3315 = vmul.f32 %v3303, %v3309
    %v3316 = vmul.f32 %v3304, %v3309
    %v3317 = vld [vmem:[%s3] sm:$0xff]
    %3319 = vset.pattern.permute.xlu0 0
    %3320 = vperm.xlu0 %3319, %v3317
    %v3321 = vpop.permute.xlu0 %3320
    %v3323 = vadd.f32 %v3311, %v3321
    %v3324 = vadd.f32 %v3312, %v3321
    %v3325 = vadd.f32 %v3313, %v3321
    %v3326 = vadd.f32 %v3314, %v3321
    %v3327 = vadd.f32 %v3315, %v3321
    %v3328 = vadd.f32 %v3316, %v3321
    %3329 = vst [vmem:[#allocation6] sm:$0xff] %v3323
    %3330 = vst [vmem:[#allocation6 + $0x8] sm:$0xff] %v3324
    %3331 = vst.msk [vmem:[#allocation6 + $0x10] sm:$0xff] %vm34, %v3325
    %3332 = vst [vmem:[#allocation6 + $0x18] sm:$0xff] %v3326
    %3333 = vst [vmem:[#allocation6 + $0x20] sm:$0xff] %v3327
    %3334 = vst.msk [vmem:[#allocation6 + $0x28] sm:$0xff] %vm34, %v3328
    // Predicated region
    $region22: #{tpu_custom_call.1} parent=1 // pred_check
      _
    $region23: #{tpu_custom_call.1} parent=1 // pred_check_branch
      %3336 = sbr.rel (0) target = $region25
    $region24: #{tpu_custom_call.1} parent=1 // pred_region
      %s3338 = ssub.s32 768, 768
      %3339 = vsyncadd [#allocation5], %s3338
      %s3340 = sshll.u32 [#allocation6], 4
      %s3341 = int_to_ptr.vmem [resolvable:$true] %s3340
      %3346 = dma.vmem_to_hbm [thread:$0]  %s3341, 768, %s4, [#allocation5], 384, 384, 24
    $region25: #{tpu_custom_call.1} parent=1 // pred_fallthru
      _
    // Predicated region
    $region26: #{tpu_custom_call.1} parent=1 // pred_check
      _
    $region27: #{tpu_custom_call.1} parent=1 // pred_check_branch
      %3348 = sbr.rel (0) target = $region29
    $region28: #{tpu_custom_call.1} parent=1 // pred_region
      %3349 = dma.done [#allocation5], 768
    $region29: #{tpu_custom_call.1} parent=1 // pred_fallthru
      _
    %3350 = vsyncpa [#allocation4], 1
    %3351 = vsyncpa [#allocation5], 1

</llo_original>
